<compile_context>
chip_gen: v7x
topology: tpu7x:2x2x1
jax: 0.10.0
libtpu: 0.0.40
codegen_flags: <defaults>
</compile_context>

<pallas_src>
import functools

import jax
import jax.numpy as jnp
from jax import lax
from jax.experimental import pallas as pl
from jax.experimental.pallas import tpu as pltpu


def _round_up(x, m):
    return (x + m - 1) // m * m


def _pick_b_block(bp):
    # Split the (padded) batch into two blocks when big enough so the "parallel"
    # grid axis can be sharded across v7x's two TensorCores (blocks stay 8-aligned).
    if bp >= 16 and bp % 16 == 0:
        return bp // 2
    return bp


def _pick_t_chunk(seq_len, rows_per_step, in_dim, hp):
    # Largest divisor of T such that per-chunk scratch (gates + 2 ping-pong
    # activation buffers + x chunk) stays well under the scoped-VMEM defaults
    # (16 MiB v5e, 32 MiB v6e/v7x) and the unrolled time loop stays small.
    budget_bytes = 4 * 1024 * 1024
    bytes_per_step = 4 * rows_per_step * (4 * hp + 2 * hp + max(in_dim, hp))
    cap = max(1, min(64, budget_bytes // max(1, bytes_per_step)))
    best = 1
    for d in range(1, seq_len + 1):
        if seq_len % d == 0 and d <= cap:
            best = d
    return best


def _make_fused_lstm_kernel(n_layers, hp, b_blk, t_chunk, compute_dtype):
    """Builds the fused (all LSTM layers + FC) kernel for static sizes."""

    def kernel(*refs):
        x_ref = refs[0]                                    # (1, t_chunk*b_blk, in)
        w_refs = refs[1:1 + 3 * n_layers]                  # per layer: w_ih, w_hh, b
        w_fc_ref = refs[1 + 3 * n_layers]                  # (hp, 1)
        b_fc_ref = refs[2 + 3 * n_layers]                  # (1, 1)
        out_ref = refs[3 + 3 * n_layers]                   # (1, b_blk, 1)
        gx_scr, buf_a, buf_b, h_scr, c_scr = refs[4 + 3 * n_layers:]

        t_idx = pl.program_id(1)

        @pl.when(t_idx == 0)
        def _init_state():
            h_scr[...] = jnp.zeros_like(h_scr)
            c_scr[...] = jnp.zeros_like(c_scr)

        bufs = (buf_a, buf_b)

        for layer in range(n_layers):
            w_ih_ref, w_hh_ref, b_ref = w_refs[3 * layer:3 * layer + 3]

            if layer == 0:
                x_in = x_ref[0]                            # (t_chunk*b_blk, in)
            else:
                x_in = bufs[(layer + 1) % 2][...]          # (t_chunk*b_blk, hp)

            # Hoisted input projection + bias for the whole chunk: one big MXU
            # matmul instead of t_chunk tiny ones on the recurrent critical path.
            gx_scr[...] = (
                jnp.dot(x_in.astype(compute_dtype), w_ih_ref[...],
                        preferred_element_type=jnp.float32)
                + b_ref[...])

            dst = None if layer == n_layers - 1 else bufs[layer % 2]

            h = h_scr[layer]                               # (b_blk, hp) f32
            c = c_scr[layer]

            # Fully unrolled recurrence over the chunk (static slices, 8-aligned).
            for t in range(t_chunk):
                row = t * b_blk
                gates = gx_scr[pl.ds(row, b_blk), :] + jnp.dot(
                    h.astype(compute_dtype), w_hh_ref[...],
                    preferred_element_type=jnp.float32)    # (b_blk, 4*hp) f32
                i_g = jax.nn.sigmoid(gates[:, 0 * hp:1 * hp])
                f_g = jax.nn.sigmoid(gates[:, 1 * hp:2 * hp])
                g_g = jnp.tanh(gates[:, 2 * hp:3 * hp])
                o_g = jax.nn.sigmoid(gates[:, 3 * hp:4 * hp])
                c = f_g * c + i_g * g_g
                h = o_g * jnp.tanh(c)
                if dst is not None:                        # last layer skips y writes
                    dst[pl.ds(row, b_blk), :] = h

            h_scr[layer] = h
            c_scr[layer] = c

        # Fused Linear(hidden, 1) on the final hidden state (last time chunk only).
        @pl.when(t_idx == pl.num_programs(1) - 1)
        def _fc():
            h_last = h_scr[n_layers - 1]
            out = jnp.dot(h_last.astype(compute_dtype), w_fc_ref[...],
                          preferred_element_type=jnp.float32) + b_fc_ref[...]
            out_ref[0] = out.astype(out_ref.dtype)

    return kernel


def _fused_lstm_forward(x, layers, w_fc, b_fc, *, hidden_pad, compute_dtype):
    """x: (B, T, input_size) batch-first.  Returns (B, 1)."""
    batch, seq_len, in_size = x.shape
    n_layers = len(layers)
    hp = hidden_pad

    bp = _round_up(batch, 8)
    b_blk = _pick_b_block(bp)
    nb = bp // b_blk
    t_chunk = _pick_t_chunk(seq_len, b_blk, in_size, hp)
    nt = seq_len // t_chunk

    # Time-major, batch padded to a sublane multiple, batch blocks made leading,
    # and (time, batch-block) flattened so the kernel works on plain 2-D tiles.
    x_tm = jnp.transpose(x, (1, 0, 2)).astype(jnp.float32)            # (T, B, I)
    x_tm = jnp.pad(x_tm, ((0, 0), (0, bp - batch), (0, 0)))           # (T, Bp, I)
    x_blk = x_tm.reshape(seq_len, nb, b_blk, in_size)
    x_blk = jnp.transpose(x_blk, (1, 0, 2, 3)).reshape(nb, seq_len * b_blk, in_size)

    kernel = _make_fused_lstm_kernel(n_layers, hp, b_blk, t_chunk, compute_dtype)

    weight_args = []
    in_specs = [pl.BlockSpec((1, t_chunk * b_blk, in_size), lambda b, t: (b, t, 0))]
    for (w_ih, w_hh, bias) in layers:
        for w in (w_ih, w_hh, bias):
            weight_args.append(w)
            in_specs.append(pl.BlockSpec(w.shape, lambda b, t: (0, 0)))
    for w in (w_fc, b_fc):
        weight_args.append(w)
        in_specs.append(pl.BlockSpec(w.shape, lambda b, t: (0, 0)))

    out = pl.pallas_call(
        kernel,
        out_shape=jax.ShapeDtypeStruct((nb, b_blk, 1), jnp.float32),
        grid_spec=pltpu.PrefetchScalarGridSpec(
            num_scalar_prefetch=0,
            grid=(nb, nt),
            in_specs=in_specs,
            out_specs=pl.BlockSpec((1, b_blk, 1), lambda b, t: (b, 0, 0)),
            scratch_shapes=[
                pltpu.VMEM((t_chunk * b_blk, 4 * hp), jnp.float32),   # hoisted gates
                pltpu.VMEM((t_chunk * b_blk, hp), jnp.float32),       # ping activations
                pltpu.VMEM((t_chunk * b_blk, hp), jnp.float32),       # pong activations
                pltpu.VMEM((n_layers, b_blk, hp), jnp.float32),       # h state (carried)
                pltpu.VMEM((n_layers, b_blk, hp), jnp.float32),       # c state (carried)
            ]),
        compiler_params=pltpu.CompilerParams(
            dimension_semantics=("parallel", "arbitrary")),
    )(x_blk, *weight_args)

    return out.reshape(bp, 1)[:batch]


class LSTMModelPallas:
    """JAX/Pallas replica of the PyTorch LSTMModel forward pass (eval mode)."""

    def __init__(self, input_size, hidden_size, n_layers, dropout, key,
                 param_dtype=jnp.bfloat16):
        self.input_size = input_size
        self.hidden_size = hidden_size
        self.n_layers = n_layers
        # TODO(synk): dropout between LSTM layers is train-only in PyTorch; not applied here.
        self.dropout = dropout
        self.param_dtype = param_dtype
        self.hp = _round_up(hidden_size, 128)   # lane-padded hidden size

        H, Hp = hidden_size, self.hp
        bound = 1.0 / float(hidden_size) ** 0.5
        keys = jax.random.split(key, 4 * n_layers + 2)
        ki = 0
        self.layers = []
        for layer in range(n_layers):
            in_sz = input_size if layer == 0 else hidden_size
            in_pad = input_size if layer == 0 else Hp
            w_ih = jax.random.uniform(keys[ki], (4 * H, in_sz), jnp.float32, -bound, bound); ki += 1
            w_hh = jax.random.uniform(keys[ki], (4 * H, H), jnp.float32, -bound, bound); ki += 1
            b_ih = jax.random.uniform(keys[ki], (4 * H,), jnp.float32, -bound, bound); ki += 1
            b_hh = jax.random.uniform(keys[ki], (4 * H,), jnp.float32, -bound, bound); ki += 1
            w_ih_t, w_hh_t, b = w_ih.T, w_hh.T, b_ih + b_hh   # (in,4H), (H,4H), (4H,)
            # Lane-dense gate layout: gate k lives in columns [k*Hp, k*Hp+H); padded
            # rows/columns are zero so the padded hidden lanes provably stay zero.
            w_ih_p = jnp.zeros((in_pad, 4 * Hp), jnp.float32)
            w_hh_p = jnp.zeros((Hp, 4 * Hp), jnp.float32)
            b_p = jnp.zeros((1, 4 * Hp), jnp.float32)
            for k in range(4):
                w_ih_p = w_ih_p.at[:in_sz, k * Hp:k * Hp + H].set(w_ih_t[:, k * H:(k + 1) * H])
                w_hh_p = w_hh_p.at[:H, k * Hp:k * Hp + H].set(w_hh_t[:, k * H:(k + 1) * H])
                b_p = b_p.at[0, k * Hp:k * Hp + H].set(b[k * H:(k + 1) * H])
            self.layers.append((w_ih_p.astype(param_dtype),   # (in_pad, 4Hp) bf16
                                w_hh_p.astype(param_dtype),   # (Hp, 4Hp)    bf16
                                b_p))                          # (1, 4Hp)     f32
        w_fc = jax.random.uniform(keys[ki], (1, H), jnp.float32, -bound, bound); ki += 1
        b_fc = jax.random.uniform(keys[ki], (1,), jnp.float32, -bound, bound)
        w_fc_p = jnp.zeros((Hp, 1), jnp.float32).at[:H, 0].set(w_fc[0])
        self.w_fc = w_fc_p.astype(param_dtype)                 # (Hp, 1) bf16
        self.b_fc = b_fc.reshape(1, 1)                         # (1, 1)  f32

    @functools.partial(jax.jit, static_argnums=0)
    def __call__(self, x):
        # x: (B, T, input_size), batch_first like the PyTorch module.  Returns (B, 1).
        return _fused_lstm_forward(x, self.layers, self.w_fc, self.b_fc,
                                   hidden_pad=self.hp,
                                   compute_dtype=self.param_dtype)


def _reference_forward(model, x):
    """Pure-JAX reference (same padded weights, same op order, lax.scan)."""
    Hp = model.hp
    cd = model.param_dtype
    B = x.shape[0]
    seq = jnp.transpose(x, (1, 0, 2)).astype(jnp.float32)   # (T, B, I)
    for (w_ih, w_hh, b) in model.layers:
        def step(carry, x_t, w_ih=w_ih, w_hh=w_hh, b=b):
            h, c = carry
            gates = (jnp.dot(x_t.astype(cd), w_ih, preferred_element_type=jnp.float32) + b
                     + jnp.dot(h.astype(cd), w_hh, preferred_element_type=jnp.float32))
            i = jax.nn.sigmoid(gates[:, 0 * Hp:1 * Hp])
            f = jax.nn.sigmoid(gates[:, 1 * Hp:2 * Hp])
            g = jnp.tanh(gates[:, 2 * Hp:3 * Hp])
            o = jax.nn.sigmoid(gates[:, 3 * Hp:4 * Hp])
            c = f * c + i * g
            h = o * jnp.tanh(c)
            return (h, c), h
        init = (jnp.zeros((B, Hp), jnp.float32), jnp.zeros((B, Hp), jnp.float32))
        _, seq = lax.scan(step, init, seq)
    h_last = seq[-1]
    return (jnp.dot(h_last.astype(cd), model.w_fc, preferred_element_type=jnp.float32)
            + model.b_fc)


if __name__ == "__main__":
    key = jax.random.PRNGKey(0)
    k_param, k_x = jax.random.split(key)

    batch, seq_len, input_size, hidden_size, n_layers = 2, 8, 4, 32, 2
    model = LSTMModelPallas(input_size, hidden_size, n_layers, dropout=0.1, key=k_param)

    x = jax.random.normal(k_x, (batch, seq_len, input_size), jnp.float32)

    out = jax.block_until_ready(model(x))
    ref = jax.block_until_ready(_reference_forward(model, x))

    assert out.shape == (batch, 1), out.shape
    assert jnp.allclose(out, ref, atol=1e-3, rtol=1e-3), (out, ref)

    print("KERNEL_OK")
</pallas_src>

<mosaic_0001>
module attributes {stable_mosaic.version = 11 : i64} {
  func.func @kernel(%arg0: i32, %arg1: i32, %arg2: memref<1x64x4xf32, #tpu.memory_space<vmem>>, %arg3: memref<4x512xbf16, #tpu.memory_space<vmem>>, %arg4: memref<128x512xbf16, #tpu.memory_space<vmem>>, %arg5: memref<1x512xf32, #tpu.memory_space<vmem>>, %arg6: memref<128x512xbf16, #tpu.memory_space<vmem>>, %arg7: memref<128x512xbf16, #tpu.memory_space<vmem>>, %arg8: memref<1x512xf32, #tpu.memory_space<vmem>>, %arg9: memref<128x1xbf16, #tpu.memory_space<vmem>>, %arg10: memref<1x1xf32, #tpu.memory_space<vmem>>, %arg11: memref<1x8x1xf32, #tpu.memory_space<vmem>>, %arg12: memref<64x512xf32, #tpu.memory_space<vmem>>, %arg13: memref<64x128xf32, #tpu.memory_space<vmem>>, %arg14: memref<64x128xf32, #tpu.memory_space<vmem>>, %arg15: memref<2x8x128xf32, #tpu.memory_space<vmem>>, %arg16: memref<2x8x128xf32, #tpu.memory_space<vmem>>) attributes {dimension_semantics = [#tpu.dimension_semantics<parallel>, #tpu.dimension_semantics<arbitrary>], iteration_bounds = array<i64: 1, 1>, scalar_prefetch = 0 : i64, scratch_operands = 5 : i64, tpu.core_type = #tpu.core_type<tc>, window_params = [{transform_indices = @transform_0, window_bounds = array<i64: 1, 64, 4>}, {pipeline_mode = #tpu.pipeline_mode<synchronous>, transform_indices = @transform_1, window_bounds = array<i64: 4, 512>}, {pipeline_mode = #tpu.pipeline_mode<synchronous>, transform_indices = @transform_2, window_bounds = array<i64: 128, 512>}, {pipeline_mode = #tpu.pipeline_mode<synchronous>, transform_indices = @transform_3, window_bounds = array<i64: 1, 512>}, {pipeline_mode = #tpu.pipeline_mode<synchronous>, transform_indices = @transform_4, window_bounds = array<i64: 128, 512>}, {pipeline_mode = #tpu.pipeline_mode<synchronous>, transform_indices = @transform_5, window_bounds = array<i64: 128, 512>}, {pipeline_mode = #tpu.pipeline_mode<synchronous>, transform_indices = @transform_6, window_bounds = array<i64: 1, 512>}, {pipeline_mode = #tpu.pipeline_mode<synchronous>, transform_indices = @transform_7, window_bounds = array<i64: 128, 1>}, {pipeline_mode = #tpu.pipeline_mode<synchronous>, transform_indices = @transform_8, window_bounds = array<i64: 1, 1>}, {transform_indices = @transform_9, window_bounds = array<i64: 1, 8, 1>}]} {
    %c0_i32 = arith.constant 0 : i32
    %0 = arith.cmpi eq, %arg1, %c0_i32 : i32
    %1 = arith.extui %0 : i1 to i32
    %c0_i32_0 = arith.constant 0 : i32
    %2 = arith.cmpi ne, %1, %c0_i32_0 : i32
    scf.if %2 {
      %cst_180 = arith.constant 0.000000e+00 : f32
      %531 = vector.broadcast %cst_180 : f32 to vector<2x8x128xf32>
      %c0_181 = arith.constant 0 : index
      %c0_182 = arith.constant 0 : index
      %c0_183 = arith.constant 0 : index
      %532 = vector.load %arg15[%c0_181, %c0_182, %c0_183] : memref<2x8x128xf32, #tpu.memory_space<vmem>>, vector<2x8x128xf32>
      tpu.vector_store %arg15[%c0_181, %c0_182, %c0_183], %531 {strides = array<i32>} : memref<2x8x128xf32, #tpu.memory_space<vmem>>, vector<2x8x128xf32>,
      %cst_184 = arith.constant 0.000000e+00 : f32
      %533 = vector.broadcast %cst_184 : f32 to vector<2x8x128xf32>
      %c0_185 = arith.constant 0 : index
      %c0_186 = arith.constant 0 : index
      %c0_187 = arith.constant 0 : index
      %534 = vector.load %arg16[%c0_185, %c0_186, %c0_187] : memref<2x8x128xf32, #tpu.memory_space<vmem>>, vector<2x8x128xf32>
      tpu.vector_store %arg16[%c0_185, %c0_186, %c0_187], %533 {strides = array<i32>} : memref<2x8x128xf32, #tpu.memory_space<vmem>>, vector<2x8x128xf32>,
    } else {
    }
    %c0 = arith.constant 0 : index
    %c0_1 = arith.constant 0 : index
    %c0_2 = arith.constant 0 : index
    %3 = vector.load %arg2[%c0, %c0_1, %c0_2] : memref<1x64x4xf32, #tpu.memory_space<vmem>>, vector<1x64x4xf32>
    %4 = vector.shape_cast %3 : vector<1x64x4xf32> to vector<64x4xf32>
    %5 = arith.truncf %4 : vector<64x4xf32> to vector<64x4xbf16>
    %c0_3 = arith.constant 0 : index
    %c0_4 = arith.constant 0 : index
    %6 = vector.load %arg3[%c0_3, %c0_4] : memref<4x512xbf16, #tpu.memory_space<vmem>>, vector<4x512xbf16>
    %cst = arith.constant dense<0.000000e+00> : vector<64x512xf32>
    %7 = tpu.matmul %5, %6, %cst {dimension_numbers = #tpu.dot_dimension_numbers<[1], [0], [0], [1], [0, 0, 1, 1], [], []>} : vector<64x4xbf16>, vector<4x512xbf16>, vector<64x512xf32> -> vector<64x512xf32>
    %c0_5 = arith.constant 0 : index
    %c0_6 = arith.constant 0 : index
    %8 = vector.load %arg5[%c0_5, %c0_6] : memref<1x512xf32, #tpu.memory_space<vmem>>, vector<1x512xf32>
    %9 = vector.broadcast %8 : vector<1x512xf32> to vector<64x512xf32>
    %10 = arith.addf %7, %9 : vector<64x512xf32>
    %c0_7 = arith.constant 0 : index
    %c0_8 = arith.constant 0 : index
    %11 = vector.load %arg12[%c0_7, %c0_8] : memref<64x512xf32, #tpu.memory_space<vmem>>, vector<64x512xf32>
    tpu.vector_store %arg12[%c0_7, %c0_8], %10 {strides = array<i32>} : memref<64x512xf32, #tpu.memory_space<vmem>>, vector<64x512xf32>,
    %c0_9 = arith.constant 0 : index
    %c0_10 = arith.constant 0 : index
    %c0_11 = arith.constant 0 : index
    %12 = vector.load %arg15[%c0_9, %c0_10, %c0_11] : memref<2x8x128xf32, #tpu.memory_space<vmem>>, vector<1x8x128xf32>
    %13 = vector.shape_cast %12 : vector<1x8x128xf32> to vector<8x128xf32>
    %c0_12 = arith.constant 0 : index
    %c0_13 = arith.constant 0 : index
    %c0_14 = arith.constant 0 : index
    %14 = vector.load %arg16[%c0_12, %c0_13, %c0_14] : memref<2x8x128xf32, #tpu.memory_space<vmem>>, vector<1x8x128xf32>
    %15 = vector.shape_cast %14 : vector<1x8x128xf32> to vector<8x128xf32>
    %c0_15 = arith.constant 0 : index
    %c0_16 = arith.constant 0 : index
    %16 = vector.load %arg12[%c0_15, %c0_16] : memref<64x512xf32, #tpu.memory_space<vmem>>, vector<8x512xf32>
    %17 = arith.truncf %13 : vector<8x128xf32> to vector<8x128xbf16>
    %c0_17 = arith.constant 0 : index
    %c0_18 = arith.constant 0 : index
    %18 = vector.load %arg4[%c0_17, %c0_18] : memref<128x512xbf16, #tpu.memory_space<vmem>>, vector<128x512xbf16>
    %cst_19 = arith.constant dense<0.000000e+00> : vector<8x512xf32>
    %19 = tpu.matmul %17, %18, %cst_19 {dimension_numbers = #tpu.dot_dimension_numbers<[1], [0], [0], [1], [0, 0, 1, 1], [], []>} : vector<8x128xbf16>, vector<128x512xbf16>, vector<8x512xf32> -> vector<8x512xf32>
    %20 = arith.addf %16, %19 : vector<8x512xf32>
    %21 = vector.extract_strided_slice %20 {offsets = [0, 0], sizes = [8, 128], strides = [1, 1]} : vector<8x512xf32> to vector<8x128xf32>
    %22 = arith.negf %21 : vector<8x128xf32>
    %23 = math.exp %22 : vector<8x128xf32>
    %cst_20 = arith.constant 1.000000e+00 : f32
    %24 = vector.broadcast %cst_20 : f32 to vector<8x128xf32>
    %25 = arith.addf %24, %23 : vector<8x128xf32>
    %26 = arith.divf %24, %25 : vector<8x128xf32>
    %27 = vector.extract_strided_slice %20 {offsets = [0, 128], sizes = [8, 128], strides = [1, 1]} : vector<8x512xf32> to vector<8x128xf32>
    %28 = arith.negf %27 : vector<8x128xf32>
    %29 = math.exp %28 : vector<8x128xf32>
    %cst_21 = arith.constant 1.000000e+00 : f32
    %30 = vector.broadcast %cst_21 : f32 to vector<8x128xf32>
    %31 = arith.addf %30, %29 : vector<8x128xf32>
    %32 = arith.divf %30, %31 : vector<8x128xf32>
    %33 = vector.extract_strided_slice %20 {offsets = [0, 256], sizes = [8, 128], strides = [1, 1]} : vector<8x512xf32> to vector<8x128xf32>
    %34 = math.tanh %33 : vector<8x128xf32>
    %35 = vector.extract_strided_slice %20 {offsets = [0, 384], sizes = [8, 128], strides = [1, 1]} : vector<8x512xf32> to vector<8x128xf32>
    %36 = arith.negf %35 : vector<8x128xf32>
    %37 = math.exp %36 : vector<8x128xf32>
    %cst_22 = arith.constant 1.000000e+00 : f32
    %38 = vector.broadcast %cst_22 : f32 to vector<8x128xf32>
    %39 = arith.addf %38, %37 : vector<8x128xf32>
    %40 = arith.divf %38, %39 : vector<8x128xf32>
    %41 = arith.mulf %32, %15 : vector<8x128xf32>
    %42 = arith.mulf %26, %34 : vector<8x128xf32>
    %43 = arith.addf %41, %42 : vector<8x128xf32>
    %44 = math.tanh %43 : vector<8x128xf32>
    %45 = arith.mulf %40, %44 : vector<8x128xf32>
    %c0_23 = arith.constant 0 : index
    %c0_24 = arith.constant 0 : index
    %46 = vector.load %arg13[%c0_23, %c0_24] : memref<64x128xf32, #tpu.memory_space<vmem>>, vector<8x128xf32>
    tpu.vector_store %arg13[%c0_23, %c0_24], %45 {strides = array<i32>} : memref<64x128xf32, #tpu.memory_space<vmem>>, vector<8x128xf32>,
    %c8 = arith.constant 8 : index
    %c0_25 = arith.constant 0 : index
    %47 = vector.load %arg12[%c8, %c0_25] : memref<64x512xf32, #tpu.memory_space<vmem>>, vector<8x512xf32>
    %48 = arith.truncf %45 : vector<8x128xf32> to vector<8x128xbf16>
    %c0_26 = arith.constant 0 : index
    %c0_27 = arith.constant 0 : index
    %49 = vector.load %arg4[%c0_26, %c0_27] : memref<128x512xbf16, #tpu.memory_space<vmem>>, vector<128x512xbf16>
    %cst_28 = arith.constant dense<0.000000e+00> : vector<8x512xf32>
    %50 = tpu.matmul %48, %49, %cst_28 {dimension_numbers = #tpu.dot_dimension_numbers<[1], [0], [0], [1], [0, 0, 1, 1], [], []>} : vector<8x128xbf16>, vector<128x512xbf16>, vector<8x512xf32> -> vector<8x512xf32>
    %51 = arith.addf %47, %50 : vector<8x512xf32>
    %52 = vector.extract_strided_slice %51 {offsets = [0, 0], sizes = [8, 128], strides = [1, 1]} : vector<8x512xf32> to vector<8x128xf32>
    %53 = arith.negf %52 : vector<8x128xf32>
    %54 = math.exp %53 : vector<8x128xf32>
    %cst_29 = arith.constant 1.000000e+00 : f32
    %55 = vector.broadcast %cst_29 : f32 to vector<8x128xf32>
    %56 = arith.addf %55, %54 : vector<8x128xf32>
    %57 = arith.divf %55, %56 : vector<8x128xf32>
    %58 = vector.extract_strided_slice %51 {offsets = [0, 128], sizes = [8, 128], strides = [1, 1]} : vector<8x512xf32> to vector<8x128xf32>
    %59 = arith.negf %58 : vector<8x128xf32>
    %60 = math.exp %59 : vector<8x128xf32>
    %cst_30 = arith.constant 1.000000e+00 : f32
    %61 = vector.broadcast %cst_30 : f32 to vector<8x128xf32>
    %62 = arith.addf %61, %60 : vector<8x128xf32>
    %63 = arith.divf %61, %62 : vector<8x128xf32>
    %64 = vector.extract_strided_slice %51 {offsets = [0, 256], sizes = [8, 128], strides = [1, 1]} : vector<8x512xf32> to vector<8x128xf32>
    %65 = math.tanh %64 : vector<8x128xf32>
    %66 = vector.extract_strided_slice %51 {offsets = [0, 384], sizes = [8, 128], strides = [1, 1]} : vector<8x512xf32> to vector<8x128xf32>
    %67 = arith.negf %66 : vector<8x128xf32>
    %68 = math.exp %67 : vector<8x128xf32>
    %cst_31 = arith.constant 1.000000e+00 : f32
    %69 = vector.broadcast %cst_31 : f32 to vector<8x128xf32>
    %70 = arith.addf %69, %68 : vector<8x128xf32>
    %71 = arith.divf %69, %70 : vector<8x128xf32>
    %72 = arith.mulf %63, %43 : vector<8x128xf32>
    %73 = arith.mulf %57, %65 : vector<8x128xf32>
    %74 = arith.addf %72, %73 : vector<8x128xf32>
    %75 = math.tanh %74 : vector<8x128xf32>
    %76 = arith.mulf %71, %75 : vector<8x128xf32>
    %c8_32 = arith.constant 8 : index
    %c0_33 = arith.constant 0 : index
    %77 = vector.load %arg13[%c8_32, %c0_33] : memref<64x128xf32, #tpu.memory_space<vmem>>, vector<8x128xf32>
    tpu.vector_store %arg13[%c8_32, %c0_33], %76 {strides = array<i32>} : memref<64x128xf32, #tpu.memory_space<vmem>>, vector<8x128xf32>,
    %c16 = arith.constant 16 : index
    %c0_34 = arith.constant 0 : index
    %78 = vector.load %arg12[%c16, %c0_34] : memref<64x512xf32, #tpu.memory_space<vmem>>, vector<8x512xf32>
    %79 = arith.truncf %76 : vector<8x128xf32> to vector<8x128xbf16>
    %c0_35 = arith.constant 0 : index
    %c0_36 = arith.constant 0 : index
    %80 = vector.load %arg4[%c0_35, %c0_36] : memref<128x512xbf16, #tpu.memory_space<vmem>>, vector<128x512xbf16>
    %cst_37 = arith.constant dense<0.000000e+00> : vector<8x512xf32>
    %81 = tpu.matmul %79, %80, %cst_37 {dimension_numbers = #tpu.dot_dimension_numbers<[1], [0], [0], [1], [0, 0, 1, 1], [], []>} : vector<8x128xbf16>, vector<128x512xbf16>, vector<8x512xf32> -> vector<8x512xf32>
    %82 = arith.addf %78, %81 : vector<8x512xf32>
    %83 = vector.extract_strided_slice %82 {offsets = [0, 0], sizes = [8, 128], strides = [1, 1]} : vector<8x512xf32> to vector<8x128xf32>
    %84 = arith.negf %83 : vector<8x128xf32>
    %85 = math.exp %84 : vector<8x128xf32>
    %cst_38 = arith.constant 1.000000e+00 : f32
    %86 = vector.broadcast %cst_38 : f32 to vector<8x128xf32>
    %87 = arith.addf %86, %85 : vector<8x128xf32>
    %88 = arith.divf %86, %87 : vector<8x128xf32>
    %89 = vector.extract_strided_slice %82 {offsets = [0, 128], sizes = [8, 128], strides = [1, 1]} : vector<8x512xf32> to vector<8x128xf32>
    %90 = arith.negf %89 : vector<8x128xf32>
    %91 = math.exp %90 : vector<8x128xf32>
    %cst_39 = arith.constant 1.000000e+00 : f32
    %92 = vector.broadcast %cst_39 : f32 to vector<8x128xf32>
    %93 = arith.addf %92, %91 : vector<8x128xf32>
    %94 = arith.divf %92, %93 : vector<8x128xf32>
    %95 = vector.extract_strided_slice %82 {offsets = [0, 256], sizes = [8, 128], strides = [1, 1]} : vector<8x512xf32> to vector<8x128xf32>
    %96 = math.tanh %95 : vector<8x128xf32>
    %97 = vector.extract_strided_slice %82 {offsets = [0, 384], sizes = [8, 128], strides = [1, 1]} : vector<8x512xf32> to vector<8x128xf32>
    %98 = arith.negf %97 : vector<8x128xf32>
    %99 = math.exp %98 : vector<8x128xf32>
    %cst_40 = arith.constant 1.000000e+00 : f32
    %100 = vector.broadcast %cst_40 : f32 to vector<8x128xf32>
    %101 = arith.addf %100, %99 : vector<8x128xf32>
    %102 = arith.divf %100, %101 : vector<8x128xf32>
    %103 = arith.mulf %94, %74 : vector<8x128xf32>
    %104 = arith.mulf %88, %96 : vector<8x128xf32>
    %105 = arith.addf %103, %104 : vector<8x128xf32>
    %106 = math.tanh %105 : vector<8x128xf32>
    %107 = arith.mulf %102, %106 : vector<8x128xf32>
    %c16_41 = arith.constant 16 : index
    %c0_42 = arith.constant 0 : index
    %108 = vector.load %arg13[%c16_41, %c0_42] : memref<64x128xf32, #tpu.memory_space<vmem>>, vector<8x128xf32>
    tpu.vector_store %arg13[%c16_41, %c0_42], %107 {strides = array<i32>} : memref<64x128xf32, #tpu.memory_space<vmem>>, vector<8x128xf32>,
    %c24 = arith.constant 24 : index
    %c0_43 = arith.constant 0 : index
    %109 = vector.load %arg12[%c24, %c0_43] : memref<64x512xf32, #tpu.memory_space<vmem>>, vector<8x512xf32>
    %110 = arith.truncf %107 : vector<8x128xf32> to vector<8x128xbf16>
    %c0_44 = arith.constant 0 : index
    %c0_45 = arith.constant 0 : index
    %111 = vector.load %arg4[%c0_44, %c0_45] : memref<128x512xbf16, #tpu.memory_space<vmem>>, vector<128x512xbf16>
    %cst_46 = arith.constant dense<0.000000e+00> : vector<8x512xf32>
    %112 = tpu.matmul %110, %111, %cst_46 {dimension_numbers = #tpu.dot_dimension_numbers<[1], [0], [0], [1], [0, 0, 1, 1], [], []>} : vector<8x128xbf16>, vector<128x512xbf16>, vector<8x512xf32> -> vector<8x512xf32>
    %113 = arith.addf %109, %112 : vector<8x512xf32>
    %114 = vector.extract_strided_slice %113 {offsets = [0, 0], sizes = [8, 128], strides = [1, 1]} : vector<8x512xf32> to vector<8x128xf32>
    %115 = arith.negf %114 : vector<8x128xf32>
    %116 = math.exp %115 : vector<8x128xf32>
    %cst_47 = arith.constant 1.000000e+00 : f32
    %117 = vector.broadcast %cst_47 : f32 to vector<8x128xf32>
    %118 = arith.addf %117, %116 : vector<8x128xf32>
    %119 = arith.divf %117, %118 : vector<8x128xf32>
    %120 = vector.extract_strided_slice %113 {offsets = [0, 128], sizes = [8, 128], strides = [1, 1]} : vector<8x512xf32> to vector<8x128xf32>
    %121 = arith.negf %120 : vector<8x128xf32>
    %122 = math.exp %121 : vector<8x128xf32>
    %cst_48 = arith.constant 1.000000e+00 : f32
    %123 = vector.broadcast %cst_48 : f32 to vector<8x128xf32>
    %124 = arith.addf %123, %122 : vector<8x128xf32>
    %125 = arith.divf %123, %124 : vector<8x128xf32>
    %126 = vector.extract_strided_slice %113 {offsets = [0, 256], sizes = [8, 128], strides = [1, 1]} : vector<8x512xf32> to vector<8x128xf32>
    %127 = math.tanh %126 : vector<8x128xf32>
    %128 = vector.extract_strided_slice %113 {offsets = [0, 384], sizes = [8, 128], strides = [1, 1]} : vector<8x512xf32> to vector<8x128xf32>
    %129 = arith.negf %128 : vector<8x128xf32>
    %130 = math.exp %129 : vector<8x128xf32>
    %cst_49 = arith.constant 1.000000e+00 : f32
    %131 = vector.broadcast %cst_49 : f32 to vector<8x128xf32>
    %132 = arith.addf %131, %130 : vector<8x128xf32>
    %133 = arith.divf %131, %132 : vector<8x128xf32>
    %134 = arith.mulf %125, %105 : vector<8x128xf32>
    %135 = arith.mulf %119, %127 : vector<8x128xf32>
    %136 = arith.addf %134, %135 : vector<8x128xf32>
    %137 = math.tanh %136 : vector<8x128xf32>
    %138 = arith.mulf %133, %137 : vector<8x128xf32>
    %c24_50 = arith.constant 24 : index
    %c0_51 = arith.constant 0 : index
    %139 = vector.load %arg13[%c24_50, %c0_51] : memref<64x128xf32, #tpu.memory_space<vmem>>, vector<8x128xf32>
    tpu.vector_store %arg13[%c24_50, %c0_51], %138 {strides = array<i32>} : memref<64x128xf32, #tpu.memory_space<vmem>>, vector<8x128xf32>,
    %c32 = arith.constant 32 : index
    %c0_52 = arith.constant 0 : index
    %140 = vector.load %arg12[%c32, %c0_52] : memref<64x512xf32, #tpu.memory_space<vmem>>, vector<8x512xf32>
    %141 = arith.truncf %138 : vector<8x128xf32> to vector<8x128xbf16>
    %c0_53 = arith.constant 0 : index
    %c0_54 = arith.constant 0 : index
    %142 = vector.load %arg4[%c0_53, %c0_54] : memref<128x512xbf16, #tpu.memory_space<vmem>>, vector<128x512xbf16>
    %cst_55 = arith.constant dense<0.000000e+00> : vector<8x512xf32>
    %143 = tpu.matmul %141, %142, %cst_55 {dimension_numbers = #tpu.dot_dimension_numbers<[1], [0], [0], [1], [0, 0, 1, 1], [], []>} : vector<8x128xbf16>, vector<128x512xbf16>, vector<8x512xf32> -> vector<8x512xf32>
    %144 = arith.addf %140, %143 : vector<8x512xf32>
    %145 = vector.extract_strided_slice %144 {offsets = [0, 0], sizes = [8, 128], strides = [1, 1]} : vector<8x512xf32> to vector<8x128xf32>
    %146 = arith.negf %145 : vector<8x128xf32>
    %147 = math.exp %146 : vector<8x128xf32>
    %cst_56 = arith.constant 1.000000e+00 : f32
    %148 = vector.broadcast %cst_56 : f32 to vector<8x128xf32>
    %149 = arith.addf %148, %147 : vector<8x128xf32>
    %150 = arith.divf %148, %149 : vector<8x128xf32>
    %151 = vector.extract_strided_slice %144 {offsets = [0, 128], sizes = [8, 128], strides = [1, 1]} : vector<8x512xf32> to vector<8x128xf32>
    %152 = arith.negf %151 : vector<8x128xf32>
    %153 = math.exp %152 : vector<8x128xf32>
    %cst_57 = arith.constant 1.000000e+00 : f32
    %154 = vector.broadcast %cst_57 : f32 to vector<8x128xf32>
    %155 = arith.addf %154, %153 : vector<8x128xf32>
    %156 = arith.divf %154, %155 : vector<8x128xf32>
    %157 = vector.extract_strided_slice %144 {offsets = [0, 256], sizes = [8, 128], strides = [1, 1]} : vector<8x512xf32> to vector<8x128xf32>
    %158 = math.tanh %157 : vector<8x128xf32>
    %159 = vector.extract_strided_slice %144 {offsets = [0, 384], sizes = [8, 128], strides = [1, 1]} : vector<8x512xf32> to vector<8x128xf32>
    %160 = arith.negf %159 : vector<8x128xf32>
    %161 = math.exp %160 : vector<8x128xf32>
    %cst_58 = arith.constant 1.000000e+00 : f32
    %162 = vector.broadcast %cst_58 : f32 to vector<8x128xf32>
    %163 = arith.addf %162, %161 : vector<8x128xf32>
    %164 = arith.divf %162, %163 : vector<8x128xf32>
    %165 = arith.mulf %156, %136 : vector<8x128xf32>
    %166 = arith.mulf %150, %158 : vector<8x128xf32>
    %167 = arith.addf %165, %166 : vector<8x128xf32>
    %168 = math.tanh %167 : vector<8x128xf32>
    %169 = arith.mulf %164, %168 : vector<8x128xf32>
    %c32_59 = arith.constant 32 : index
    %c0_60 = arith.constant 0 : index
    %170 = vector.load %arg13[%c32_59, %c0_60] : memref<64x128xf32, #tpu.memory_space<vmem>>, vector<8x128xf32>
    tpu.vector_store %arg13[%c32_59, %c0_60], %169 {strides = array<i32>} : memref<64x128xf32, #tpu.memory_space<vmem>>, vector<8x128xf32>,
    %c40 = arith.constant 40 : index
    %c0_61 = arith.constant 0 : index
    %171 = vector.load %arg12[%c40, %c0_61] : memref<64x512xf32, #tpu.memory_space<vmem>>, vector<8x512xf32>
    %172 = arith.truncf %169 : vector<8x128xf32> to vector<8x128xbf16>
    %c0_62 = arith.constant 0 : index
    %c0_63 = arith.constant 0 : index
    %173 = vector.load %arg4[%c0_62, %c0_63] : memref<128x512xbf16, #tpu.memory_space<vmem>>, vector<128x512xbf16>
    %cst_64 = arith.constant dense<0.000000e+00> : vector<8x512xf32>
    %174 = tpu.matmul %172, %173, %cst_64 {dimension_numbers = #tpu.dot_dimension_numbers<[1], [0], [0], [1], [0, 0, 1, 1], [], []>} : vector<8x128xbf16>, vector<128x512xbf16>, vector<8x512xf32> -> vector<8x512xf32>
    %175 = arith.addf %171, %174 : vector<8x512xf32>
    %176 = vector.extract_strided_slice %175 {offsets = [0, 0], sizes = [8, 128], strides = [1, 1]} : vector<8x512xf32> to vector<8x128xf32>
    %177 = arith.negf %176 : vector<8x128xf32>
    %178 = math.exp %177 : vector<8x128xf32>
    %cst_65 = arith.constant 1.000000e+00 : f32
    %179 = vector.broadcast %cst_65 : f32 to vector<8x128xf32>
    %180 = arith.addf %179, %178 : vector<8x128xf32>
    %181 = arith.divf %179, %180 : vector<8x128xf32>
    %182 = vector.extract_strided_slice %175 {offsets = [0, 128], sizes = [8, 128], strides = [1, 1]} : vector<8x512xf32> to vector<8x128xf32>
    %183 = arith.negf %182 : vector<8x128xf32>
    %184 = math.exp %183 : vector<8x128xf32>
    %cst_66 = arith.constant 1.000000e+00 : f32
    %185 = vector.broadcast %cst_66 : f32 to vector<8x128xf32>
    %186 = arith.addf %185, %184 : vector<8x128xf32>
    %187 = arith.divf %185, %186 : vector<8x128xf32>
    %188 = vector.extract_strided_slice %175 {offsets = [0, 256], sizes = [8, 128], strides = [1, 1]} : vector<8x512xf32> to vector<8x128xf32>
    %189 = math.tanh %188 : vector<8x128xf32>
    %190 = vector.extract_strided_slice %175 {offsets = [0, 384], sizes = [8, 128], strides = [1, 1]} : vector<8x512xf32> to vector<8x128xf32>
    %191 = arith.negf %190 : vector<8x128xf32>
    %192 = math.exp %191 : vector<8x128xf32>
    %cst_67 = arith.constant 1.000000e+00 : f32
    %193 = vector.broadcast %cst_67 : f32 to vector<8x128xf32>
    %194 = arith.addf %193, %192 : vector<8x128xf32>
    %195 = arith.divf %193, %194 : vector<8x128xf32>
    %196 = arith.mulf %187, %167 : vector<8x128xf32>
    %197 = arith.mulf %181, %189 : vector<8x128xf32>
    %198 = arith.addf %196, %197 : vector<8x128xf32>
    %199 = math.tanh %198 : vector<8x128xf32>
    %200 = arith.mulf %195, %199 : vector<8x128xf32>
    %c40_68 = arith.constant 40 : index
    %c0_69 = arith.constant 0 : index
    %201 = vector.load %arg13[%c40_68, %c0_69] : memref<64x128xf32, #tpu.memory_space<vmem>>, vector<8x128xf32>
    tpu.vector_store %arg13[%c40_68, %c0_69], %200 {strides = array<i32>} : memref<64x128xf32, #tpu.memory_space<vmem>>, vector<8x128xf32>,
    %c48 = arith.constant 48 : index
    %c0_70 = arith.constant 0 : index
    %202 = vector.load %arg12[%c48, %c0_70] : memref<64x512xf32, #tpu.memory_space<vmem>>, vector<8x512xf32>
    %203 = arith.truncf %200 : vector<8x128xf32> to vector<8x128xbf16>
    %c0_71 = arith.constant 0 : index
    %c0_72 = arith.constant 0 : index
    %204 = vector.load %arg4[%c0_71, %c0_72] : memref<128x512xbf16, #tpu.memory_space<vmem>>, vector<128x512xbf16>
    %cst_73 = arith.constant dense<0.000000e+00> : vector<8x512xf32>
    %205 = tpu.matmul %203, %204, %cst_73 {dimension_numbers = #tpu.dot_dimension_numbers<[1], [0], [0], [1], [0, 0, 1, 1], [], []>} : vector<8x128xbf16>, vector<128x512xbf16>, vector<8x512xf32> -> vector<8x512xf32>
    %206 = arith.addf %202, %205 : vector<8x512xf32>
    %207 = vector.extract_strided_slice %206 {offsets = [0, 0], sizes = [8, 128], strides = [1, 1]} : vector<8x512xf32> to vector<8x128xf32>
    %208 = arith.negf %207 : vector<8x128xf32>
    %209 = math.exp %208 : vector<8x128xf32>
    %cst_74 = arith.constant 1.000000e+00 : f32
    %210 = vector.broadcast %cst_74 : f32 to vector<8x128xf32>
    %211 = arith.addf %210, %209 : vector<8x128xf32>
    %212 = arith.divf %210, %211 : vector<8x128xf32>
    %213 = vector.extract_strided_slice %206 {offsets = [0, 128], sizes = [8, 128], strides = [1, 1]} : vector<8x512xf32> to vector<8x128xf32>
    %214 = arith.negf %213 : vector<8x128xf32>
    %215 = math.exp %214 : vector<8x128xf32>
    %cst_75 = arith.constant 1.000000e+00 : f32
    %216 = vector.broadcast %cst_75 : f32 to vector<8x128xf32>
    %217 = arith.addf %216, %215 : vector<8x128xf32>
    %218 = arith.divf %216, %217 : vector<8x128xf32>
    %219 = vector.extract_strided_slice %206 {offsets = [0, 256], sizes = [8, 128], strides = [1, 1]} : vector<8x512xf32> to vector<8x128xf32>
    %220 = math.tanh %219 : vector<8x128xf32>
    %221 = vector.extract_strided_slice %206 {offsets = [0, 384], sizes = [8, 128], strides = [1, 1]} : vector<8x512xf32> to vector<8x128xf32>
    %222 = arith.negf %221 : vector<8x128xf32>
    %223 = math.exp %222 : vector<8x128xf32>
    %cst_76 = arith.constant 1.000000e+00 : f32
    %224 = vector.broadcast %cst_76 : f32 to vector<8x128xf32>
    %225 = arith.addf %224, %223 : vector<8x128xf32>
    %226 = arith.divf %224, %225 : vector<8x128xf32>
    %227 = arith.mulf %218, %198 : vector<8x128xf32>
    %228 = arith.mulf %212, %220 : vector<8x128xf32>
    %229 = arith.addf %227, %228 : vector<8x128xf32>
    %230 = math.tanh %229 : vector<8x128xf32>
    %231 = arith.mulf %226, %230 : vector<8x128xf32>
    %c48_77 = arith.constant 48 : index
    %c0_78 = arith.constant 0 : index
    %232 = vector.load %arg13[%c48_77, %c0_78] : memref<64x128xf32, #tpu.memory_space<vmem>>, vector<8x128xf32>
    tpu.vector_store %arg13[%c48_77, %c0_78], %231 {strides = array<i32>} : memref<64x128xf32, #tpu.memory_space<vmem>>, vector<8x128xf32>,
    %c56 = arith.constant 56 : index
    %c0_79 = arith.constant 0 : index
    %233 = vector.load %arg12[%c56, %c0_79] : memref<64x512xf32, #tpu.memory_space<vmem>>, vector<8x512xf32>
    %234 = arith.truncf %231 : vector<8x128xf32> to vector<8x128xbf16>
    %c0_80 = arith.constant 0 : index
    %c0_81 = arith.constant 0 : index
    %235 = vector.load %arg4[%c0_80, %c0_81] : memref<128x512xbf16, #tpu.memory_space<vmem>>, vector<128x512xbf16>
    %cst_82 = arith.constant dense<0.000000e+00> : vector<8x512xf32>
    %236 = tpu.matmul %234, %235, %cst_82 {dimension_numbers = #tpu.dot_dimension_numbers<[1], [0], [0], [1], [0, 0, 1, 1], [], []>} : vector<8x128xbf16>, vector<128x512xbf16>, vector<8x512xf32> -> vector<8x512xf32>
    %237 = arith.addf %233, %236 : vector<8x512xf32>
    %238 = vector.extract_strided_slice %237 {offsets = [0, 0], sizes = [8, 128], strides = [1, 1]} : vector<8x512xf32> to vector<8x128xf32>
    %239 = arith.negf %238 : vector<8x128xf32>
    %240 = math.exp %239 : vector<8x128xf32>
    %cst_83 = arith.constant 1.000000e+00 : f32
    %241 = vector.broadcast %cst_83 : f32 to vector<8x128xf32>
    %242 = arith.addf %241, %240 : vector<8x128xf32>
    %243 = arith.divf %241, %242 : vector<8x128xf32>
    %244 = vector.extract_strided_slice %237 {offsets = [0, 128], sizes = [8, 128], strides = [1, 1]} : vector<8x512xf32> to vector<8x128xf32>
    %245 = arith.negf %244 : vector<8x128xf32>
    %246 = math.exp %245 : vector<8x128xf32>
    %cst_84 = arith.constant 1.000000e+00 : f32
    %247 = vector.broadcast %cst_84 : f32 to vector<8x128xf32>
    %248 = arith.addf %247, %246 : vector<8x128xf32>
    %249 = arith.divf %247, %248 : vector<8x128xf32>
    %250 = vector.extract_strided_slice %237 {offsets = [0, 256], sizes = [8, 128], strides = [1, 1]} : vector<8x512xf32> to vector<8x128xf32>
    %251 = math.tanh %250 : vector<8x128xf32>
    %252 = vector.extract_strided_slice %237 {offsets = [0, 384], sizes = [8, 128], strides = [1, 1]} : vector<8x512xf32> to vector<8x128xf32>
    %253 = arith.negf %252 : vector<8x128xf32>
    %254 = math.exp %253 : vector<8x128xf32>
    %cst_85 = arith.constant 1.000000e+00 : f32
    %255 = vector.broadcast %cst_85 : f32 to vector<8x128xf32>
    %256 = arith.addf %255, %254 : vector<8x128xf32>
    %257 = arith.divf %255, %256 : vector<8x128xf32>
    %258 = arith.mulf %249, %229 : vector<8x128xf32>
    %259 = arith.mulf %243, %251 : vector<8x128xf32>
    %260 = arith.addf %258, %259 : vector<8x128xf32>
    %261 = math.tanh %260 : vector<8x128xf32>
    %262 = arith.mulf %257, %261 : vector<8x128xf32>
    %c56_86 = arith.constant 56 : index
    %c0_87 = arith.constant 0 : index
    %263 = vector.load %arg13[%c56_86, %c0_87] : memref<64x128xf32, #tpu.memory_space<vmem>>, vector<8x128xf32>
    tpu.vector_store %arg13[%c56_86, %c0_87], %262 {strides = array<i32>} : memref<64x128xf32, #tpu.memory_space<vmem>>, vector<8x128xf32>,
    %c0_88 = arith.constant 0 : index
    %c0_89 = arith.constant 0 : index
    %c0_90 = arith.constant 0 : index
    %264 = vector.load %arg15[%c0_88, %c0_89, %c0_90] : memref<2x8x128xf32, #tpu.memory_space<vmem>>, vector<1x8x128xf32>
    %265 = vector.shape_cast %264 : vector<1x8x128xf32> to vector<8x128xf32>
    %266 = vector.shape_cast %262 : vector<8x128xf32> to vector<1x8x128xf32>
    tpu.vector_store %arg15[%c0_88, %c0_89, %c0_90], %266 {strides = array<i32>} : memref<2x8x128xf32, #tpu.memory_space<vmem>>, vector<1x8x128xf32>,
    %c0_91 = arith.constant 0 : index
    %c0_92 = arith.constant 0 : index
    %c0_93 = arith.constant 0 : index
    %267 = vector.load %arg16[%c0_91, %c0_92, %c0_93] : memref<2x8x128xf32, #tpu.memory_space<vmem>>, vector<1x8x128xf32>
    %268 = vector.shape_cast %267 : vector<1x8x128xf32> to vector<8x128xf32>
    %269 = vector.shape_cast %260 : vector<8x128xf32> to vector<1x8x128xf32>
    tpu.vector_store %arg16[%c0_91, %c0_92, %c0_93], %269 {strides = array<i32>} : memref<2x8x128xf32, #tpu.memory_space<vmem>>, vector<1x8x128xf32>,
    %c0_94 = arith.constant 0 : index
    %c0_95 = arith.constant 0 : index
    %270 = vector.load %arg13[%c0_94, %c0_95] : memref<64x128xf32, #tpu.memory_space<vmem>>, vector<64x128xf32>
    %271 = arith.truncf %270 : vector<64x128xf32> to vector<64x128xbf16>
    %c0_96 = arith.constant 0 : index
    %c0_97 = arith.constant 0 : index
    %272 = vector.load %arg6[%c0_96, %c0_97] : memref<128x512xbf16, #tpu.memory_space<vmem>>, vector<128x512xbf16>
    %cst_98 = arith.constant dense<0.000000e+00> : vector<64x512xf32>
    %273 = tpu.matmul %271, %272, %cst_98 {dimension_numbers = #tpu.dot_dimension_numbers<[1], [0], [0], [1], [0, 0, 1, 1], [], []>} : vector<64x128xbf16>, vector<128x512xbf16>, vector<64x512xf32> -> vector<64x512xf32>
    %c0_99 = arith.constant 0 : index
    %c0_100 = arith.constant 0 : index
    %274 = vector.load %arg8[%c0_99, %c0_100] : memref<1x512xf32, #tpu.memory_space<vmem>>, vector<1x512xf32>
    %275 = vector.broadcast %274 : vector<1x512xf32> to vector<64x512xf32>
    %276 = arith.addf %273, %275 : vector<64x512xf32>
    %c0_101 = arith.constant 0 : index
    %c0_102 = arith.constant 0 : index
    %277 = vector.load %arg12[%c0_101, %c0_102] : memref<64x512xf32, #tpu.memory_space<vmem>>, vector<64x512xf32>
    tpu.vector_store %arg12[%c0_101, %c0_102], %276 {strides = array<i32>} : memref<64x512xf32, #tpu.memory_space<vmem>>, vector<64x512xf32>,
    %c1 = arith.constant 1 : index
    %c0_103 = arith.constant 0 : index
    %c0_104 = arith.constant 0 : index
    %278 = vector.load %arg15[%c1, %c0_103, %c0_104] : memref<2x8x128xf32, #tpu.memory_space<vmem>>, vector<1x8x128xf32>
    %279 = vector.shape_cast %278 : vector<1x8x128xf32> to vector<8x128xf32>
    %c1_105 = arith.constant 1 : index
    %c0_106 = arith.constant 0 : index
    %c0_107 = arith.constant 0 : index
    %280 = vector.load %arg16[%c1_105, %c0_106, %c0_107] : memref<2x8x128xf32, #tpu.memory_space<vmem>>, vector<1x8x128xf32>
    %281 = vector.shape_cast %280 : vector<1x8x128xf32> to vector<8x128xf32>
    %c0_108 = arith.constant 0 : index
    %c0_109 = arith.constant 0 : index
    %282 = vector.load %arg12[%c0_108, %c0_109] : memref<64x512xf32, #tpu.memory_space<vmem>>, vector<8x512xf32>
    %283 = arith.truncf %279 : vector<8x128xf32> to vector<8x128xbf16>
    %c0_110 = arith.constant 0 : index
    %c0_111 = arith.constant 0 : index
    %284 = vector.load %arg7[%c0_110, %c0_111] : memref<128x512xbf16, #tpu.memory_space<vmem>>, vector<128x512xbf16>
    %cst_112 = arith.constant dense<0.000000e+00> : vector<8x512xf32>
    %285 = tpu.matmul %283, %284, %cst_112 {dimension_numbers = #tpu.dot_dimension_numbers<[1], [0], [0], [1], [0, 0, 1, 1], [], []>} : vector<8x128xbf16>, vector<128x512xbf16>, vector<8x512xf32> -> vector<8x512xf32>
    %286 = arith.addf %282, %285 : vector<8x512xf32>
    %287 = vector.extract_strided_slice %286 {offsets = [0, 0], sizes = [8, 128], strides = [1, 1]} : vector<8x512xf32> to vector<8x128xf32>
    %288 = arith.negf %287 : vector<8x128xf32>
    %289 = math.exp %288 : vector<8x128xf32>
    %cst_113 = arith.constant 1.000000e+00 : f32
    %290 = vector.broadcast %cst_113 : f32 to vector<8x128xf32>
    %291 = arith.addf %290, %289 : vector<8x128xf32>
    %292 = arith.divf %290, %291 : vector<8x128xf32>
    %293 = vector.extract_strided_slice %286 {offsets = [0, 128], sizes = [8, 128], strides = [1, 1]} : vector<8x512xf32> to vector<8x128xf32>
    %294 = arith.negf %293 : vector<8x128xf32>
    %295 = math.exp %294 : vector<8x128xf32>
    %cst_114 = arith.constant 1.000000e+00 : f32
    %296 = vector.broadcast %cst_114 : f32 to vector<8x128xf32>
    %297 = arith.addf %296, %295 : vector<8x128xf32>
    %298 = arith.divf %296, %297 : vector<8x128xf32>
    %299 = vector.extract_strided_slice %286 {offsets = [0, 256], sizes = [8, 128], strides = [1, 1]} : vector<8x512xf32> to vector<8x128xf32>
    %300 = math.tanh %299 : vector<8x128xf32>
    %301 = vector.extract_strided_slice %286 {offsets = [0, 384], sizes = [8, 128], strides = [1, 1]} : vector<8x512xf32> to vector<8x128xf32>
    %302 = arith.negf %301 : vector<8x128xf32>
    %303 = math.exp %302 : vector<8x128xf32>
    %cst_115 = arith.constant 1.000000e+00 : f32
    %304 = vector.broadcast %cst_115 : f32 to vector<8x128xf32>
    %305 = arith.addf %304, %303 : vector<8x128xf32>
    %306 = arith.divf %304, %305 : vector<8x128xf32>
    %307 = arith.mulf %298, %281 : vector<8x128xf32>
    %308 = arith.mulf %292, %300 : vector<8x128xf32>
    %309 = arith.addf %307, %308 : vector<8x128xf32>
    %310 = math.tanh %309 : vector<8x128xf32>
    %311 = arith.mulf %306, %310 : vector<8x128xf32>
    %c8_116 = arith.constant 8 : index
    %c0_117 = arith.constant 0 : index
    %312 = vector.load %arg12[%c8_116, %c0_117] : memref<64x512xf32, #tpu.memory_space<vmem>>, vector<8x512xf32>
    %313 = arith.truncf %311 : vector<8x128xf32> to vector<8x128xbf16>
    %c0_118 = arith.constant 0 : index
    %c0_119 = arith.constant 0 : index
    %314 = vector.load %arg7[%c0_118, %c0_119] : memref<128x512xbf16, #tpu.memory_space<vmem>>, vector<128x512xbf16>
    %cst_120 = arith.constant dense<0.000000e+00> : vector<8x512xf32>
    %315 = tpu.matmul %313, %314, %cst_120 {dimension_numbers = #tpu.dot_dimension_numbers<[1], [0], [0], [1], [0, 0, 1, 1], [], []>} : vector<8x128xbf16>, vector<128x512xbf16>, vector<8x512xf32> -> vector<8x512xf32>
    %316 = arith.addf %312, %315 : vector<8x512xf32>
    %317 = vector.extract_strided_slice %316 {offsets = [0, 0], sizes = [8, 128], strides = [1, 1]} : vector<8x512xf32> to vector<8x128xf32>
    %318 = arith.negf %317 : vector<8x128xf32>
    %319 = math.exp %318 : vector<8x128xf32>
    %cst_121 = arith.constant 1.000000e+00 : f32
    %320 = vector.broadcast %cst_121 : f32 to vector<8x128xf32>
    %321 = arith.addf %320, %319 : vector<8x128xf32>
    %322 = arith.divf %320, %321 : vector<8x128xf32>
    %323 = vector.extract_strided_slice %316 {offsets = [0, 128], sizes = [8, 128], strides = [1, 1]} : vector<8x512xf32> to vector<8x128xf32>
    %324 = arith.negf %323 : vector<8x128xf32>
    %325 = math.exp %324 : vector<8x128xf32>
    %cst_122 = arith.constant 1.000000e+00 : f32
    %326 = vector.broadcast %cst_122 : f32 to vector<8x128xf32>
    %327 = arith.addf %326, %325 : vector<8x128xf32>
    %328 = arith.divf %326, %327 : vector<8x128xf32>
    %329 = vector.extract_strided_slice %316 {offsets = [0, 256], sizes = [8, 128], strides = [1, 1]} : vector<8x512xf32> to vector<8x128xf32>
    %330 = math.tanh %329 : vector<8x128xf32>
    %331 = vector.extract_strided_slice %316 {offsets = [0, 384], sizes = [8, 128], strides = [1, 1]} : vector<8x512xf32> to vector<8x128xf32>
    %332 = arith.negf %331 : vector<8x128xf32>
    %333 = math.exp %332 : vector<8x128xf32>
    %cst_123 = arith.constant 1.000000e+00 : f32
    %334 = vector.broadcast %cst_123 : f32 to vector<8x128xf32>
    %335 = arith.addf %334, %333 : vector<8x128xf32>
    %336 = arith.divf %334, %335 : vector<8x128xf32>
    %337 = arith.mulf %328, %309 : vector<8x128xf32>
    %338 = arith.mulf %322, %330 : vector<8x128xf32>
    %339 = arith.addf %337, %338 : vector<8x128xf32>
    %340 = math.tanh %339 : vector<8x128xf32>
    %341 = arith.mulf %336, %340 : vector<8x128xf32>
    %c16_124 = arith.constant 16 : index
    %c0_125 = arith.constant 0 : index
    %342 = vector.load %arg12[%c16_124, %c0_125] : memref<64x512xf32, #tpu.memory_space<vmem>>, vector<8x512xf32>
    %343 = arith.truncf %341 : vector<8x128xf32> to vector<8x128xbf16>
    %c0_126 = arith.constant 0 : index
    %c0_127 = arith.constant 0 : index
    %344 = vector.load %arg7[%c0_126, %c0_127] : memref<128x512xbf16, #tpu.memory_space<vmem>>, vector<128x512xbf16>
    %cst_128 = arith.constant dense<0.000000e+00> : vector<8x512xf32>
    %345 = tpu.matmul %343, %344, %cst_128 {dimension_numbers = #tpu.dot_dimension_numbers<[1], [0], [0], [1], [0, 0, 1, 1], [], []>} : vector<8x128xbf16>, vector<128x512xbf16>, vector<8x512xf32> -> vector<8x512xf32>
    %346 = arith.addf %342, %345 : vector<8x512xf32>
    %347 = vector.extract_strided_slice %346 {offsets = [0, 0], sizes = [8, 128], strides = [1, 1]} : vector<8x512xf32> to vector<8x128xf32>
    %348 = arith.negf %347 : vector<8x128xf32>
    %349 = math.exp %348 : vector<8x128xf32>
    %cst_129 = arith.constant 1.000000e+00 : f32
    %350 = vector.broadcast %cst_129 : f32 to vector<8x128xf32>
    %351 = arith.addf %350, %349 : vector<8x128xf32>
    %352 = arith.divf %350, %351 : vector<8x128xf32>
    %353 = vector.extract_strided_slice %346 {offsets = [0, 128], sizes = [8, 128], strides = [1, 1]} : vector<8x512xf32> to vector<8x128xf32>
    %354 = arith.negf %353 : vector<8x128xf32>
    %355 = math.exp %354 : vector<8x128xf32>
    %cst_130 = arith.constant 1.000000e+00 : f32
    %356 = vector.broadcast %cst_130 : f32 to vector<8x128xf32>
    %357 = arith.addf %356, %355 : vector<8x128xf32>
    %358 = arith.divf %356, %357 : vector<8x128xf32>
    %359 = vector.extract_strided_slice %346 {offsets = [0, 256], sizes = [8, 128], strides = [1, 1]} : vector<8x512xf32> to vector<8x128xf32>
    %360 = math.tanh %359 : vector<8x128xf32>
    %361 = vector.extract_strided_slice %346 {offsets = [0, 384], sizes = [8, 128], strides = [1, 1]} : vector<8x512xf32> to vector<8x128xf32>
    %362 = arith.negf %361 : vector<8x128xf32>
    %363 = math.exp %362 : vector<8x128xf32>
    %cst_131 = arith.constant 1.000000e+00 : f32
    %364 = vector.broadcast %cst_131 : f32 to vector<8x128xf32>
    %365 = arith.addf %364, %363 : vector<8x128xf32>
    %366 = arith.divf %364, %365 : vector<8x128xf32>
    %367 = arith.mulf %358, %339 : vector<8x128xf32>
    %368 = arith.mulf %352, %360 : vector<8x128xf32>
    %369 = arith.addf %367, %368 : vector<8x128xf32>
    %370 = math.tanh %369 : vector<8x128xf32>
    %371 = arith.mulf %366, %370 : vector<8x128xf32>
    %c24_132 = arith.constant 24 : index
    %c0_133 = arith.constant 0 : index
    %372 = vector.load %arg12[%c24_132, %c0_133] : memref<64x512xf32, #tpu.memory_space<vmem>>, vector<8x512xf32>
    %373 = arith.truncf %371 : vector<8x128xf32> to vector<8x128xbf16>
    %c0_134 = arith.constant 0 : index
    %c0_135 = arith.constant 0 : index
    %374 = vector.load %arg7[%c0_134, %c0_135] : memref<128x512xbf16, #tpu.memory_space<vmem>>, vector<128x512xbf16>
    %cst_136 = arith.constant dense<0.000000e+00> : vector<8x512xf32>
    %375 = tpu.matmul %373, %374, %cst_136 {dimension_numbers = #tpu.dot_dimension_numbers<[1], [0], [0], [1], [0, 0, 1, 1], [], []>} : vector<8x128xbf16>, vector<128x512xbf16>, vector<8x512xf32> -> vector<8x512xf32>
    %376 = arith.addf %372, %375 : vector<8x512xf32>
    %377 = vector.extract_strided_slice %376 {offsets = [0, 0], sizes = [8, 128], strides = [1, 1]} : vector<8x512xf32> to vector<8x128xf32>
    %378 = arith.negf %377 : vector<8x128xf32>
    %379 = math.exp %378 : vector<8x128xf32>
    %cst_137 = arith.constant 1.000000e+00 : f32
    %380 = vector.broadcast %cst_137 : f32 to vector<8x128xf32>
    %381 = arith.addf %380, %379 : vector<8x128xf32>
    %382 = arith.divf %380, %381 : vector<8x128xf32>
    %383 = vector.extract_strided_slice %376 {offsets = [0, 128], sizes = [8, 128], strides = [1, 1]} : vector<8x512xf32> to vector<8x128xf32>
    %384 = arith.negf %383 : vector<8x128xf32>
    %385 = math.exp %384 : vector<8x128xf32>
    %cst_138 = arith.constant 1.000000e+00 : f32
    %386 = vector.broadcast %cst_138 : f32 to vector<8x128xf32>
    %387 = arith.addf %386, %385 : vector<8x128xf32>
    %388 = arith.divf %386, %387 : vector<8x128xf32>
    %389 = vector.extract_strided_slice %376 {offsets = [0, 256], sizes = [8, 128], strides = [1, 1]} : vector<8x512xf32> to vector<8x128xf32>
    %390 = math.tanh %389 : vector<8x128xf32>
    %391 = vector.extract_strided_slice %376 {offsets = [0, 384], sizes = [8, 128], strides = [1, 1]} : vector<8x512xf32> to vector<8x128xf32>
    %392 = arith.negf %391 : vector<8x128xf32>
    %393 = math.exp %392 : vector<8x128xf32>
    %cst_139 = arith.constant 1.000000e+00 : f32
    %394 = vector.broadcast %cst_139 : f32 to vector<8x128xf32>
    %395 = arith.addf %394, %393 : vector<8x128xf32>
    %396 = arith.divf %394, %395 : vector<8x128xf32>
    %397 = arith.mulf %388, %369 : vector<8x128xf32>
    %398 = arith.mulf %382, %390 : vector<8x128xf32>
    %399 = arith.addf %397, %398 : vector<8x128xf32>
    %400 = math.tanh %399 : vector<8x128xf32>
    %401 = arith.mulf %396, %400 : vector<8x128xf32>
    %c32_140 = arith.constant 32 : index
    %c0_141 = arith.constant 0 : index
    %402 = vector.load %arg12[%c32_140, %c0_141] : memref<64x512xf32, #tpu.memory_space<vmem>>, vector<8x512xf32>
    %403 = arith.truncf %401 : vector<8x128xf32> to vector<8x128xbf16>
    %c0_142 = arith.constant 0 : index
    %c0_143 = arith.constant 0 : index
    %404 = vector.load %arg7[%c0_142, %c0_143] : memref<128x512xbf16, #tpu.memory_space<vmem>>, vector<128x512xbf16>
    %cst_144 = arith.constant dense<0.000000e+00> : vector<8x512xf32>
    %405 = tpu.matmul %403, %404, %cst_144 {dimension_numbers = #tpu.dot_dimension_numbers<[1], [0], [0], [1], [0, 0, 1, 1], [], []>} : vector<8x128xbf16>, vector<128x512xbf16>, vector<8x512xf32> -> vector<8x512xf32>
    %406 = arith.addf %402, %405 : vector<8x512xf32>
    %407 = vector.extract_strided_slice %406 {offsets = [0, 0], sizes = [8, 128], strides = [1, 1]} : vector<8x512xf32> to vector<8x128xf32>
    %408 = arith.negf %407 : vector<8x128xf32>
    %409 = math.exp %408 : vector<8x128xf32>
    %cst_145 = arith.constant 1.000000e+00 : f32
    %410 = vector.broadcast %cst_145 : f32 to vector<8x128xf32>
    %411 = arith.addf %410, %409 : vector<8x128xf32>
    %412 = arith.divf %410, %411 : vector<8x128xf32>
    %413 = vector.extract_strided_slice %406 {offsets = [0, 128], sizes = [8, 128], strides = [1, 1]} : vector<8x512xf32> to vector<8x128xf32>
    %414 = arith.negf %413 : vector<8x128xf32>
    %415 = math.exp %414 : vector<8x128xf32>
    %cst_146 = arith.constant 1.000000e+00 : f32
    %416 = vector.broadcast %cst_146 : f32 to vector<8x128xf32>
    %417 = arith.addf %416, %415 : vector<8x128xf32>
    %418 = arith.divf %416, %417 : vector<8x128xf32>
    %419 = vector.extract_strided_slice %406 {offsets = [0, 256], sizes = [8, 128], strides = [1, 1]} : vector<8x512xf32> to vector<8x128xf32>
    %420 = math.tanh %419 : vector<8x128xf32>
    %421 = vector.extract_strided_slice %406 {offsets = [0, 384], sizes = [8, 128], strides = [1, 1]} : vector<8x512xf32> to vector<8x128xf32>
    %422 = arith.negf %421 : vector<8x128xf32>
    %423 = math.exp %422 : vector<8x128xf32>
    %cst_147 = arith.constant 1.000000e+00 : f32
    %424 = vector.broadcast %cst_147 : f32 to vector<8x128xf32>
    %425 = arith.addf %424, %423 : vector<8x128xf32>
    %426 = arith.divf %424, %425 : vector<8x128xf32>
    %427 = arith.mulf %418, %399 : vector<8x128xf32>
    %428 = arith.mulf %412, %420 : vector<8x128xf32>
    %429 = arith.addf %427, %428 : vector<8x128xf32>
    %430 = math.tanh %429 : vector<8x128xf32>
    %431 = arith.mulf %426, %430 : vector<8x128xf32>
    %c40_148 = arith.constant 40 : index
    %c0_149 = arith.constant 0 : index
    %432 = vector.load %arg12[%c40_148, %c0_149] : memref<64x512xf32, #tpu.memory_space<vmem>>, vector<8x512xf32>
    %433 = arith.truncf %431 : vector<8x128xf32> to vector<8x128xbf16>
    %c0_150 = arith.constant 0 : index
    %c0_151 = arith.constant 0 : index
    %434 = vector.load %arg7[%c0_150, %c0_151] : memref<128x512xbf16, #tpu.memory_space<vmem>>, vector<128x512xbf16>
    %cst_152 = arith.constant dense<0.000000e+00> : vector<8x512xf32>
    %435 = tpu.matmul %433, %434, %cst_152 {dimension_numbers = #tpu.dot_dimension_numbers<[1], [0], [0], [1], [0, 0, 1, 1], [], []>} : vector<8x128xbf16>, vector<128x512xbf16>, vector<8x512xf32> -> vector<8x512xf32>
    %436 = arith.addf %432, %435 : vector<8x512xf32>
    %437 = vector.extract_strided_slice %436 {offsets = [0, 0], sizes = [8, 128], strides = [1, 1]} : vector<8x512xf32> to vector<8x128xf32>
    %438 = arith.negf %437 : vector<8x128xf32>
    %439 = math.exp %438 : vector<8x128xf32>
    %cst_153 = arith.constant 1.000000e+00 : f32
    %440 = vector.broadcast %cst_153 : f32 to vector<8x128xf32>
    %441 = arith.addf %440, %439 : vector<8x128xf32>
    %442 = arith.divf %440, %441 : vector<8x128xf32>
    %443 = vector.extract_strided_slice %436 {offsets = [0, 128], sizes = [8, 128], strides = [1, 1]} : vector<8x512xf32> to vector<8x128xf32>
    %444 = arith.negf %443 : vector<8x128xf32>
    %445 = math.exp %444 : vector<8x128xf32>
    %cst_154 = arith.constant 1.000000e+00 : f32
    %446 = vector.broadcast %cst_154 : f32 to vector<8x128xf32>
    %447 = arith.addf %446, %445 : vector<8x128xf32>
    %448 = arith.divf %446, %447 : vector<8x128xf32>
    %449 = vector.extract_strided_slice %436 {offsets = [0, 256], sizes = [8, 128], strides = [1, 1]} : vector<8x512xf32> to vector<8x128xf32>
    %450 = math.tanh %449 : vector<8x128xf32>
    %451 = vector.extract_strided_slice %436 {offsets = [0, 384], sizes = [8, 128], strides = [1, 1]} : vector<8x512xf32> to vector<8x128xf32>
    %452 = arith.negf %451 : vector<8x128xf32>
    %453 = math.exp %452 : vector<8x128xf32>
    %cst_155 = arith.constant 1.000000e+00 : f32
    %454 = vector.broadcast %cst_155 : f32 to vector<8x128xf32>
    %455 = arith.addf %454, %453 : vector<8x128xf32>
    %456 = arith.divf %454, %455 : vector<8x128xf32>
    %457 = arith.mulf %448, %429 : vector<8x128xf32>
    %458 = arith.mulf %442, %450 : vector<8x128xf32>
    %459 = arith.addf %457, %458 : vector<8x128xf32>
    %460 = math.tanh %459 : vector<8x128xf32>
    %461 = arith.mulf %456, %460 : vector<8x128xf32>
    %c48_156 = arith.constant 48 : index
    %c0_157 = arith.constant 0 : index
    %462 = vector.load %arg12[%c48_156, %c0_157] : memref<64x512xf32, #tpu.memory_space<vmem>>, vector<8x512xf32>
    %463 = arith.truncf %461 : vector<8x128xf32> to vector<8x128xbf16>
    %c0_158 = arith.constant 0 : index
    %c0_159 = arith.constant 0 : index
    %464 = vector.load %arg7[%c0_158, %c0_159] : memref<128x512xbf16, #tpu.memory_space<vmem>>, vector<128x512xbf16>
    %cst_160 = arith.constant dense<0.000000e+00> : vector<8x512xf32>
    %465 = tpu.matmul %463, %464, %cst_160 {dimension_numbers = #tpu.dot_dimension_numbers<[1], [0], [0], [1], [0, 0, 1, 1], [], []>} : vector<8x128xbf16>, vector<128x512xbf16>, vector<8x512xf32> -> vector<8x512xf32>
    %466 = arith.addf %462, %465 : vector<8x512xf32>
    %467 = vector.extract_strided_slice %466 {offsets = [0, 0], sizes = [8, 128], strides = [1, 1]} : vector<8x512xf32> to vector<8x128xf32>
    %468 = arith.negf %467 : vector<8x128xf32>
    %469 = math.exp %468 : vector<8x128xf32>
    %cst_161 = arith.constant 1.000000e+00 : f32
    %470 = vector.broadcast %cst_161 : f32 to vector<8x128xf32>
    %471 = arith.addf %470, %469 : vector<8x128xf32>
    %472 = arith.divf %470, %471 : vector<8x128xf32>
    %473 = vector.extract_strided_slice %466 {offsets = [0, 128], sizes = [8, 128], strides = [1, 1]} : vector<8x512xf32> to vector<8x128xf32>
    %474 = arith.negf %473 : vector<8x128xf32>
    %475 = math.exp %474 : vector<8x128xf32>
    %cst_162 = arith.constant 1.000000e+00 : f32
    %476 = vector.broadcast %cst_162 : f32 to vector<8x128xf32>
    %477 = arith.addf %476, %475 : vector<8x128xf32>
    %478 = arith.divf %476, %477 : vector<8x128xf32>
    %479 = vector.extract_strided_slice %466 {offsets = [0, 256], sizes = [8, 128], strides = [1, 1]} : vector<8x512xf32> to vector<8x128xf32>
    %480 = math.tanh %479 : vector<8x128xf32>
    %481 = vector.extract_strided_slice %466 {offsets = [0, 384], sizes = [8, 128], strides = [1, 1]} : vector<8x512xf32> to vector<8x128xf32>
    %482 = arith.negf %481 : vector<8x128xf32>
    %483 = math.exp %482 : vector<8x128xf32>
    %cst_163 = arith.constant 1.000000e+00 : f32
    %484 = vector.broadcast %cst_163 : f32 to vector<8x128xf32>
    %485 = arith.addf %484, %483 : vector<8x128xf32>
    %486 = arith.divf %484, %485 : vector<8x128xf32>
    %487 = arith.mulf %478, %459 : vector<8x128xf32>
    %488 = arith.mulf %472, %480 : vector<8x128xf32>
    %489 = arith.addf %487, %488 : vector<8x128xf32>
    %490 = math.tanh %489 : vector<8x128xf32>
    %491 = arith.mulf %486, %490 : vector<8x128xf32>
    %c56_164 = arith.constant 56 : index
    %c0_165 = arith.constant 0 : index
    %492 = vector.load %arg12[%c56_164, %c0_165] : memref<64x512xf32, #tpu.memory_space<vmem>>, vector<8x512xf32>
    %493 = arith.truncf %491 : vector<8x128xf32> to vector<8x128xbf16>
    %c0_166 = arith.constant 0 : index
    %c0_167 = arith.constant 0 : index
    %494 = vector.load %arg7[%c0_166, %c0_167] : memref<128x512xbf16, #tpu.memory_space<vmem>>, vector<128x512xbf16>
    %cst_168 = arith.constant dense<0.000000e+00> : vector<8x512xf32>
    %495 = tpu.matmul %493, %494, %cst_168 {dimension_numbers = #tpu.dot_dimension_numbers<[1], [0], [0], [1], [0, 0, 1, 1], [], []>} : vector<8x128xbf16>, vector<128x512xbf16>, vector<8x512xf32> -> vector<8x512xf32>
    %496 = arith.addf %492, %495 : vector<8x512xf32>
    %497 = vector.extract_strided_slice %496 {offsets = [0, 0], sizes = [8, 128], strides = [1, 1]} : vector<8x512xf32> to vector<8x128xf32>
    %498 = arith.negf %497 : vector<8x128xf32>
    %499 = math.exp %498 : vector<8x128xf32>
    %cst_169 = arith.constant 1.000000e+00 : f32
    %500 = vector.broadcast %cst_169 : f32 to vector<8x128xf32>
    %501 = arith.addf %500, %499 : vector<8x128xf32>
    %502 = arith.divf %500, %501 : vector<8x128xf32>
    %503 = vector.extract_strided_slice %496 {offsets = [0, 128], sizes = [8, 128], strides = [1, 1]} : vector<8x512xf32> to vector<8x128xf32>
    %504 = arith.negf %503 : vector<8x128xf32>
    %505 = math.exp %504 : vector<8x128xf32>
    %cst_170 = arith.constant 1.000000e+00 : f32
    %506 = vector.broadcast %cst_170 : f32 to vector<8x128xf32>
    %507 = arith.addf %506, %505 : vector<8x128xf32>
    %508 = arith.divf %506, %507 : vector<8x128xf32>
    %509 = vector.extract_strided_slice %496 {offsets = [0, 256], sizes = [8, 128], strides = [1, 1]} : vector<8x512xf32> to vector<8x128xf32>
    %510 = math.tanh %509 : vector<8x128xf32>
    %511 = vector.extract_strided_slice %496 {offsets = [0, 384], sizes = [8, 128], strides = [1, 1]} : vector<8x512xf32> to vector<8x128xf32>
    %512 = arith.negf %511 : vector<8x128xf32>
    %513 = math.exp %512 : vector<8x128xf32>
    %cst_171 = arith.constant 1.000000e+00 : f32
    %514 = vector.broadcast %cst_171 : f32 to vector<8x128xf32>
    %515 = arith.addf %514, %513 : vector<8x128xf32>
    %516 = arith.divf %514, %515 : vector<8x128xf32>
    %517 = arith.mulf %508, %489 : vector<8x128xf32>
    %518 = arith.mulf %502, %510 : vector<8x128xf32>
    %519 = arith.addf %517, %518 : vector<8x128xf32>
    %520 = math.tanh %519 : vector<8x128xf32>
    %521 = arith.mulf %516, %520 : vector<8x128xf32>
    %c1_172 = arith.constant 1 : index
    %c0_173 = arith.constant 0 : index
    %c0_174 = arith.constant 0 : index
    %522 = vector.load %arg15[%c1_172, %c0_173, %c0_174] : memref<2x8x128xf32, #tpu.memory_space<vmem>>, vector<1x8x128xf32>
    %523 = vector.shape_cast %522 : vector<1x8x128xf32> to vector<8x128xf32>
    %524 = vector.shape_cast %521 : vector<8x128xf32> to vector<1x8x128xf32>
    tpu.vector_store %arg15[%c1_172, %c0_173, %c0_174], %524 {strides = array<i32>} : memref<2x8x128xf32, #tpu.memory_space<vmem>>, vector<1x8x128xf32>,
    %c1_175 = arith.constant 1 : index
    %c0_176 = arith.constant 0 : index
    %c0_177 = arith.constant 0 : index
    %525 = vector.load %arg16[%c1_175, %c0_176, %c0_177] : memref<2x8x128xf32, #tpu.memory_space<vmem>>, vector<1x8x128xf32>
    %526 = vector.shape_cast %525 : vector<1x8x128xf32> to vector<8x128xf32>
    %527 = vector.shape_cast %519 : vector<8x128xf32> to vector<1x8x128xf32>
    tpu.vector_store %arg16[%c1_175, %c0_176, %c0_177], %527 {strides = array<i32>} : memref<2x8x128xf32, #tpu.memory_space<vmem>>, vector<1x8x128xf32>,
    %c0_i32_178 = arith.constant 0 : i32
    %528 = arith.cmpi eq, %arg1, %c0_i32_178 : i32
    %529 = arith.extui %528 : i1 to i32
    %c0_i32_179 = arith.constant 0 : i32
    %530 = arith.cmpi ne, %529, %c0_i32_179 : i32
    scf.if %530 {
      %c1_180 = arith.constant 1 : index
      %c0_181 = arith.constant 0 : index
      %c0_182 = arith.constant 0 : index
      %531 = vector.load %arg15[%c1_180, %c0_181, %c0_182] : memref<2x8x128xf32, #tpu.memory_space<vmem>>, vector<1x8x128xf32>
      %532 = vector.shape_cast %531 : vector<1x8x128xf32> to vector<8x128xf32>
      %533 = arith.truncf %532 : vector<8x128xf32> to vector<8x128xbf16>
      %c0_183 = arith.constant 0 : index
      %c0_184 = arith.constant 0 : index
      %534 = vector.load %arg9[%c0_183, %c0_184] : memref<128x1xbf16, #tpu.memory_space<vmem>>, vector<128x1xbf16>
      %cst_185 = arith.constant dense<0.000000e+00> : vector<8x1xf32>
      %535 = tpu.matmul %533, %534, %cst_185 {dimension_numbers = #tpu.dot_dimension_numbers<[1], [0], [0], [1], [0, 0, 1, 1], [], []>} : vector<8x128xbf16>, vector<128x1xbf16>, vector<8x1xf32> -> vector<8x1xf32>
      %c0_186 = arith.constant 0 : index
      %c0_187 = arith.constant 0 : index
      %536 = vector.load %arg10[%c0_186, %c0_187] : memref<1x1xf32, #tpu.memory_space<vmem>>, vector<1x1xf32>
      %537 = vector.broadcast %536 : vector<1x1xf32> to vector<8x1xf32>
      %538 = arith.addf %535, %537 : vector<8x1xf32>
      %c0_188 = arith.constant 0 : index
      %c0_189 = arith.constant 0 : index
      %c0_190 = arith.constant 0 : index
      %539 = vector.load %arg11[%c0_188, %c0_189, %c0_190] : memref<1x8x1xf32, #tpu.memory_space<vmem>>, vector<1x8x1xf32>
      %540 = vector.shape_cast %539 : vector<1x8x1xf32> to vector<8x1xf32>
      %541 = vector.shape_cast %538 : vector<8x1xf32> to vector<1x8x1xf32>
      tpu.vector_store %arg11[%c0_188, %c0_189, %c0_190], %541 {strides = array<i32>} : memref<1x8x1xf32, #tpu.memory_space<vmem>>, vector<1x8x1xf32>,
    } else {
    }
    return
  }
  func.func @transform_0(%arg0: i32, %arg1: i32) -> (i32, i32, i32) {
    %c0_i32 = arith.constant 0 : i32
    %c0_i32_0 = arith.constant 0 : i32
    return %arg0, %arg1, %c0_i32 : i32, i32, i32
  }
  func.func @transform_1(%arg0: i32, %arg1: i32) -> (i32, i32) {
    %c0_i32 = arith.constant 0 : i32
    %c0_i32_0 = arith.constant 0 : i32
    %c0_i32_1 = arith.constant 0 : i32
    return %c0_i32, %c0_i32_0 : i32, i32
  }
  func.func @transform_2(%arg0: i32, %arg1: i32) -> (i32, i32) {
    %c0_i32 = arith.constant 0 : i32
    %c0_i32_0 = arith.constant 0 : i32
    %c0_i32_1 = arith.constant 0 : i32
    return %c0_i32, %c0_i32_0 : i32, i32
  }
  func.func @transform_3(%arg0: i32, %arg1: i32) -> (i32, i32) {
    %c0_i32 = arith.constant 0 : i32
    %c0_i32_0 = arith.constant 0 : i32
    %c0_i32_1 = arith.constant 0 : i32
    return %c0_i32, %c0_i32_0 : i32, i32
  }
  func.func @transform_4(%arg0: i32, %arg1: i32) -> (i32, i32) {
    %c0_i32 = arith.constant 0 : i32
    %c0_i32_0 = arith.constant 0 : i32
    %c0_i32_1 = arith.constant 0 : i32
    return %c0_i32, %c0_i32_0 : i32, i32
  }
  func.func @transform_5(%arg0: i32, %arg1: i32) -> (i32, i32) {
    %c0_i32 = arith.constant 0 : i32
    %c0_i32_0 = arith.constant 0 : i32
    %c0_i32_1 = arith.constant 0 : i32
    return %c0_i32, %c0_i32_0 : i32, i32
  }
  func.func @transform_6(%arg0: i32, %arg1: i32) -> (i32, i32) {
    %c0_i32 = arith.constant 0 : i32
    %c0_i32_0 = arith.constant 0 : i32
    %c0_i32_1 = arith.constant 0 : i32
    return %c0_i32, %c0_i32_0 : i32, i32
  }
  func.func @transform_7(%arg0: i32, %arg1: i32) -> (i32, i32) {
    %c0_i32 = arith.constant 0 : i32
    %c0_i32_0 = arith.constant 0 : i32
    %c0_i32_1 = arith.constant 0 : i32
    return %c0_i32, %c0_i32_0 : i32, i32
  }
  func.func @transform_8(%arg0: i32, %arg1: i32) -> (i32, i32) {
    %c0_i32 = arith.constant 0 : i32
    %c0_i32_0 = arith.constant 0 : i32
    %c0_i32_1 = arith.constant 0 : i32
    return %c0_i32, %c0_i32_0 : i32, i32
  }
  func.func @transform_9(%arg0: i32, %arg1: i32) -> (i32, i32, i32) {
    %c0_i32 = arith.constant 0 : i32
    %c0_i32_0 = arith.constant 0 : i32
    %c0_i32_1 = arith.constant 0 : i32
    return %arg0, %c0_i32, %c0_i32_0 : i32, i32, i32
  }
}

</mosaic_0001>

<llo_original>
// kernel: a_call__.1
$region0: #{a_call__.1}
  #allocation0 [shape = 'u32[]', space=smem, size = 0x4, offset = 0x4, fixed_abs, tag = 'smem constant byte address 0x4 - core index']
  #allocation1 [shape = 'u32[144,128]{1,0:T(1,128)}', space=vmem, size = 0x12000, scoped, tag = 'internal scratch']
  #allocation2 [shape = 'f32[64,512]{1,0:T(8,128)}', space=vmem, size = 0x20000, scoped, tag = 'scratch operand']
  #allocation3 [shape = 'f32[64,128]{1,0:T(8,128)}', space=vmem, size = 0x8000, scoped, tag = 'scratch operand']
  #allocation4 [shape = 'f32[64,128]{1,0:T(8,128)}', space=vmem, size = 0x8000, scoped, tag = 'scratch operand']
  #allocation5 [shape = 'f32[2,8,128]{2,1,0:T(8,128)}', space=vmem, size = 0x2000, scoped, tag = 'scratch operand']
  #allocation6 [shape = 'f32[2,8,128]{2,1,0:T(8,128)}', space=vmem, size = 0x2000, scoped, tag = 'scratch operand']
  #allocation7 [shape = 'f32[1,1]{1,0:T(1,128)S(1)}', space=vmem, size = 0x200, scoped, tag = 'scoped memory for a_call__.1']
  %s0 = inlined_call_operand.vmem [shape: f32[1,64,4], index: 0, kind: input, shape index: {}]
  %s1 = inlined_call_operand.vmem [shape: bf16[4,512], index: 1, kind: input, shape index: {}]
  %s2 = inlined_call_operand.vmem [shape: bf16[128,512], index: 2, kind: input, shape index: {}]
  %s3 = inlined_call_operand.vmem [shape: f32[1,512], index: 3, kind: input, shape index: {}]
  %s4 = inlined_call_operand.vmem [shape: bf16[128,512], index: 4, kind: input, shape index: {}]
  %s5 = inlined_call_operand.vmem [shape: bf16[128,512], index: 5, kind: input, shape index: {}]
  %s6 = inlined_call_operand.vmem [shape: f32[1,512], index: 6, kind: input, shape index: {}]
  %s7 = inlined_call_operand.vmem [shape: bf16[128,1], index: 7, kind: input, shape index: {}]
  %s8 = inlined_call_operand.<no memory space> [shape: f32[1,1], index: 8, kind: input, shape index: {}]
  %s9 = inlined_call_operand.vmem [shape: f32[1,8,1], index: 9, kind: output, shape index: {}]
  %s10 = sld [smem:[#allocation0]]
  $region54: #{a_call__.1} parent=0
    _
  %s12 = ssub.s32 1, %s10
  %s13 = scalar_select 0, %s12, %s10
  %v14 = vstv %s8
  %15 = vst [vmem:[#allocation7] sm:$0x1] %v14
  // Predicated region
  $region2: #{a_call__.1} parent=0 // pred_check
    _
  $region3: #{a_call__.1} parent=0 // pred_check_branch
    %17 = sbr.rel (0) target = $region5
  $region4: #{a_call__.1} parent=0 // pred_region
    _
  $region5: #{a_call__.1} parent=0 // pred_fallthru
    _
  // Predicated region
  $region6: #{a_call__.1} parent=0 // pred_check
    _
  $region7: #{a_call__.1} parent=0 // pred_check_branch
    %19 = sbr.rel (0) target = $region9
  $region8: #{a_call__.1} parent=0 // pred_region
    _
  $region9: #{a_call__.1} parent=0 // pred_fallthru
    _
  // Predicated region
  $region10: #{a_call__.1} parent=0 // pred_check
    _
  $region11: #{a_call__.1} parent=0 // pred_check_branch
    %21 = sbr.rel (0) target = $region13
  $region12: #{a_call__.1} parent=0 // pred_region
    _
  $region13: #{a_call__.1} parent=0 // pred_fallthru
    _
  // Predicated region
  $region14: #{a_call__.1} parent=0 // pred_check
    _
  $region15: #{a_call__.1} parent=0 // pred_check_branch
    %23 = sbr.rel (0) target = $region17
  $region16: #{a_call__.1} parent=0 // pred_region
    _
  $region17: #{a_call__.1} parent=0 // pred_fallthru
    _
  // Predicated region
  $region18: #{a_call__.1} parent=0 // pred_check
    _
  $region19: #{a_call__.1} parent=0 // pred_check_branch
    %25 = sbr.rel (0) target = $region21
  $region20: #{a_call__.1} parent=0 // pred_region
    _
  $region21: #{a_call__.1} parent=0 // pred_fallthru
    _
  // Predicated region
  $region22: #{a_call__.1} parent=0 // pred_check
    _
  $region23: #{a_call__.1} parent=0 // pred_check_branch
    %27 = sbr.rel (0) target = $region25
  $region24: #{a_call__.1} parent=0 // pred_region
    _
  $region25: #{a_call__.1} parent=0 // pred_fallthru
    _
  // Predicated region
  $region26: #{a_call__.1} parent=0 // pred_check
    _
  $region27: #{a_call__.1} parent=0 // pred_check_branch
    %29 = sbr.rel (0) target = $region29
  $region28: #{a_call__.1} parent=0 // pred_region
    _
  $region29: #{a_call__.1} parent=0 // pred_fallthru
    _
  // Predicated region
  $region30: #{a_call__.1} parent=0 // pred_check
    _
  $region31: #{a_call__.1} parent=0 // pred_check_branch
    %31 = sbr.rel (0) target = $region33
  $region32: #{a_call__.1} parent=0 // pred_region
    _
  $region33: #{a_call__.1} parent=0 // pred_fallthru
    _
  // Predicated region
  $region34: #{a_call__.1} parent=0 // pred_check
    _
  $region35: #{a_call__.1} parent=0 // pred_check_branch
    %33 = sbr.rel (0) target = $region37
  $region36: #{a_call__.1} parent=0 // pred_region
    _
  $region37: #{a_call__.1} parent=0 // pred_fallthru
    _
  %p35 = scmp.eq.s32.totalorder 0, 0
  // Predicated region
  $region38: #{a_call__.1} parent=0 // pred_check
    %p36 = pneg %p35
  $region39: #{a_call__.1} parent=0 // pred_check_branch
    %38 = sbr.rel (%p36) target = $region41
  $region40: #{a_call__.1} parent=0 // pred_region
    %39 = vst [vmem:[#allocation5] sm:$0xff] 0.0
    %40 = vst [vmem:[#allocation5 + $0x8] sm:$0xff] 0.0
    %41 = vst [vmem:[#allocation6] sm:$0xff] 0.0
    %42 = vst [vmem:[#allocation6 + $0x8] sm:$0xff] 0.0
  $region41: #{a_call__.1} parent=0 // pred_fallthru
    _
  %v43 = vld [vmem:[%s0] sm:$0xff]
  %v44 = vld [vmem:[%s0 + $0x8] sm:$0xff]
  %v45 = vld [vmem:[%s0 + $0x10] sm:$0xff]
  %v46 = vld [vmem:[%s0 + $0x18] sm:$0xff]
  %v47 = vld [vmem:[%s0 + $0x20] sm:$0xff]
  %v48 = vld [vmem:[%s0 + $0x28] sm:$0xff]
  %v49 = vld [vmem:[%s0 + $0x30] sm:$0xff]
  %v50 = vld [vmem:[%s0 + $0x38] sm:$0xff]
  %v51 = vpack.c.bf16 %v44, %v43
  %v52 = vpack.c.bf16 %v46, %v45
  %v53 = vpack.c.bf16 %v48, %v47
  %v54 = vpack.c.bf16 %v50, %v49
  %v55 = vld [vmem:[%s1] sm:$0xff]
  %v56 = vld [vmem:[%s3] sm:$0xf]
  %v58 = vlaneseq
  %v59 = vshrl.u32 %v58, 7
  %v60 = vsub.s32 0, %v59
  %v61 = vrot.slane %v56, %v60
  %v62 = vlaneseq
  %v63 = vshrl.u32 %v62, 7
  %v64 = vsub.s32 1, %v63
  %v65 = vrot.slane %v56, %v64
  %v66 = vlaneseq
  %v67 = vshrl.u32 %v66, 7
  %v68 = vsub.s32 2, %v67
  %v69 = vrot.slane %v56, %v68
  %v70 = vlaneseq
  %v71 = vshrl.u32 %v70, 7
  %v72 = vsub.s32 3, %v71
  %v73 = vrot.slane %v56, %v72
  %v79 = vcombine.high %v55, %v55
  %v81 = vunpack.c.l.s4 1983009808
  %v82 = vunpack.c.0.s8 %v81
  %v83 = vlaneseq
  %v84 = vshrl.u32 %v83, 7
  %v85 = vsub.s32 %v82, %v84
  %v86 = vrot.slane %v55, %v85
  %v88 = vunpack.c.l.s4 1983009808
  %v89 = vunpack.c.0.s8 %v88
  %v90 = vlaneseq
  %v91 = vshrl.u32 %v90, 7
  %v92 = vsub.s32 %v89, %v91
  %v93 = vrot.slane %v79, %v92
  %v94 = vcombine.high %v86, %v86
  %v95 = vcombine.high %v93, %v93
  %vm96 = vcmask 31744
  %v98 = vsel %vm96, %v51, 0
  %v101 = vsel %vm96, %v52, 0
  %v104 = vsel %vm96, %v53, 0
  %v107 = vsel %vm96, %v54, 0
  %vm109 = vcmask 1041408
  %v111 = vsel %vm109, %v86, 0
  %v114 = vsel %vm109, %v94, 0
  %v117 = vsel %vm109, %v93, 0
  %v120 = vsel %vm109, %v95, 0
  %122 = vmatprep.subr.bf16.mxu0 %v114
  %123 = vmatpush1.bf16.msra.mxu0 %v111
  %124 = vmatprep.subr.bf16.mxu0 0
  %125 = vmatpush1.bf16.msra.mxu0 0
  %126 = vmatprep.subr.bf16.mxu0 0
  %127 = vmatpush1.bf16.msra.mxu0 0
  %128 = vmatprep.subr.bf16.mxu0 0
  %129 = vmatpush1.bf16.msra.mxu0 0
  %130 = vmatprep.subr.bf16.mxu0 0
  %131 = vmatpush1.bf16.msra.mxu0 0
  %132 = vmatprep.subr.bf16.mxu0 0
  %133 = vmatpush1.bf16.msra.mxu0 0
  %134 = vmatprep.subr.bf16.mxu0 0
  %135 = vmatpush1.bf16.msra.mxu0 0
  %136 = vmatprep.subr.bf16.mxu0 0
  %137 = vmatpush1.bf16.msra.mxu0 0
  %138 = vmatprep.subr.bf16.mxu0 0
  %139 = vmatpush1.bf16.msra.mxu0 0
  %140 = vmatprep.subr.bf16.mxu0 0
  %141 = vmatpush1.bf16.msra.mxu0 0
  %142 = vmatprep.subr.bf16.mxu0 0
  %143 = vmatpush1.bf16.msra.mxu0 0
  %144 = vmatprep.subr.bf16.mxu0 0
  %145 = vmatpush1.bf16.msra.mxu0 0
  %146 = vmatprep.subr.bf16.mxu0 0
  %147 = vmatpush1.bf16.msra.mxu0 0
  %148 = vmatprep.subr.bf16.mxu0 0
  %149 = vmatpush1.bf16.msra.mxu0 0
  %150 = vmatprep.subr.bf16.mxu0 0
  %151 = vmatpush1.bf16.msra.mxu0 0
  %152 = vmatprep.subr.bf16.mxu0 0
  %153 = vmatpush1.bf16.msra.mxu0 0
  %154 = vmatprep.mubr.bf16.mxu0 0
  %155 = vmatmul.mubr.bf16.gmra.mrb[0].mxu0 %v98
  %v156 = vpop.f32.mrb[0].mxu0
  %v157 = vadd.f32 %v61, %v156
  %v158 = vpop.f32.mrb[0].mxu0
  %v159 = vadd.f32 %v65, %v158
  %v160 = vpop.f32.mrb[0].mxu0
  %v161 = vadd.f32 %v61, %v160
  %v162 = vpop.f32.mrb[0].mxu0
  %v163 = vadd.f32 %v65, %v162
  %164 = vmatprep.mubr.bf16.mxu0 0
  %165 = vmatmul.mubr.bf16.gmra.mrb[0].mxu0 %v101
  %v166 = vpop.f32.mrb[0].mxu0
  %v167 = vadd.f32 %v61, %v166
  %v168 = vpop.f32.mrb[0].mxu0
  %v169 = vadd.f32 %v65, %v168
  %v170 = vpop.f32.mrb[0].mxu0
  %v171 = vadd.f32 %v61, %v170
  %v172 = vpop.f32.mrb[0].mxu0
  %v173 = vadd.f32 %v65, %v172
  %174 = vmatprep.mubr.bf16.mxu0 0
  %175 = vmatmul.mubr.bf16.gmra.mrb[0].mxu0 %v104
  %v176 = vpop.f32.mrb[0].mxu0
  %v177 = vadd.f32 %v61, %v176
  %v178 = vpop.f32.mrb[0].mxu0
  %v179 = vadd.f32 %v65, %v178
  %v180 = vpop.f32.mrb[0].mxu0
  %v181 = vadd.f32 %v61, %v180
  %v182 = vpop.f32.mrb[0].mxu0
  %v183 = vadd.f32 %v65, %v182
  %184 = vmatprep.mubr.bf16.mxu0 0
  %185 = vmatmul.mubr.bf16.gmra.mrb[0].mxu0 %v107
  %v186 = vpop.f32.mrb[0].mxu0
  %v187 = vadd.f32 %v61, %v186
  %v188 = vpop.f32.mrb[0].mxu0
  %v189 = vadd.f32 %v65, %v188
  %v190 = vpop.f32.mrb[0].mxu0
  %v191 = vadd.f32 %v61, %v190
  %v192 = vpop.f32.mrb[0].mxu0
  %v193 = vadd.f32 %v65, %v192
  %194 = vdwg.mxu0
  %195 = vmatprep.subr.bf16.mxu0 %v120
  %196 = vmatpush1.bf16.msra.mxu0 %v117
  %197 = vmatprep.subr.bf16.mxu0 0
  %198 = vmatpush1.bf16.msra.mxu0 0
  %199 = vmatprep.subr.bf16.mxu0 0
  %200 = vmatpush1.bf16.msra.mxu0 0
  %201 = vmatprep.subr.bf16.mxu0 0
  %202 = vmatpush1.bf16.msra.mxu0 0
  %203 = vmatprep.subr.bf16.mxu0 0
  %204 = vmatpush1.bf16.msra.mxu0 0
  %205 = vmatprep.subr.bf16.mxu0 0
  %206 = vmatpush1.bf16.msra.mxu0 0
  %207 = vmatprep.subr.bf16.mxu0 0
  %208 = vmatpush1.bf16.msra.mxu0 0
  %209 = vmatprep.subr.bf16.mxu0 0
  %210 = vmatpush1.bf16.msra.mxu0 0
  %211 = vmatprep.subr.bf16.mxu0 0
  %212 = vmatpush1.bf16.msra.mxu0 0
  %213 = vmatprep.subr.bf16.mxu0 0
  %214 = vmatpush1.bf16.msra.mxu0 0
  %215 = vmatprep.subr.bf16.mxu0 0
  %216 = vmatpush1.bf16.msra.mxu0 0
  %217 = vmatprep.subr.bf16.mxu0 0
  %218 = vmatpush1.bf16.msra.mxu0 0
  %219 = vmatprep.subr.bf16.mxu0 0
  %220 = vmatpush1.bf16.msra.mxu0 0
  %221 = vmatprep.subr.bf16.mxu0 0
  %222 = vmatpush1.bf16.msra.mxu0 0
  %223 = vmatprep.subr.bf16.mxu0 0
  %224 = vmatpush1.bf16.msra.mxu0 0
  %225 = vmatprep.subr.bf16.mxu0 0
  %226 = vmatpush1.bf16.msra.mxu0 0
  %227 = vmatprep.mubr.bf16.mxu0 0
  %228 = vmatmul.mubr.bf16.gmra.mrb[0].mxu0 %v98
  %v229 = vpop.f32.mrb[0].mxu0
  %v230 = vadd.f32 %v69, %v229
  %v231 = vpop.f32.mrb[0].mxu0
  %v232 = vadd.f32 %v73, %v231
  %v233 = vpop.f32.mrb[0].mxu0
  %v234 = vadd.f32 %v69, %v233
  %v235 = vpop.f32.mrb[0].mxu0
  %v236 = vadd.f32 %v73, %v235
  %237 = vmatprep.mubr.bf16.mxu0 0
  %238 = vmatmul.mubr.bf16.gmra.mrb[0].mxu0 %v101
  %v239 = vpop.f32.mrb[0].mxu0
  %v240 = vadd.f32 %v69, %v239
  %v241 = vpop.f32.mrb[0].mxu0
  %v242 = vadd.f32 %v73, %v241
  %v243 = vpop.f32.mrb[0].mxu0
  %v244 = vadd.f32 %v69, %v243
  %v245 = vpop.f32.mrb[0].mxu0
  %v246 = vadd.f32 %v73, %v245
  %247 = vmatprep.mubr.bf16.mxu0 0
  %248 = vmatmul.mubr.bf16.gmra.mrb[0].mxu0 %v104
  %v249 = vpop.f32.mrb[0].mxu0
  %v250 = vadd.f32 %v69, %v249
  %v251 = vpop.f32.mrb[0].mxu0
  %v252 = vadd.f32 %v73, %v251
  %v253 = vpop.f32.mrb[0].mxu0
  %v254 = vadd.f32 %v69, %v253
  %v255 = vpop.f32.mrb[0].mxu0
  %v256 = vadd.f32 %v73, %v255
  %257 = vmatprep.mubr.bf16.mxu0 0
  %258 = vmatmul.mubr.bf16.gmra.mrb[0].mxu0 %v107
  %v259 = vpop.f32.mrb[0].mxu0
  %v260 = vadd.f32 %v69, %v259
  %v261 = vpop.f32.mrb[0].mxu0
  %v262 = vadd.f32 %v73, %v261
  %v263 = vpop.f32.mrb[0].mxu0
  %v264 = vadd.f32 %v69, %v263
  %v265 = vpop.f32.mrb[0].mxu0
  %v266 = vadd.f32 %v73, %v265
  %267 = vdwg.mxu0
  %268 = vst [vmem:[#allocation2] sm:$0xff] %v157
  %269 = vst [vmem:[#allocation2 + $0x8] sm:$0xff] %v159
  %270 = vst [vmem:[#allocation2 + $0x10] sm:$0xff] %v230
  %271 = vst [vmem:[#allocation2 + $0x18] sm:$0xff] %v232
  %272 = vst [vmem:[#allocation2 + $0x20] sm:$0xff] %v161
  %273 = vst [vmem:[#allocation2 + $0x28] sm:$0xff] %v163
  %274 = vst [vmem:[#allocation2 + $0x30] sm:$0xff] %v234
  %275 = vst [vmem:[#allocation2 + $0x38] sm:$0xff] %v236
  %276 = vst [vmem:[#allocation2 + $0x40] sm:$0xff] %v167
  %277 = vst [vmem:[#allocation2 + $0x48] sm:$0xff] %v169
  %278 = vst [vmem:[#allocation2 + $0x50] sm:$0xff] %v240
  %279 = vst [vmem:[#allocation2 + $0x58] sm:$0xff] %v242
  %280 = vst [vmem:[#allocation2 + $0x60] sm:$0xff] %v171
  %281 = vst [vmem:[#allocation2 + $0x68] sm:$0xff] %v173
  %282 = vst [vmem:[#allocation2 + $0x70] sm:$0xff] %v244
  %283 = vst [vmem:[#allocation2 + $0x78] sm:$0xff] %v246
  %284 = vst [vmem:[#allocation2 + $0x80] sm:$0xff] %v177
  %285 = vst [vmem:[#allocation2 + $0x88] sm:$0xff] %v179
  %286 = vst [vmem:[#allocation2 + $0x90] sm:$0xff] %v250
  %287 = vst [vmem:[#allocation2 + $0x98] sm:$0xff] %v252
  %288 = vst [vmem:[#allocation2 + $0xa0] sm:$0xff] %v181
  %289 = vst [vmem:[#allocation2 + $0xa8] sm:$0xff] %v183
  %290 = vst [vmem:[#allocation2 + $0xb0] sm:$0xff] %v254
  %291 = vst [vmem:[#allocation2 + $0xb8] sm:$0xff] %v256
  %292 = vst [vmem:[#allocation2 + $0xc0] sm:$0xff] %v187
  %293 = vst [vmem:[#allocation2 + $0xc8] sm:$0xff] %v189
  %294 = vst [vmem:[#allocation2 + $0xd0] sm:$0xff] %v260
  %295 = vst [vmem:[#allocation2 + $0xd8] sm:$0xff] %v262
  %296 = vst [vmem:[#allocation2 + $0xe0] sm:$0xff] %v191
  %297 = vst [vmem:[#allocation2 + $0xe8] sm:$0xff] %v193
  %298 = vst [vmem:[#allocation2 + $0xf0] sm:$0xff] %v264
  %299 = vst [vmem:[#allocation2 + $0xf8] sm:$0xff] %v266
  %v300 = vld [vmem:[#allocation5] sm:$0xff]
  %v301 = vld [vmem:[#allocation6] sm:$0xff]
  %v302 = vld [vmem:[#allocation2] sm:$0xff]
  %v303 = vld [vmem:[#allocation2 + $0x8] sm:$0xff]
  %v304 = vld [vmem:[#allocation2 + $0x10] sm:$0xff]
  %v305 = vld [vmem:[#allocation2 + $0x18] sm:$0xff]
  %v306 = vpack.c.bf16 %v300, %v300
  %v307 = vld [vmem:[%s2] sm:$0xff]
  %v308 = vld [vmem:[%s2 + $0x8] sm:$0xff]
  %v309 = vld [vmem:[%s2 + $0x10] sm:$0xff]
  %v310 = vld [vmem:[%s2 + $0x18] sm:$0xff]
  %v311 = vld [vmem:[%s2 + $0x20] sm:$0xff]
  %v312 = vld [vmem:[%s2 + $0x28] sm:$0xff]
  %v313 = vld [vmem:[%s2 + $0x30] sm:$0xff]
  %v314 = vld [vmem:[%s2 + $0x38] sm:$0xff]
  %v315 = vld [vmem:[%s2 + $0x40] sm:$0xff]
  %v316 = vld [vmem:[%s2 + $0x48] sm:$0xff]
  %v317 = vld [vmem:[%s2 + $0x50] sm:$0xff]
  %v318 = vld [vmem:[%s2 + $0x58] sm:$0xff]
  %v319 = vld [vmem:[%s2 + $0x60] sm:$0xff]
  %v320 = vld [vmem:[%s2 + $0x68] sm:$0xff]
  %v321 = vld [vmem:[%s2 + $0x70] sm:$0xff]
  %v322 = vld [vmem:[%s2 + $0x78] sm:$0xff]
  %v323 = vld [vmem:[%s2 + $0x80] sm:$0xff]
  %v324 = vld [vmem:[%s2 + $0x88] sm:$0xff]
  %v325 = vld [vmem:[%s2 + $0x90] sm:$0xff]
  %v326 = vld [vmem:[%s2 + $0x98] sm:$0xff]
  %v327 = vld [vmem:[%s2 + $0xa0] sm:$0xff]
  %v328 = vld [vmem:[%s2 + $0xa8] sm:$0xff]
  %v329 = vld [vmem:[%s2 + $0xb0] sm:$0xff]
  %v330 = vld [vmem:[%s2 + $0xb8] sm:$0xff]
  %v331 = vld [vmem:[%s2 + $0xc0] sm:$0xff]
  %v332 = vld [vmem:[%s2 + $0xc8] sm:$0xff]
  %v333 = vld [vmem:[%s2 + $0xd0] sm:$0xff]
  %v334 = vld [vmem:[%s2 + $0xd8] sm:$0xff]
  %v335 = vld [vmem:[%s2 + $0xe0] sm:$0xff]
  %v336 = vld [vmem:[%s2 + $0xe8] sm:$0xff]
  %v337 = vld [vmem:[%s2 + $0xf0] sm:$0xff]
  %v338 = vld [vmem:[%s2 + $0xf8] sm:$0xff]
  %v371 = vunpack.c.l.b16 %v307
  %v372 = vunpack.c.h.b16 %v307
  %v373 = vunpack.c.l.b16 %v308
  %v374 = vunpack.c.h.b16 %v308
  %v375 = vunpack.c.l.b16 %v309
  %v376 = vunpack.c.h.b16 %v309
  %v377 = vunpack.c.l.b16 %v310
  %v378 = vunpack.c.h.b16 %v310
  %v379 = vunpack.c.l.b16 %v311
  %v380 = vunpack.c.h.b16 %v311
  %v381 = vunpack.c.l.b16 %v312
  %v382 = vunpack.c.h.b16 %v312
  %v383 = vunpack.c.l.b16 %v313
  %v384 = vunpack.c.h.b16 %v313
  %v385 = vunpack.c.l.b16 %v314
  %v386 = vunpack.c.h.b16 %v314
  %v387 = vunpack.c.l.b16 %v315
  %v388 = vunpack.c.h.b16 %v315
  %v389 = vunpack.c.l.b16 %v316
  %v390 = vunpack.c.h.b16 %v316
  %v391 = vunpack.c.l.b16 %v317
  %v392 = vunpack.c.h.b16 %v317
  %v393 = vunpack.c.l.b16 %v318
  %v394 = vunpack.c.h.b16 %v318
  %v395 = vunpack.c.l.b16 %v319
  %v396 = vunpack.c.h.b16 %v319
  %v397 = vunpack.c.l.b16 %v320
  %v398 = vunpack.c.h.b16 %v320
  %v399 = vunpack.c.l.b16 %v321
  %v400 = vunpack.c.h.b16 %v321
  %v401 = vunpack.c.l.b16 %v322
  %v402 = vunpack.c.h.b16 %v322
  %v403 = vunpack.c.l.b16 %v323
  %v404 = vunpack.c.h.b16 %v323
  %v405 = vunpack.c.l.b16 %v324
  %v406 = vunpack.c.h.b16 %v324
  %v407 = vunpack.c.l.b16 %v325
  %v408 = vunpack.c.h.b16 %v325
  %v409 = vunpack.c.l.b16 %v326
  %v410 = vunpack.c.h.b16 %v326
  %v411 = vunpack.c.l.b16 %v327
  %v412 = vunpack.c.h.b16 %v327
  %v413 = vunpack.c.l.b16 %v328
  %v414 = vunpack.c.h.b16 %v328
  %v415 = vunpack.c.l.b16 %v329
  %v416 = vunpack.c.h.b16 %v329
  %v417 = vunpack.c.l.b16 %v330
  %v418 = vunpack.c.h.b16 %v330
  %v419 = vunpack.c.l.b16 %v331
  %v420 = vunpack.c.h.b16 %v331
  %v421 = vunpack.c.l.b16 %v332
  %v422 = vunpack.c.h.b16 %v332
  %v423 = vunpack.c.l.b16 %v333
  %v424 = vunpack.c.h.b16 %v333
  %v425 = vunpack.c.l.b16 %v334
  %v426 = vunpack.c.h.b16 %v334
  %v427 = vunpack.c.l.b16 %v335
  %v428 = vunpack.c.h.b16 %v335
  %v429 = vunpack.c.l.b16 %v336
  %v430 = vunpack.c.h.b16 %v336
  %v431 = vunpack.c.l.b16 %v337
  %v432 = vunpack.c.h.b16 %v337
  %v433 = vunpack.c.l.b16 %v338
  %v434 = vunpack.c.h.b16 %v338
  %v435 = vpack.c.b16 %v375, %v371
  %v436 = vpack.c.b16 %v376, %v372
  %v437 = vpack.c.b16 %v377, %v373
  %v438 = vpack.c.b16 %v378, %v374
  %v439 = vpack.c.b16 %v383, %v379
  %v440 = vpack.c.b16 %v384, %v380
  %v441 = vpack.c.b16 %v385, %v381
  %v442 = vpack.c.b16 %v386, %v382
  %v443 = vpack.c.b16 %v391, %v387
  %v444 = vpack.c.b16 %v392, %v388
  %v445 = vpack.c.b16 %v393, %v389
  %v446 = vpack.c.b16 %v394, %v390
  %v447 = vpack.c.b16 %v399, %v395
  %v448 = vpack.c.b16 %v400, %v396
  %v449 = vpack.c.b16 %v401, %v397
  %v450 = vpack.c.b16 %v402, %v398
  %v451 = vpack.c.b16 %v407, %v403
  %v452 = vpack.c.b16 %v408, %v404
  %v453 = vpack.c.b16 %v409, %v405
  %v454 = vpack.c.b16 %v410, %v406
  %v455 = vpack.c.b16 %v415, %v411
  %v456 = vpack.c.b16 %v416, %v412
  %v457 = vpack.c.b16 %v417, %v413
  %v458 = vpack.c.b16 %v418, %v414
  %v459 = vpack.c.b16 %v423, %v419
  %v460 = vpack.c.b16 %v424, %v420
  %v461 = vpack.c.b16 %v425, %v421
  %v462 = vpack.c.b16 %v426, %v422
  %v463 = vpack.c.b16 %v431, %v427
  %v464 = vpack.c.b16 %v432, %v428
  %v465 = vpack.c.b16 %v433, %v429
  %v466 = vpack.c.b16 %v434, %v430
  %499 = vmatprep.subr.bf16.mxu0 %v436
  %500 = vmatpush1.bf16.msra.mxu0 %v435
  %501 = vmatprep.subr.bf16.mxu0 %v440
  %502 = vmatpush1.bf16.msra.mxu0 %v439
  %503 = vmatprep.subr.bf16.mxu0 %v444
  %504 = vmatpush1.bf16.msra.mxu0 %v443
  %505 = vmatprep.subr.bf16.mxu0 %v448
  %506 = vmatpush1.bf16.msra.mxu0 %v447
  %507 = vmatprep.subr.bf16.mxu0 %v452
  %508 = vmatpush1.bf16.msra.mxu0 %v451
  %509 = vmatprep.subr.bf16.mxu0 %v456
  %510 = vmatpush1.bf16.msra.mxu0 %v455
  %511 = vmatprep.subr.bf16.mxu0 %v460
  %512 = vmatpush1.bf16.msra.mxu0 %v459
  %513 = vmatprep.subr.bf16.mxu0 %v464
  %514 = vmatpush1.bf16.msra.mxu0 %v463
  %515 = vmatprep.subr.bf16.mxu0 0
  %516 = vmatpush1.bf16.msra.mxu0 0
  %517 = vmatprep.subr.bf16.mxu0 0
  %518 = vmatpush1.bf16.msra.mxu0 0
  %519 = vmatprep.subr.bf16.mxu0 0
  %520 = vmatpush1.bf16.msra.mxu0 0
  %521 = vmatprep.subr.bf16.mxu0 0
  %522 = vmatpush1.bf16.msra.mxu0 0
  %523 = vmatprep.subr.bf16.mxu0 0
  %524 = vmatpush1.bf16.msra.mxu0 0
  %525 = vmatprep.subr.bf16.mxu0 0
  %526 = vmatpush1.bf16.msra.mxu0 0
  %527 = vmatprep.subr.bf16.mxu0 0
  %528 = vmatpush1.bf16.msra.mxu0 0
  %529 = vmatprep.subr.bf16.mxu0 0
  %530 = vmatpush1.bf16.msra.mxu0 0
  %531 = vmatprep.mubr.bf16.mxu0 0
  %532 = vmatmul.mubr.bf16.gmra.mrb[0].mxu0 %v306
  %v533 = vpop.f32.mrb[0].mxu0
  %v534 = vadd.f32 0.0, %v533
  %v535 = vpop.f32.mrb[0].mxu0
  %v536 = vadd.f32 0.0, %v535
  %v537 = vpop.f32.mrb[0].mxu0
  %v538 = vpop.f32.mrb[0].mxu0
  %539 = vdwg.mxu0
  %540 = vmatprep.subr.bf16.mxu0 %v438
  %541 = vmatpush1.bf16.msra.mxu0 %v437
  %542 = vmatprep.subr.bf16.mxu0 %v442
  %543 = vmatpush1.bf16.msra.mxu0 %v441
  %544 = vmatprep.subr.bf16.mxu0 %v446
  %545 = vmatpush1.bf16.msra.mxu0 %v445
  %546 = vmatprep.subr.bf16.mxu0 %v450
  %547 = vmatpush1.bf16.msra.mxu0 %v449
  %548 = vmatprep.subr.bf16.mxu0 %v454
  %549 = vmatpush1.bf16.msra.mxu0 %v453
  %550 = vmatprep.subr.bf16.mxu0 %v458
  %551 = vmatpush1.bf16.msra.mxu0 %v457
  %552 = vmatprep.subr.bf16.mxu0 %v462
  %553 = vmatpush1.bf16.msra.mxu0 %v461
  %554 = vmatprep.subr.bf16.mxu0 %v466
  %555 = vmatpush1.bf16.msra.mxu0 %v465
  %556 = vmatprep.subr.bf16.mxu0 0
  %557 = vmatpush1.bf16.msra.mxu0 0
  %558 = vmatprep.subr.bf16.mxu0 0
  %559 = vmatpush1.bf16.msra.mxu0 0
  %560 = vmatprep.subr.bf16.mxu0 0
  %561 = vmatpush1.bf16.msra.mxu0 0
  %562 = vmatprep.subr.bf16.mxu0 0
  %563 = vmatpush1.bf16.msra.mxu0 0
  %564 = vmatprep.subr.bf16.mxu0 0
  %565 = vmatpush1.bf16.msra.mxu0 0
  %566 = vmatprep.subr.bf16.mxu0 0
  %567 = vmatpush1.bf16.msra.mxu0 0
  %568 = vmatprep.subr.bf16.mxu0 0
  %569 = vmatpush1.bf16.msra.mxu0 0
  %570 = vmatprep.subr.bf16.mxu0 0
  %571 = vmatpush1.bf16.msra.mxu0 0
  %572 = vmatprep.mubr.bf16.mxu0 0
  %573 = vmatmul.mubr.bf16.gmra.mrb[0].mxu0 %v306
  %v574 = vpop.f32.mrb[0].mxu0
  %v575 = vadd.f32 0.0, %v574
  %v576 = vpop.f32.mrb[0].mxu0
  %v577 = vadd.f32 0.0, %v576
  %v578 = vpop.f32.mrb[0].mxu0
  %v579 = vpop.f32.mrb[0].mxu0
  %580 = vdwg.mxu0
  %v581 = vadd.f32 %v302, %v534
  %v582 = vadd.f32 %v303, %v536
  %v583 = vadd.f32 %v304, %v575
  %v584 = vadd.f32 %v305, %v577
  %v585 = vxor.u32 %v581, 2147483648
  %v586 = vmul.f32 %v585, 1.442695
  %v587 = vpow.pop %v586
  %v588 = vadd.f32 %v587, 1.0
  %v589 = vrcp.pop %v588
  %v590 = vmul.f32 1.0, %v589
  %v591 = vxor.u32 %v582, 2147483648
  %v592 = vmul.f32 %v591, 1.442695
  %v593 = vpow.pop %v592
  %v594 = vadd.f32 %v593, 1.0
  %v595 = vrcp.pop %v594
  %v596 = vmul.f32 1.0, %v595
  %v597 = vtanh.pop %v583
  %v598 = vxor.u32 %v584, 2147483648
  %v599 = vmul.f32 %v598, 1.442695
  %v600 = vpow.pop %v599
  %v601 = vadd.f32 %v600, 1.0
  %v602 = vrcp.pop %v601
  %v603 = vmul.f32 1.0, %v602
  %v604 = vmul.f32 %v596, %v301
  %v605 = vmul.f32 %v590, %v597
  %v606 = vadd.f32 %v604, %v605
  %v607 = vtanh.pop %v606
  %v608 = vmul.f32 %v603, %v607
  %609 = vst [vmem:[#allocation3] sm:$0xff] %v608
  %v610 = vld [vmem:[#allocation2 + $0x20] sm:$0xff]
  %v611 = vld [vmem:[#allocation2 + $0x28] sm:$0xff]
  %v612 = vld [vmem:[#allocation2 + $0x30] sm:$0xff]
  %v613 = vld [vmem:[#allocation2 + $0x38] sm:$0xff]
  %v614 = vpack.c.bf16 %v608, %v608
  %v615 = vld [vmem:[%s2] sm:$0xff]
  %v616 = vld [vmem:[%s2 + $0x8] sm:$0xff]
  %v617 = vld [vmem:[%s2 + $0x10] sm:$0xff]
  %v618 = vld [vmem:[%s2 + $0x18] sm:$0xff]
  %v619 = vld [vmem:[%s2 + $0x20] sm:$0xff]
  %v620 = vld [vmem:[%s2 + $0x28] sm:$0xff]
  %v621 = vld [vmem:[%s2 + $0x30] sm:$0xff]
  %v622 = vld [vmem:[%s2 + $0x38] sm:$0xff]
  %v623 = vld [vmem:[%s2 + $0x40] sm:$0xff]
  %v624 = vld [vmem:[%s2 + $0x48] sm:$0xff]
  %v625 = vld [vmem:[%s2 + $0x50] sm:$0xff]
  %v626 = vld [vmem:[%s2 + $0x58] sm:$0xff]
  %v627 = vld [vmem:[%s2 + $0x60] sm:$0xff]
  %v628 = vld [vmem:[%s2 + $0x68] sm:$0xff]
  %v629 = vld [vmem:[%s2 + $0x70] sm:$0xff]
  %v630 = vld [vmem:[%s2 + $0x78] sm:$0xff]
  %v631 = vld [vmem:[%s2 + $0x80] sm:$0xff]
  %v632 = vld [vmem:[%s2 + $0x88] sm:$0xff]
  %v633 = vld [vmem:[%s2 + $0x90] sm:$0xff]
  %v634 = vld [vmem:[%s2 + $0x98] sm:$0xff]
  %v635 = vld [vmem:[%s2 + $0xa0] sm:$0xff]
  %v636 = vld [vmem:[%s2 + $0xa8] sm:$0xff]
  %v637 = vld [vmem:[%s2 + $0xb0] sm:$0xff]
  %v638 = vld [vmem:[%s2 + $0xb8] sm:$0xff]
  %v639 = vld [vmem:[%s2 + $0xc0] sm:$0xff]
  %v640 = vld [vmem:[%s2 + $0xc8] sm:$0xff]
  %v641 = vld [vmem:[%s2 + $0xd0] sm:$0xff]
  %v642 = vld [vmem:[%s2 + $0xd8] sm:$0xff]
  %v643 = vld [vmem:[%s2 + $0xe0] sm:$0xff]
  %v644 = vld [vmem:[%s2 + $0xe8] sm:$0xff]
  %v645 = vld [vmem:[%s2 + $0xf0] sm:$0xff]
  %v646 = vld [vmem:[%s2 + $0xf8] sm:$0xff]
  %v679 = vunpack.c.l.b16 %v615
  %v680 = vunpack.c.h.b16 %v615
  %v681 = vunpack.c.l.b16 %v616
  %v682 = vunpack.c.h.b16 %v616
  %v683 = vunpack.c.l.b16 %v617
  %v684 = vunpack.c.h.b16 %v617
  %v685 = vunpack.c.l.b16 %v618
  %v686 = vunpack.c.h.b16 %v618
  %v687 = vunpack.c.l.b16 %v619
  %v688 = vunpack.c.h.b16 %v619
  %v689 = vunpack.c.l.b16 %v620
  %v690 = vunpack.c.h.b16 %v620
  %v691 = vunpack.c.l.b16 %v621
  %v692 = vunpack.c.h.b16 %v621
  %v693 = vunpack.c.l.b16 %v622
  %v694 = vunpack.c.h.b16 %v622
  %v695 = vunpack.c.l.b16 %v623
  %v696 = vunpack.c.h.b16 %v623
  %v697 = vunpack.c.l.b16 %v624
  %v698 = vunpack.c.h.b16 %v624
  %v699 = vunpack.c.l.b16 %v625
  %v700 = vunpack.c.h.b16 %v625
  %v701 = vunpack.c.l.b16 %v626
  %v702 = vunpack.c.h.b16 %v626
  %v703 = vunpack.c.l.b16 %v627
  %v704 = vunpack.c.h.b16 %v627
  %v705 = vunpack.c.l.b16 %v628
  %v706 = vunpack.c.h.b16 %v628
  %v707 = vunpack.c.l.b16 %v629
  %v708 = vunpack.c.h.b16 %v629
  %v709 = vunpack.c.l.b16 %v630
  %v710 = vunpack.c.h.b16 %v630
  %v711 = vunpack.c.l.b16 %v631
  %v712 = vunpack.c.h.b16 %v631
  %v713 = vunpack.c.l.b16 %v632
  %v714 = vunpack.c.h.b16 %v632
  %v715 = vunpack.c.l.b16 %v633
  %v716 = vunpack.c.h.b16 %v633
  %v717 = vunpack.c.l.b16 %v634
  %v718 = vunpack.c.h.b16 %v634
  %v719 = vunpack.c.l.b16 %v635
  %v720 = vunpack.c.h.b16 %v635
  %v721 = vunpack.c.l.b16 %v636
  %v722 = vunpack.c.h.b16 %v636
  %v723 = vunpack.c.l.b16 %v637
  %v724 = vunpack.c.h.b16 %v637
  %v725 = vunpack.c.l.b16 %v638
  %v726 = vunpack.c.h.b16 %v638
  %v727 = vunpack.c.l.b16 %v639
  %v728 = vunpack.c.h.b16 %v639
  %v729 = vunpack.c.l.b16 %v640
  %v730 = vunpack.c.h.b16 %v640
  %v731 = vunpack.c.l.b16 %v641
  %v732 = vunpack.c.h.b16 %v641
  %v733 = vunpack.c.l.b16 %v642
  %v734 = vunpack.c.h.b16 %v642
  %v735 = vunpack.c.l.b16 %v643
  %v736 = vunpack.c.h.b16 %v643
  %v737 = vunpack.c.l.b16 %v644
  %v738 = vunpack.c.h.b16 %v644
  %v739 = vunpack.c.l.b16 %v645
  %v740 = vunpack.c.h.b16 %v645
  %v741 = vunpack.c.l.b16 %v646
  %v742 = vunpack.c.h.b16 %v646
  %v743 = vpack.c.b16 %v683, %v679
  %v744 = vpack.c.b16 %v684, %v680
  %v745 = vpack.c.b16 %v685, %v681
  %v746 = vpack.c.b16 %v686, %v682
  %v747 = vpack.c.b16 %v691, %v687
  %v748 = vpack.c.b16 %v692, %v688
  %v749 = vpack.c.b16 %v693, %v689
  %v750 = vpack.c.b16 %v694, %v690
  %v751 = vpack.c.b16 %v699, %v695
  %v752 = vpack.c.b16 %v700, %v696
  %v753 = vpack.c.b16 %v701, %v697
  %v754 = vpack.c.b16 %v702, %v698
  %v755 = vpack.c.b16 %v707, %v703
  %v756 = vpack.c.b16 %v708, %v704
  %v757 = vpack.c.b16 %v709, %v705
  %v758 = vpack.c.b16 %v710, %v706
  %v759 = vpack.c.b16 %v715, %v711
  %v760 = vpack.c.b16 %v716, %v712
  %v761 = vpack.c.b16 %v717, %v713
  %v762 = vpack.c.b16 %v718, %v714
  %v763 = vpack.c.b16 %v723, %v719
  %v764 = vpack.c.b16 %v724, %v720
  %v765 = vpack.c.b16 %v725, %v721
  %v766 = vpack.c.b16 %v726, %v722
  %v767 = vpack.c.b16 %v731, %v727
  %v768 = vpack.c.b16 %v732, %v728
  %v769 = vpack.c.b16 %v733, %v729
  %v770 = vpack.c.b16 %v734, %v730
  %v771 = vpack.c.b16 %v739, %v735
  %v772 = vpack.c.b16 %v740, %v736
  %v773 = vpack.c.b16 %v741, %v737
  %v774 = vpack.c.b16 %v742, %v738
  %807 = vmatprep.subr.bf16.mxu0 %v744
  %808 = vmatpush1.bf16.msra.mxu0 %v743
  %809 = vmatprep.subr.bf16.mxu0 %v748
  %810 = vmatpush1.bf16.msra.mxu0 %v747
  %811 = vmatprep.subr.bf16.mxu0 %v752
  %812 = vmatpush1.bf16.msra.mxu0 %v751
  %813 = vmatprep.subr.bf16.mxu0 %v756
  %814 = vmatpush1.bf16.msra.mxu0 %v755
  %815 = vmatprep.subr.bf16.mxu0 %v760
  %816 = vmatpush1.bf16.msra.mxu0 %v759
  %817 = vmatprep.subr.bf16.mxu0 %v764
  %818 = vmatpush1.bf16.msra.mxu0 %v763
  %819 = vmatprep.subr.bf16.mxu0 %v768
  %820 = vmatpush1.bf16.msra.mxu0 %v767
  %821 = vmatprep.subr.bf16.mxu0 %v772
  %822 = vmatpush1.bf16.msra.mxu0 %v771
  %823 = vmatprep.subr.bf16.mxu0 0
  %824 = vmatpush1.bf16.msra.mxu0 0
  %825 = vmatprep.subr.bf16.mxu0 0
  %826 = vmatpush1.bf16.msra.mxu0 0
  %827 = vmatprep.subr.bf16.mxu0 0
  %828 = vmatpush1.bf16.msra.mxu0 0
  %829 = vmatprep.subr.bf16.mxu0 0
  %830 = vmatpush1.bf16.msra.mxu0 0
  %831 = vmatprep.subr.bf16.mxu0 0
  %832 = vmatpush1.bf16.msra.mxu0 0
  %833 = vmatprep.subr.bf16.mxu0 0
  %834 = vmatpush1.bf16.msra.mxu0 0
  %835 = vmatprep.subr.bf16.mxu0 0
  %836 = vmatpush1.bf16.msra.mxu0 0
  %837 = vmatprep.subr.bf16.mxu0 0
  %838 = vmatpush1.bf16.msra.mxu0 0
  %839 = vmatprep.mubr.bf16.mxu0 0
  %840 = vmatmul.mubr.bf16.gmra.mrb[0].mxu0 %v614
  %v841 = vpop.f32.mrb[0].mxu0
  %v842 = vadd.f32 0.0, %v841
  %v843 = vpop.f32.mrb[0].mxu0
  %v844 = vadd.f32 0.0, %v843
  %v845 = vpop.f32.mrb[0].mxu0
  %v846 = vpop.f32.mrb[0].mxu0
  %847 = vdwg.mxu0
  %848 = vmatprep.subr.bf16.mxu0 %v746
  %849 = vmatpush1.bf16.msra.mxu0 %v745
  %850 = vmatprep.subr.bf16.mxu0 %v750
  %851 = vmatpush1.bf16.msra.mxu0 %v749
  %852 = vmatprep.subr.bf16.mxu0 %v754
  %853 = vmatpush1.bf16.msra.mxu0 %v753
  %854 = vmatprep.subr.bf16.mxu0 %v758
  %855 = vmatpush1.bf16.msra.mxu0 %v757
  %856 = vmatprep.subr.bf16.mxu0 %v762
  %857 = vmatpush1.bf16.msra.mxu0 %v761
  %858 = vmatprep.subr.bf16.mxu0 %v766
  %859 = vmatpush1.bf16.msra.mxu0 %v765
  %860 = vmatprep.subr.bf16.mxu0 %v770
  %861 = vmatpush1.bf16.msra.mxu0 %v769
  %862 = vmatprep.subr.bf16.mxu0 %v774
  %863 = vmatpush1.bf16.msra.mxu0 %v773
  %864 = vmatprep.subr.bf16.mxu0 0
  %865 = vmatpush1.bf16.msra.mxu0 0
  %866 = vmatprep.subr.bf16.mxu0 0
  %867 = vmatpush1.bf16.msra.mxu0 0
  %868 = vmatprep.subr.bf16.mxu0 0
  %869 = vmatpush1.bf16.msra.mxu0 0
  %870 = vmatprep.subr.bf16.mxu0 0
  %871 = vmatpush1.bf16.msra.mxu0 0
  %872 = vmatprep.subr.bf16.mxu0 0
  %873 = vmatpush1.bf16.msra.mxu0 0
  %874 = vmatprep.subr.bf16.mxu0 0
  %875 = vmatpush1.bf16.msra.mxu0 0
  %876 = vmatprep.subr.bf16.mxu0 0
  %877 = vmatpush1.bf16.msra.mxu0 0
  %878 = vmatprep.subr.bf16.mxu0 0
  %879 = vmatpush1.bf16.msra.mxu0 0
  %880 = vmatprep.mubr.bf16.mxu0 0
  %881 = vmatmul.mubr.bf16.gmra.mrb[0].mxu0 %v614
  %v882 = vpop.f32.mrb[0].mxu0
  %v883 = vadd.f32 0.0, %v882
  %v884 = vpop.f32.mrb[0].mxu0
  %v885 = vadd.f32 0.0, %v884
  %v886 = vpop.f32.mrb[0].mxu0
  %v887 = vpop.f32.mrb[0].mxu0
  %888 = vdwg.mxu0
  %v889 = vadd.f32 %v610, %v842
  %v890 = vadd.f32 %v611, %v844
  %v891 = vadd.f32 %v612, %v883
  %v892 = vadd.f32 %v613, %v885
  %v893 = vxor.u32 %v889, 2147483648
  %v894 = vmul.f32 %v893, 1.442695
  %v895 = vpow.pop %v894
  %v896 = vadd.f32 %v895, 1.0
  %v897 = vrcp.pop %v896
  %v898 = vmul.f32 1.0, %v897
  %v899 = vxor.u32 %v890, 2147483648
  %v900 = vmul.f32 %v899, 1.442695
  %v901 = vpow.pop %v900
  %v902 = vadd.f32 %v901, 1.0
  %v903 = vrcp.pop %v902
  %v904 = vmul.f32 1.0, %v903
  %v905 = vtanh.pop %v891
  %v906 = vxor.u32 %v892, 2147483648
  %v907 = vmul.f32 %v906, 1.442695
  %v908 = vpow.pop %v907
  %v909 = vadd.f32 %v908, 1.0
  %v910 = vrcp.pop %v909
  %v911 = vmul.f32 1.0, %v910
  %v912 = vmul.f32 %v904, %v606
  %v913 = vmul.f32 %v898, %v905
  %v914 = vadd.f32 %v912, %v913
  %v915 = vtanh.pop %v914
  %v916 = vmul.f32 %v911, %v915
  %917 = vst [vmem:[#allocation3 + $0x8] sm:$0xff] %v916
  %v918 = vld [vmem:[#allocation2 + $0x40] sm:$0xff]
  %v919 = vld [vmem:[#allocation2 + $0x48] sm:$0xff]
  %v920 = vld [vmem:[#allocation2 + $0x50] sm:$0xff]
  %v921 = vld [vmem:[#allocation2 + $0x58] sm:$0xff]
  %v922 = vpack.c.bf16 %v916, %v916
  %v923 = vld [vmem:[%s2] sm:$0xff]
  %v924 = vld [vmem:[%s2 + $0x8] sm:$0xff]
  %v925 = vld [vmem:[%s2 + $0x10] sm:$0xff]
  %v926 = vld [vmem:[%s2 + $0x18] sm:$0xff]
  %v927 = vld [vmem:[%s2 + $0x20] sm:$0xff]
  %v928 = vld [vmem:[%s2 + $0x28] sm:$0xff]
  %v929 = vld [vmem:[%s2 + $0x30] sm:$0xff]
  %v930 = vld [vmem:[%s2 + $0x38] sm:$0xff]
  %v931 = vld [vmem:[%s2 + $0x40] sm:$0xff]
  %v932 = vld [vmem:[%s2 + $0x48] sm:$0xff]
  %v933 = vld [vmem:[%s2 + $0x50] sm:$0xff]
  %v934 = vld [vmem:[%s2 + $0x58] sm:$0xff]
  %v935 = vld [vmem:[%s2 + $0x60] sm:$0xff]
  %v936 = vld [vmem:[%s2 + $0x68] sm:$0xff]
  %v937 = vld [vmem:[%s2 + $0x70] sm:$0xff]
  %v938 = vld [vmem:[%s2 + $0x78] sm:$0xff]
  %v939 = vld [vmem:[%s2 + $0x80] sm:$0xff]
  %v940 = vld [vmem:[%s2 + $0x88] sm:$0xff]
  %v941 = vld [vmem:[%s2 + $0x90] sm:$0xff]
  %v942 = vld [vmem:[%s2 + $0x98] sm:$0xff]
  %v943 = vld [vmem:[%s2 + $0xa0] sm:$0xff]
  %v944 = vld [vmem:[%s2 + $0xa8] sm:$0xff]
  %v945 = vld [vmem:[%s2 + $0xb0] sm:$0xff]
  %v946 = vld [vmem:[%s2 + $0xb8] sm:$0xff]
  %v947 = vld [vmem:[%s2 + $0xc0] sm:$0xff]
  %v948 = vld [vmem:[%s2 + $0xc8] sm:$0xff]
  %v949 = vld [vmem:[%s2 + $0xd0] sm:$0xff]
  %v950 = vld [vmem:[%s2 + $0xd8] sm:$0xff]
  %v951 = vld [vmem:[%s2 + $0xe0] sm:$0xff]
  %v952 = vld [vmem:[%s2 + $0xe8] sm:$0xff]
  %v953 = vld [vmem:[%s2 + $0xf0] sm:$0xff]
  %v954 = vld [vmem:[%s2 + $0xf8] sm:$0xff]
  %v987 = vunpack.c.l.b16 %v923
  %v988 = vunpack.c.h.b16 %v923
  %v989 = vunpack.c.l.b16 %v924
  %v990 = vunpack.c.h.b16 %v924
  %v991 = vunpack.c.l.b16 %v925
  %v992 = vunpack.c.h.b16 %v925
  %v993 = vunpack.c.l.b16 %v926
  %v994 = vunpack.c.h.b16 %v926
  %v995 = vunpack.c.l.b16 %v927
  %v996 = vunpack.c.h.b16 %v927
  %v997 = vunpack.c.l.b16 %v928
  %v998 = vunpack.c.h.b16 %v928
  %v999 = vunpack.c.l.b16 %v929
  %v1000 = vunpack.c.h.b16 %v929
  %v1001 = vunpack.c.l.b16 %v930
  %v1002 = vunpack.c.h.b16 %v930
  %v1003 = vunpack.c.l.b16 %v931
  %v1004 = vunpack.c.h.b16 %v931
  %v1005 = vunpack.c.l.b16 %v932
  %v1006 = vunpack.c.h.b16 %v932
  %v1007 = vunpack.c.l.b16 %v933
  %v1008 = vunpack.c.h.b16 %v933
  %v1009 = vunpack.c.l.b16 %v934
  %v1010 = vunpack.c.h.b16 %v934
  %v1011 = vunpack.c.l.b16 %v935
  %v1012 = vunpack.c.h.b16 %v935
  %v1013 = vunpack.c.l.b16 %v936
  %v1014 = vunpack.c.h.b16 %v936
  %v1015 = vunpack.c.l.b16 %v937
  %v1016 = vunpack.c.h.b16 %v937
  %v1017 = vunpack.c.l.b16 %v938
  %v1018 = vunpack.c.h.b16 %v938
  %v1019 = vunpack.c.l.b16 %v939
  %v1020 = vunpack.c.h.b16 %v939
  %v1021 = vunpack.c.l.b16 %v940
  %v1022 = vunpack.c.h.b16 %v940
  %v1023 = vunpack.c.l.b16 %v941
  %v1024 = vunpack.c.h.b16 %v941
  %v1025 = vunpack.c.l.b16 %v942
  %v1026 = vunpack.c.h.b16 %v942
  %v1027 = vunpack.c.l.b16 %v943
  %v1028 = vunpack.c.h.b16 %v943
  %v1029 = vunpack.c.l.b16 %v944
  %v1030 = vunpack.c.h.b16 %v944
  %v1031 = vunpack.c.l.b16 %v945
  %v1032 = vunpack.c.h.b16 %v945
  %v1033 = vunpack.c.l.b16 %v946
  %v1034 = vunpack.c.h.b16 %v946
  %v1035 = vunpack.c.l.b16 %v947
  %v1036 = vunpack.c.h.b16 %v947
  %v1037 = vunpack.c.l.b16 %v948
  %v1038 = vunpack.c.h.b16 %v948
  %v1039 = vunpack.c.l.b16 %v949
  %v1040 = vunpack.c.h.b16 %v949
  %v1041 = vunpack.c.l.b16 %v950
  %v1042 = vunpack.c.h.b16 %v950
  %v1043 = vunpack.c.l.b16 %v951
  %v1044 = vunpack.c.h.b16 %v951
  %v1045 = vunpack.c.l.b16 %v952
  %v1046 = vunpack.c.h.b16 %v952
  %v1047 = vunpack.c.l.b16 %v953
  %v1048 = vunpack.c.h.b16 %v953
  %v1049 = vunpack.c.l.b16 %v954
  %v1050 = vunpack.c.h.b16 %v954
  %v1051 = vpack.c.b16 %v991, %v987
  %v1052 = vpack.c.b16 %v992, %v988
  %v1053 = vpack.c.b16 %v993, %v989
  %v1054 = vpack.c.b16 %v994, %v990
  %v1055 = vpack.c.b16 %v999, %v995
  %v1056 = vpack.c.b16 %v1000, %v996
  %v1057 = vpack.c.b16 %v1001, %v997
  %v1058 = vpack.c.b16 %v1002, %v998
  %v1059 = vpack.c.b16 %v1007, %v1003
  %v1060 = vpack.c.b16 %v1008, %v1004
  %v1061 = vpack.c.b16 %v1009, %v1005
  %v1062 = vpack.c.b16 %v1010, %v1006
  %v1063 = vpack.c.b16 %v1015, %v1011
  %v1064 = vpack.c.b16 %v1016, %v1012
  %v1065 = vpack.c.b16 %v1017, %v1013
  %v1066 = vpack.c.b16 %v1018, %v1014
  %v1067 = vpack.c.b16 %v1023, %v1019
  %v1068 = vpack.c.b16 %v1024, %v1020
  %v1069 = vpack.c.b16 %v1025, %v1021
  %v1070 = vpack.c.b16 %v1026, %v1022
  %v1071 = vpack.c.b16 %v1031, %v1027
  %v1072 = vpack.c.b16 %v1032, %v1028
  %v1073 = vpack.c.b16 %v1033, %v1029
  %v1074 = vpack.c.b16 %v1034, %v1030
  %v1075 = vpack.c.b16 %v1039, %v1035
  %v1076 = vpack.c.b16 %v1040, %v1036
  %v1077 = vpack.c.b16 %v1041, %v1037
  %v1078 = vpack.c.b16 %v1042, %v1038
  %v1079 = vpack.c.b16 %v1047, %v1043
  %v1080 = vpack.c.b16 %v1048, %v1044
  %v1081 = vpack.c.b16 %v1049, %v1045
  %v1082 = vpack.c.b16 %v1050, %v1046
  %1115 = vmatprep.subr.bf16.mxu0 %v1052
  %1116 = vmatpush1.bf16.msra.mxu0 %v1051
  %1117 = vmatprep.subr.bf16.mxu0 %v1056
  %1118 = vmatpush1.bf16.msra.mxu0 %v1055
  %1119 = vmatprep.subr.bf16.mxu0 %v1060
  %1120 = vmatpush1.bf16.msra.mxu0 %v1059
  %1121 = vmatprep.subr.bf16.mxu0 %v1064
  %1122 = vmatpush1.bf16.msra.mxu0 %v1063
  %1123 = vmatprep.subr.bf16.mxu0 %v1068
  %1124 = vmatpush1.bf16.msra.mxu0 %v1067
  %1125 = vmatprep.subr.bf16.mxu0 %v1072
  %1126 = vmatpush1.bf16.msra.mxu0 %v1071
  %1127 = vmatprep.subr.bf16.mxu0 %v1076
  %1128 = vmatpush1.bf16.msra.mxu0 %v1075
  %1129 = vmatprep.subr.bf16.mxu0 %v1080
  %1130 = vmatpush1.bf16.msra.mxu0 %v1079
  %1131 = vmatprep.subr.bf16.mxu0 0
  %1132 = vmatpush1.bf16.msra.mxu0 0
  %1133 = vmatprep.subr.bf16.mxu0 0
  %1134 = vmatpush1.bf16.msra.mxu0 0
  %1135 = vmatprep.subr.bf16.mxu0 0
  %1136 = vmatpush1.bf16.msra.mxu0 0
  %1137 = vmatprep.subr.bf16.mxu0 0
  %1138 = vmatpush1.bf16.msra.mxu0 0
  %1139 = vmatprep.subr.bf16.mxu0 0
  %1140 = vmatpush1.bf16.msra.mxu0 0
  %1141 = vmatprep.subr.bf16.mxu0 0
  %1142 = vmatpush1.bf16.msra.mxu0 0
  %1143 = vmatprep.subr.bf16.mxu0 0
  %1144 = vmatpush1.bf16.msra.mxu0 0
  %1145 = vmatprep.subr.bf16.mxu0 0
  %1146 = vmatpush1.bf16.msra.mxu0 0
  %1147 = vmatprep.mubr.bf16.mxu0 0
  %1148 = vmatmul.mubr.bf16.gmra.mrb[0].mxu0 %v922
  %v1149 = vpop.f32.mrb[0].mxu0
  %v1150 = vadd.f32 0.0, %v1149
  %v1151 = vpop.f32.mrb[0].mxu0
  %v1152 = vadd.f32 0.0, %v1151
  %v1153 = vpop.f32.mrb[0].mxu0
  %v1154 = vpop.f32.mrb[0].mxu0
  %1155 = vdwg.mxu0
  %1156 = vmatprep.subr.bf16.mxu0 %v1054
  %1157 = vmatpush1.bf16.msra.mxu0 %v1053
  %1158 = vmatprep.subr.bf16.mxu0 %v1058
  %1159 = vmatpush1.bf16.msra.mxu0 %v1057
  %1160 = vmatprep.subr.bf16.mxu0 %v1062
  %1161 = vmatpush1.bf16.msra.mxu0 %v1061
  %1162 = vmatprep.subr.bf16.mxu0 %v1066
  %1163 = vmatpush1.bf16.msra.mxu0 %v1065
  %1164 = vmatprep.subr.bf16.mxu0 %v1070
  %1165 = vmatpush1.bf16.msra.mxu0 %v1069
  %1166 = vmatprep.subr.bf16.mxu0 %v1074
  %1167 = vmatpush1.bf16.msra.mxu0 %v1073
  %1168 = vmatprep.subr.bf16.mxu0 %v1078
  %1169 = vmatpush1.bf16.msra.mxu0 %v1077
  %1170 = vmatprep.subr.bf16.mxu0 %v1082
  %1171 = vmatpush1.bf16.msra.mxu0 %v1081
  %1172 = vmatprep.subr.bf16.mxu0 0
  %1173 = vmatpush1.bf16.msra.mxu0 0
  %1174 = vmatprep.subr.bf16.mxu0 0
  %1175 = vmatpush1.bf16.msra.mxu0 0
  %1176 = vmatprep.subr.bf16.mxu0 0
  %1177 = vmatpush1.bf16.msra.mxu0 0
  %1178 = vmatprep.subr.bf16.mxu0 0
  %1179 = vmatpush1.bf16.msra.mxu0 0
  %1180 = vmatprep.subr.bf16.mxu0 0
  %1181 = vmatpush1.bf16.msra.mxu0 0
  %1182 = vmatprep.subr.bf16.mxu0 0
  %1183 = vmatpush1.bf16.msra.mxu0 0
  %1184 = vmatprep.subr.bf16.mxu0 0
  %1185 = vmatpush1.bf16.msra.mxu0 0
  %1186 = vmatprep.subr.bf16.mxu0 0
  %1187 = vmatpush1.bf16.msra.mxu0 0
  %1188 = vmatprep.mubr.bf16.mxu0 0
  %1189 = vmatmul.mubr.bf16.gmra.mrb[0].mxu0 %v922
  %v1190 = vpop.f32.mrb[0].mxu0
  %v1191 = vadd.f32 0.0, %v1190
  %v1192 = vpop.f32.mrb[0].mxu0
  %v1193 = vadd.f32 0.0, %v1192
  %v1194 = vpop.f32.mrb[0].mxu0
  %v1195 = vpop.f32.mrb[0].mxu0
  %1196 = vdwg.mxu0
  %v1197 = vadd.f32 %v918, %v1150
  %v1198 = vadd.f32 %v919, %v1152
  %v1199 = vadd.f32 %v920, %v1191
  %v1200 = vadd.f32 %v921, %v1193
  %v1201 = vxor.u32 %v1197, 2147483648
  %v1202 = vmul.f32 %v1201, 1.442695
  %v1203 = vpow.pop %v1202
  %v1204 = vadd.f32 %v1203, 1.0
  %v1205 = vrcp.pop %v1204
  %v1206 = vmul.f32 1.0, %v1205
  %v1207 = vxor.u32 %v1198, 2147483648
  %v1208 = vmul.f32 %v1207, 1.442695
  %v1209 = vpow.pop %v1208
  %v1210 = vadd.f32 %v1209, 1.0
  %v1211 = vrcp.pop %v1210
  %v1212 = vmul.f32 1.0, %v1211
  %v1213 = vtanh.pop %v1199
  %v1214 = vxor.u32 %v1200, 2147483648
  %v1215 = vmul.f32 %v1214, 1.442695
  %v1216 = vpow.pop %v1215
  %v1217 = vadd.f32 %v1216, 1.0
  %v1218 = vrcp.pop %v1217
  %v1219 = vmul.f32 1.0, %v1218
  %v1220 = vmul.f32 %v1212, %v914
  %v1221 = vmul.f32 %v1206, %v1213
  %v1222 = vadd.f32 %v1220, %v1221
  %v1223 = vtanh.pop %v1222
  %v1224 = vmul.f32 %v1219, %v1223
  %1225 = vst [vmem:[#allocation3 + $0x10] sm:$0xff] %v1224
  %v1226 = vld [vmem:[#allocation2 + $0x60] sm:$0xff]
  %v1227 = vld [vmem:[#allocation2 + $0x68] sm:$0xff]
  %v1228 = vld [vmem:[#allocation2 + $0x70] sm:$0xff]
  %v1229 = vld [vmem:[#allocation2 + $0x78] sm:$0xff]
  %v1230 = vpack.c.bf16 %v1224, %v1224
  %v1231 = vld [vmem:[%s2] sm:$0xff]
  %v1232 = vld [vmem:[%s2 + $0x8] sm:$0xff]
  %v1233 = vld [vmem:[%s2 + $0x10] sm:$0xff]
  %v1234 = vld [vmem:[%s2 + $0x18] sm:$0xff]
  %v1235 = vld [vmem:[%s2 + $0x20] sm:$0xff]
  %v1236 = vld [vmem:[%s2 + $0x28] sm:$0xff]
  %v1237 = vld [vmem:[%s2 + $0x30] sm:$0xff]
  %v1238 = vld [vmem:[%s2 + $0x38] sm:$0xff]
  %v1239 = vld [vmem:[%s2 + $0x40] sm:$0xff]
  %v1240 = vld [vmem:[%s2 + $0x48] sm:$0xff]
  %v1241 = vld [vmem:[%s2 + $0x50] sm:$0xff]
  %v1242 = vld [vmem:[%s2 + $0x58] sm:$0xff]
  %v1243 = vld [vmem:[%s2 + $0x60] sm:$0xff]
  %v1244 = vld [vmem:[%s2 + $0x68] sm:$0xff]
  %v1245 = vld [vmem:[%s2 + $0x70] sm:$0xff]
  %v1246 = vld [vmem:[%s2 + $0x78] sm:$0xff]
  %v1247 = vld [vmem:[%s2 + $0x80] sm:$0xff]
  %v1248 = vld [vmem:[%s2 + $0x88] sm:$0xff]
  %v1249 = vld [vmem:[%s2 + $0x90] sm:$0xff]
  %v1250 = vld [vmem:[%s2 + $0x98] sm:$0xff]
  %v1251 = vld [vmem:[%s2 + $0xa0] sm:$0xff]
  %v1252 = vld [vmem:[%s2 + $0xa8] sm:$0xff]
  %v1253 = vld [vmem:[%s2 + $0xb0] sm:$0xff]
  %v1254 = vld [vmem:[%s2 + $0xb8] sm:$0xff]
  %v1255 = vld [vmem:[%s2 + $0xc0] sm:$0xff]
  %v1256 = vld [vmem:[%s2 + $0xc8] sm:$0xff]
  %v1257 = vld [vmem:[%s2 + $0xd0] sm:$0xff]
  %v1258 = vld [vmem:[%s2 + $0xd8] sm:$0xff]
  %v1259 = vld [vmem:[%s2 + $0xe0] sm:$0xff]
  %v1260 = vld [vmem:[%s2 + $0xe8] sm:$0xff]
  %v1261 = vld [vmem:[%s2 + $0xf0] sm:$0xff]
  %v1262 = vld [vmem:[%s2 + $0xf8] sm:$0xff]
  %v1295 = vunpack.c.l.b16 %v1231
  %v1296 = vunpack.c.h.b16 %v1231
  %v1297 = vunpack.c.l.b16 %v1232
  %v1298 = vunpack.c.h.b16 %v1232
  %v1299 = vunpack.c.l.b16 %v1233
  %v1300 = vunpack.c.h.b16 %v1233
  %v1301 = vunpack.c.l.b16 %v1234
  %v1302 = vunpack.c.h.b16 %v1234
  %v1303 = vunpack.c.l.b16 %v1235
  %v1304 = vunpack.c.h.b16 %v1235
  %v1305 = vunpack.c.l.b16 %v1236
  %v1306 = vunpack.c.h.b16 %v1236
  %v1307 = vunpack.c.l.b16 %v1237
  %v1308 = vunpack.c.h.b16 %v1237
  %v1309 = vunpack.c.l.b16 %v1238
  %v1310 = vunpack.c.h.b16 %v1238
  %v1311 = vunpack.c.l.b16 %v1239
  %v1312 = vunpack.c.h.b16 %v1239
  %v1313 = vunpack.c.l.b16 %v1240
  %v1314 = vunpack.c.h.b16 %v1240
  %v1315 = vunpack.c.l.b16 %v1241
  %v1316 = vunpack.c.h.b16 %v1241
  %v1317 = vunpack.c.l.b16 %v1242
  %v1318 = vunpack.c.h.b16 %v1242
  %v1319 = vunpack.c.l.b16 %v1243
  %v1320 = vunpack.c.h.b16 %v1243
  %v1321 = vunpack.c.l.b16 %v1244
  %v1322 = vunpack.c.h.b16 %v1244
  %v1323 = vunpack.c.l.b16 %v1245
  %v1324 = vunpack.c.h.b16 %v1245
  %v1325 = vunpack.c.l.b16 %v1246
  %v1326 = vunpack.c.h.b16 %v1246
  %v1327 = vunpack.c.l.b16 %v1247
  %v1328 = vunpack.c.h.b16 %v1247
  %v1329 = vunpack.c.l.b16 %v1248
  %v1330 = vunpack.c.h.b16 %v1248
  %v1331 = vunpack.c.l.b16 %v1249
  %v1332 = vunpack.c.h.b16 %v1249
  %v1333 = vunpack.c.l.b16 %v1250
  %v1334 = vunpack.c.h.b16 %v1250
  %v1335 = vunpack.c.l.b16 %v1251
  %v1336 = vunpack.c.h.b16 %v1251
  %v1337 = vunpack.c.l.b16 %v1252
  %v1338 = vunpack.c.h.b16 %v1252
  %v1339 = vunpack.c.l.b16 %v1253
  %v1340 = vunpack.c.h.b16 %v1253
  %v1341 = vunpack.c.l.b16 %v1254
  %v1342 = vunpack.c.h.b16 %v1254
  %v1343 = vunpack.c.l.b16 %v1255
  %v1344 = vunpack.c.h.b16 %v1255
  %v1345 = vunpack.c.l.b16 %v1256
  %v1346 = vunpack.c.h.b16 %v1256
  %v1347 = vunpack.c.l.b16 %v1257
  %v1348 = vunpack.c.h.b16 %v1257
  %v1349 = vunpack.c.l.b16 %v1258
  %v1350 = vunpack.c.h.b16 %v1258
  %v1351 = vunpack.c.l.b16 %v1259
  %v1352 = vunpack.c.h.b16 %v1259
  %v1353 = vunpack.c.l.b16 %v1260
  %v1354 = vunpack.c.h.b16 %v1260
  %v1355 = vunpack.c.l.b16 %v1261
  %v1356 = vunpack.c.h.b16 %v1261
  %v1357 = vunpack.c.l.b16 %v1262
  %v1358 = vunpack.c.h.b16 %v1262
  %v1359 = vpack.c.b16 %v1299, %v1295
  %v1360 = vpack.c.b16 %v1300, %v1296
  %v1361 = vpack.c.b16 %v1301, %v1297
  %v1362 = vpack.c.b16 %v1302, %v1298
  %v1363 = vpack.c.b16 %v1307, %v1303
  %v1364 = vpack.c.b16 %v1308, %v1304
  %v1365 = vpack.c.b16 %v1309, %v1305
  %v1366 = vpack.c.b16 %v1310, %v1306
  %v1367 = vpack.c.b16 %v1315, %v1311
  %v1368 = vpack.c.b16 %v1316, %v1312
  %v1369 = vpack.c.b16 %v1317, %v1313
  %v1370 = vpack.c.b16 %v1318, %v1314
  %v1371 = vpack.c.b16 %v1323, %v1319
  %v1372 = vpack.c.b16 %v1324, %v1320
  %v1373 = vpack.c.b16 %v1325, %v1321
  %v1374 = vpack.c.b16 %v1326, %v1322
  %v1375 = vpack.c.b16 %v1331, %v1327
  %v1376 = vpack.c.b16 %v1332, %v1328
  %v1377 = vpack.c.b16 %v1333, %v1329
  %v1378 = vpack.c.b16 %v1334, %v1330
  %v1379 = vpack.c.b16 %v1339, %v1335
  %v1380 = vpack.c.b16 %v1340, %v1336
  %v1381 = vpack.c.b16 %v1341, %v1337
  %v1382 = vpack.c.b16 %v1342, %v1338
  %v1383 = vpack.c.b16 %v1347, %v1343
  %v1384 = vpack.c.b16 %v1348, %v1344
  %v1385 = vpack.c.b16 %v1349, %v1345
  %v1386 = vpack.c.b16 %v1350, %v1346
  %v1387 = vpack.c.b16 %v1355, %v1351
  %v1388 = vpack.c.b16 %v1356, %v1352
  %v1389 = vpack.c.b16 %v1357, %v1353
  %v1390 = vpack.c.b16 %v1358, %v1354
  %1423 = vmatprep.subr.bf16.mxu0 %v1360
  %1424 = vmatpush1.bf16.msra.mxu0 %v1359
  %1425 = vmatprep.subr.bf16.mxu0 %v1364
  %1426 = vmatpush1.bf16.msra.mxu0 %v1363
  %1427 = vmatprep.subr.bf16.mxu0 %v1368
  %1428 = vmatpush1.bf16.msra.mxu0 %v1367
  %1429 = vmatprep.subr.bf16.mxu0 %v1372
  %1430 = vmatpush1.bf16.msra.mxu0 %v1371
  %1431 = vmatprep.subr.bf16.mxu0 %v1376
  %1432 = vmatpush1.bf16.msra.mxu0 %v1375
  %1433 = vmatprep.subr.bf16.mxu0 %v1380
  %1434 = vmatpush1.bf16.msra.mxu0 %v1379
  %1435 = vmatprep.subr.bf16.mxu0 %v1384
  %1436 = vmatpush1.bf16.msra.mxu0 %v1383
  %1437 = vmatprep.subr.bf16.mxu0 %v1388
  %1438 = vmatpush1.bf16.msra.mxu0 %v1387
  %1439 = vmatprep.subr.bf16.mxu0 0
  %1440 = vmatpush1.bf16.msra.mxu0 0
  %1441 = vmatprep.subr.bf16.mxu0 0
  %1442 = vmatpush1.bf16.msra.mxu0 0
  %1443 = vmatprep.subr.bf16.mxu0 0
  %1444 = vmatpush1.bf16.msra.mxu0 0
  %1445 = vmatprep.subr.bf16.mxu0 0
  %1446 = vmatpush1.bf16.msra.mxu0 0
  %1447 = vmatprep.subr.bf16.mxu0 0
  %1448 = vmatpush1.bf16.msra.mxu0 0
  %1449 = vmatprep.subr.bf16.mxu0 0
  %1450 = vmatpush1.bf16.msra.mxu0 0
  %1451 = vmatprep.subr.bf16.mxu0 0
  %1452 = vmatpush1.bf16.msra.mxu0 0
  %1453 = vmatprep.subr.bf16.mxu0 0
  %1454 = vmatpush1.bf16.msra.mxu0 0
  %1455 = vmatprep.mubr.bf16.mxu0 0
  %1456 = vmatmul.mubr.bf16.gmra.mrb[0].mxu0 %v1230
  %v1457 = vpop.f32.mrb[0].mxu0
  %v1458 = vadd.f32 0.0, %v1457
  %v1459 = vpop.f32.mrb[0].mxu0
  %v1460 = vadd.f32 0.0, %v1459
  %v1461 = vpop.f32.mrb[0].mxu0
  %v1462 = vpop.f32.mrb[0].mxu0
  %1463 = vdwg.mxu0
  %1464 = vmatprep.subr.bf16.mxu0 %v1362
  %1465 = vmatpush1.bf16.msra.mxu0 %v1361
  %1466 = vmatprep.subr.bf16.mxu0 %v1366
  %1467 = vmatpush1.bf16.msra.mxu0 %v1365
  %1468 = vmatprep.subr.bf16.mxu0 %v1370
  %1469 = vmatpush1.bf16.msra.mxu0 %v1369
  %1470 = vmatprep.subr.bf16.mxu0 %v1374
  %1471 = vmatpush1.bf16.msra.mxu0 %v1373
  %1472 = vmatprep.subr.bf16.mxu0 %v1378
  %1473 = vmatpush1.bf16.msra.mxu0 %v1377
  %1474 = vmatprep.subr.bf16.mxu0 %v1382
  %1475 = vmatpush1.bf16.msra.mxu0 %v1381
  %1476 = vmatprep.subr.bf16.mxu0 %v1386
  %1477 = vmatpush1.bf16.msra.mxu0 %v1385
  %1478 = vmatprep.subr.bf16.mxu0 %v1390
  %1479 = vmatpush1.bf16.msra.mxu0 %v1389
  %1480 = vmatprep.subr.bf16.mxu0 0
  %1481 = vmatpush1.bf16.msra.mxu0 0
  %1482 = vmatprep.subr.bf16.mxu0 0
  %1483 = vmatpush1.bf16.msra.mxu0 0
  %1484 = vmatprep.subr.bf16.mxu0 0
  %1485 = vmatpush1.bf16.msra.mxu0 0
  %1486 = vmatprep.subr.bf16.mxu0 0
  %1487 = vmatpush1.bf16.msra.mxu0 0
  %1488 = vmatprep.subr.bf16.mxu0 0
  %1489 = vmatpush1.bf16.msra.mxu0 0
  %1490 = vmatprep.subr.bf16.mxu0 0
  %1491 = vmatpush1.bf16.msra.mxu0 0
  %1492 = vmatprep.subr.bf16.mxu0 0
  %1493 = vmatpush1.bf16.msra.mxu0 0
  %1494 = vmatprep.subr.bf16.mxu0 0
  %1495 = vmatpush1.bf16.msra.mxu0 0
  %1496 = vmatprep.mubr.bf16.mxu0 0
  %1497 = vmatmul.mubr.bf16.gmra.mrb[0].mxu0 %v1230
  %v1498 = vpop.f32.mrb[0].mxu0
  %v1499 = vadd.f32 0.0, %v1498
  %v1500 = vpop.f32.mrb[0].mxu0
  %v1501 = vadd.f32 0.0, %v1500
  %v1502 = vpop.f32.mrb[0].mxu0
  %v1503 = vpop.f32.mrb[0].mxu0
  %1504 = vdwg.mxu0
  %v1505 = vadd.f32 %v1226, %v1458
  %v1506 = vadd.f32 %v1227, %v1460
  %v1507 = vadd.f32 %v1228, %v1499
  %v1508 = vadd.f32 %v1229, %v1501
  %v1509 = vxor.u32 %v1505, 2147483648
  %v1510 = vmul.f32 %v1509, 1.442695
  %v1511 = vpow.pop %v1510
  %v1512 = vadd.f32 %v1511, 1.0
  %v1513 = vrcp.pop %v1512
  %v1514 = vmul.f32 1.0, %v1513
  %v1515 = vxor.u32 %v1506, 2147483648
  %v1516 = vmul.f32 %v1515, 1.442695
  %v1517 = vpow.pop %v1516
  %v1518 = vadd.f32 %v1517, 1.0
  %v1519 = vrcp.pop %v1518
  %v1520 = vmul.f32 1.0, %v1519
  %v1521 = vtanh.pop %v1507
  %v1522 = vxor.u32 %v1508, 2147483648
  %v1523 = vmul.f32 %v1522, 1.442695
  %v1524 = vpow.pop %v1523
  %v1525 = vadd.f32 %v1524, 1.0
  %v1526 = vrcp.pop %v1525
  %v1527 = vmul.f32 1.0, %v1526
  %v1528 = vmul.f32 %v1520, %v1222
  %v1529 = vmul.f32 %v1514, %v1521
  %v1530 = vadd.f32 %v1528, %v1529
  %v1531 = vtanh.pop %v1530
  %v1532 = vmul.f32 %v1527, %v1531
  %1533 = vst [vmem:[#allocation3 + $0x18] sm:$0xff] %v1532
  %v1534 = vld [vmem:[#allocation2 + $0x80] sm:$0xff]
  %v1535 = vld [vmem:[#allocation2 + $0x88] sm:$0xff]
  %v1536 = vld [vmem:[#allocation2 + $0x90] sm:$0xff]
  %v1537 = vld [vmem:[#allocation2 + $0x98] sm:$0xff]
  %v1538 = vpack.c.bf16 %v1532, %v1532
  %v1539 = vld [vmem:[%s2] sm:$0xff]
  %v1540 = vld [vmem:[%s2 + $0x8] sm:$0xff]
  %v1541 = vld [vmem:[%s2 + $0x10] sm:$0xff]
  %v1542 = vld [vmem:[%s2 + $0x18] sm:$0xff]
  %v1543 = vld [vmem:[%s2 + $0x20] sm:$0xff]
  %v1544 = vld [vmem:[%s2 + $0x28] sm:$0xff]
  %v1545 = vld [vmem:[%s2 + $0x30] sm:$0xff]
  %v1546 = vld [vmem:[%s2 + $0x38] sm:$0xff]
  %v1547 = vld [vmem:[%s2 + $0x40] sm:$0xff]
  %v1548 = vld [vmem:[%s2 + $0x48] sm:$0xff]
  %v1549 = vld [vmem:[%s2 + $0x50] sm:$0xff]
  %v1550 = vld [vmem:[%s2 + $0x58] sm:$0xff]
  %v1551 = vld [vmem:[%s2 + $0x60] sm:$0xff]
  %v1552 = vld [vmem:[%s2 + $0x68] sm:$0xff]
  %v1553 = vld [vmem:[%s2 + $0x70] sm:$0xff]
  %v1554 = vld [vmem:[%s2 + $0x78] sm:$0xff]
  %v1555 = vld [vmem:[%s2 + $0x80] sm:$0xff]
  %v1556 = vld [vmem:[%s2 + $0x88] sm:$0xff]
  %v1557 = vld [vmem:[%s2 + $0x90] sm:$0xff]
  %v1558 = vld [vmem:[%s2 + $0x98] sm:$0xff]
  %v1559 = vld [vmem:[%s2 + $0xa0] sm:$0xff]
  %v1560 = vld [vmem:[%s2 + $0xa8] sm:$0xff]
  %v1561 = vld [vmem:[%s2 + $0xb0] sm:$0xff]
  %v1562 = vld [vmem:[%s2 + $0xb8] sm:$0xff]
  %v1563 = vld [vmem:[%s2 + $0xc0] sm:$0xff]
  %v1564 = vld [vmem:[%s2 + $0xc8] sm:$0xff]
  %v1565 = vld [vmem:[%s2 + $0xd0] sm:$0xff]
  %v1566 = vld [vmem:[%s2 + $0xd8] sm:$0xff]
  %v1567 = vld [vmem:[%s2 + $0xe0] sm:$0xff]
  %v1568 = vld [vmem:[%s2 + $0xe8] sm:$0xff]
  %v1569 = vld [vmem:[%s2 + $0xf0] sm:$0xff]
  %v1570 = vld [vmem:[%s2 + $0xf8] sm:$0xff]
  %v1603 = vunpack.c.l.b16 %v1539
  %v1604 = vunpack.c.h.b16 %v1539
  %v1605 = vunpack.c.l.b16 %v1540
  %v1606 = vunpack.c.h.b16 %v1540
  %v1607 = vunpack.c.l.b16 %v1541
  %v1608 = vunpack.c.h.b16 %v1541
  %v1609 = vunpack.c.l.b16 %v1542
  %v1610 = vunpack.c.h.b16 %v1542
  %v1611 = vunpack.c.l.b16 %v1543
  %v1612 = vunpack.c.h.b16 %v1543
  %v1613 = vunpack.c.l.b16 %v1544
  %v1614 = vunpack.c.h.b16 %v1544
  %v1615 = vunpack.c.l.b16 %v1545
  %v1616 = vunpack.c.h.b16 %v1545
  %v1617 = vunpack.c.l.b16 %v1546
  %v1618 = vunpack.c.h.b16 %v1546
  %v1619 = vunpack.c.l.b16 %v1547
  %v1620 = vunpack.c.h.b16 %v1547
  %v1621 = vunpack.c.l.b16 %v1548
  %v1622 = vunpack.c.h.b16 %v1548
  %v1623 = vunpack.c.l.b16 %v1549
  %v1624 = vunpack.c.h.b16 %v1549
  %v1625 = vunpack.c.l.b16 %v1550
  %v1626 = vunpack.c.h.b16 %v1550
  %v1627 = vunpack.c.l.b16 %v1551
  %v1628 = vunpack.c.h.b16 %v1551
  %v1629 = vunpack.c.l.b16 %v1552
  %v1630 = vunpack.c.h.b16 %v1552
  %v1631 = vunpack.c.l.b16 %v1553
  %v1632 = vunpack.c.h.b16 %v1553
  %v1633 = vunpack.c.l.b16 %v1554
  %v1634 = vunpack.c.h.b16 %v1554
  %v1635 = vunpack.c.l.b16 %v1555
  %v1636 = vunpack.c.h.b16 %v1555
  %v1637 = vunpack.c.l.b16 %v1556
  %v1638 = vunpack.c.h.b16 %v1556
  %v1639 = vunpack.c.l.b16 %v1557
  %v1640 = vunpack.c.h.b16 %v1557
  %v1641 = vunpack.c.l.b16 %v1558
  %v1642 = vunpack.c.h.b16 %v1558
  %v1643 = vunpack.c.l.b16 %v1559
  %v1644 = vunpack.c.h.b16 %v1559
  %v1645 = vunpack.c.l.b16 %v1560
  %v1646 = vunpack.c.h.b16 %v1560
  %v1647 = vunpack.c.l.b16 %v1561
  %v1648 = vunpack.c.h.b16 %v1561
  %v1649 = vunpack.c.l.b16 %v1562
  %v1650 = vunpack.c.h.b16 %v1562
  %v1651 = vunpack.c.l.b16 %v1563
  %v1652 = vunpack.c.h.b16 %v1563
  %v1653 = vunpack.c.l.b16 %v1564
  %v1654 = vunpack.c.h.b16 %v1564
  %v1655 = vunpack.c.l.b16 %v1565
  %v1656 = vunpack.c.h.b16 %v1565
  %v1657 = vunpack.c.l.b16 %v1566
  %v1658 = vunpack.c.h.b16 %v1566
  %v1659 = vunpack.c.l.b16 %v1567
  %v1660 = vunpack.c.h.b16 %v1567
  %v1661 = vunpack.c.l.b16 %v1568
  %v1662 = vunpack.c.h.b16 %v1568
  %v1663 = vunpack.c.l.b16 %v1569
  %v1664 = vunpack.c.h.b16 %v1569
  %v1665 = vunpack.c.l.b16 %v1570
  %v1666 = vunpack.c.h.b16 %v1570
  %v1667 = vpack.c.b16 %v1607, %v1603
  %v1668 = vpack.c.b16 %v1608, %v1604
  %v1669 = vpack.c.b16 %v1609, %v1605
  %v1670 = vpack.c.b16 %v1610, %v1606
  %v1671 = vpack.c.b16 %v1615, %v1611
  %v1672 = vpack.c.b16 %v1616, %v1612
  %v1673 = vpack.c.b16 %v1617, %v1613
  %v1674 = vpack.c.b16 %v1618, %v1614
  %v1675 = vpack.c.b16 %v1623, %v1619
  %v1676 = vpack.c.b16 %v1624, %v1620
  %v1677 = vpack.c.b16 %v1625, %v1621
  %v1678 = vpack.c.b16 %v1626, %v1622
  %v1679 = vpack.c.b16 %v1631, %v1627
  %v1680 = vpack.c.b16 %v1632, %v1628
  %v1681 = vpack.c.b16 %v1633, %v1629
  %v1682 = vpack.c.b16 %v1634, %v1630
  %v1683 = vpack.c.b16 %v1639, %v1635
  %v1684 = vpack.c.b16 %v1640, %v1636
  %v1685 = vpack.c.b16 %v1641, %v1637
  %v1686 = vpack.c.b16 %v1642, %v1638
  %v1687 = vpack.c.b16 %v1647, %v1643
  %v1688 = vpack.c.b16 %v1648, %v1644
  %v1689 = vpack.c.b16 %v1649, %v1645
  %v1690 = vpack.c.b16 %v1650, %v1646
  %v1691 = vpack.c.b16 %v1655, %v1651
  %v1692 = vpack.c.b16 %v1656, %v1652
  %v1693 = vpack.c.b16 %v1657, %v1653
  %v1694 = vpack.c.b16 %v1658, %v1654
  %v1695 = vpack.c.b16 %v1663, %v1659
  %v1696 = vpack.c.b16 %v1664, %v1660
  %v1697 = vpack.c.b16 %v1665, %v1661
  %v1698 = vpack.c.b16 %v1666, %v1662
  %1731 = vmatprep.subr.bf16.mxu0 %v1668
  %1732 = vmatpush1.bf16.msra.mxu0 %v1667
  %1733 = vmatprep.subr.bf16.mxu0 %v1672
  %1734 = vmatpush1.bf16.msra.mxu0 %v1671
  %1735 = vmatprep.subr.bf16.mxu0 %v1676
  %1736 = vmatpush1.bf16.msra.mxu0 %v1675
  %1737 = vmatprep.subr.bf16.mxu0 %v1680
  %1738 = vmatpush1.bf16.msra.mxu0 %v1679
  %1739 = vmatprep.subr.bf16.mxu0 %v1684
  %1740 = vmatpush1.bf16.msra.mxu0 %v1683
  %1741 = vmatprep.subr.bf16.mxu0 %v1688
  %1742 = vmatpush1.bf16.msra.mxu0 %v1687
  %1743 = vmatprep.subr.bf16.mxu0 %v1692
  %1744 = vmatpush1.bf16.msra.mxu0 %v1691
  %1745 = vmatprep.subr.bf16.mxu0 %v1696
  %1746 = vmatpush1.bf16.msra.mxu0 %v1695
  %1747 = vmatprep.subr.bf16.mxu0 0
  %1748 = vmatpush1.bf16.msra.mxu0 0
  %1749 = vmatprep.subr.bf16.mxu0 0
  %1750 = vmatpush1.bf16.msra.mxu0 0
  %1751 = vmatprep.subr.bf16.mxu0 0
  %1752 = vmatpush1.bf16.msra.mxu0 0
  %1753 = vmatprep.subr.bf16.mxu0 0
  %1754 = vmatpush1.bf16.msra.mxu0 0
  %1755 = vmatprep.subr.bf16.mxu0 0
  %1756 = vmatpush1.bf16.msra.mxu0 0
  %1757 = vmatprep.subr.bf16.mxu0 0
  %1758 = vmatpush1.bf16.msra.mxu0 0
  %1759 = vmatprep.subr.bf16.mxu0 0
  %1760 = vmatpush1.bf16.msra.mxu0 0
  %1761 = vmatprep.subr.bf16.mxu0 0
  %1762 = vmatpush1.bf16.msra.mxu0 0
  %1763 = vmatprep.mubr.bf16.mxu0 0
  %1764 = vmatmul.mubr.bf16.gmra.mrb[0].mxu0 %v1538
  %v1765 = vpop.f32.mrb[0].mxu0
  %v1766 = vadd.f32 0.0, %v1765
  %v1767 = vpop.f32.mrb[0].mxu0
  %v1768 = vadd.f32 0.0, %v1767
  %v1769 = vpop.f32.mrb[0].mxu0
  %v1770 = vpop.f32.mrb[0].mxu0
  %1771 = vdwg.mxu0
  %1772 = vmatprep.subr.bf16.mxu0 %v1670
  %1773 = vmatpush1.bf16.msra.mxu0 %v1669
  %1774 = vmatprep.subr.bf16.mxu0 %v1674
  %1775 = vmatpush1.bf16.msra.mxu0 %v1673
  %1776 = vmatprep.subr.bf16.mxu0 %v1678
  %1777 = vmatpush1.bf16.msra.mxu0 %v1677
  %1778 = vmatprep.subr.bf16.mxu0 %v1682
  %1779 = vmatpush1.bf16.msra.mxu0 %v1681
  %1780 = vmatprep.subr.bf16.mxu0 %v1686
  %1781 = vmatpush1.bf16.msra.mxu0 %v1685
  %1782 = vmatprep.subr.bf16.mxu0 %v1690
  %1783 = vmatpush1.bf16.msra.mxu0 %v1689
  %1784 = vmatprep.subr.bf16.mxu0 %v1694
  %1785 = vmatpush1.bf16.msra.mxu0 %v1693
  %1786 = vmatprep.subr.bf16.mxu0 %v1698
  %1787 = vmatpush1.bf16.msra.mxu0 %v1697
  %1788 = vmatprep.subr.bf16.mxu0 0
  %1789 = vmatpush1.bf16.msra.mxu0 0
  %1790 = vmatprep.subr.bf16.mxu0 0
  %1791 = vmatpush1.bf16.msra.mxu0 0
  %1792 = vmatprep.subr.bf16.mxu0 0
  %1793 = vmatpush1.bf16.msra.mxu0 0
  %1794 = vmatprep.subr.bf16.mxu0 0
  %1795 = vmatpush1.bf16.msra.mxu0 0
  %1796 = vmatprep.subr.bf16.mxu0 0
  %1797 = vmatpush1.bf16.msra.mxu0 0
  %1798 = vmatprep.subr.bf16.mxu0 0
  %1799 = vmatpush1.bf16.msra.mxu0 0
  %1800 = vmatprep.subr.bf16.mxu0 0
  %1801 = vmatpush1.bf16.msra.mxu0 0
  %1802 = vmatprep.subr.bf16.mxu0 0
  %1803 = vmatpush1.bf16.msra.mxu0 0
  %1804 = vmatprep.mubr.bf16.mxu0 0
  %1805 = vmatmul.mubr.bf16.gmra.mrb[0].mxu0 %v1538
  %v1806 = vpop.f32.mrb[0].mxu0
  %v1807 = vadd.f32 0.0, %v1806
  %v1808 = vpop.f32.mrb[0].mxu0
  %v1809 = vadd.f32 0.0, %v1808
  %v1810 = vpop.f32.mrb[0].mxu0
  %v1811 = vpop.f32.mrb[0].mxu0
  %1812 = vdwg.mxu0
  %v1813 = vadd.f32 %v1534, %v1766
  %v1814 = vadd.f32 %v1535, %v1768
  %v1815 = vadd.f32 %v1536, %v1807
  %v1816 = vadd.f32 %v1537, %v1809
  %v1817 = vxor.u32 %v1813, 2147483648
  %v1818 = vmul.f32 %v1817, 1.442695
  %v1819 = vpow.pop %v1818
  %v1820 = vadd.f32 %v1819, 1.0
  %v1821 = vrcp.pop %v1820
  %v1822 = vmul.f32 1.0, %v1821
  %v1823 = vxor.u32 %v1814, 2147483648
  %v1824 = vmul.f32 %v1823, 1.442695
  %v1825 = vpow.pop %v1824
  %v1826 = vadd.f32 %v1825, 1.0
  %v1827 = vrcp.pop %v1826
  %v1828 = vmul.f32 1.0, %v1827
  %v1829 = vtanh.pop %v1815
  %v1830 = vxor.u32 %v1816, 2147483648
  %v1831 = vmul.f32 %v1830, 1.442695
  %v1832 = vpow.pop %v1831
  %v1833 = vadd.f32 %v1832, 1.0
  %v1834 = vrcp.pop %v1833
  %v1835 = vmul.f32 1.0, %v1834
  %v1836 = vmul.f32 %v1828, %v1530
  %v1837 = vmul.f32 %v1822, %v1829
  %v1838 = vadd.f32 %v1836, %v1837
  %v1839 = vtanh.pop %v1838
  %v1840 = vmul.f32 %v1835, %v1839
  %1841 = vst [vmem:[#allocation3 + $0x20] sm:$0xff] %v1840
  %v1842 = vld [vmem:[#allocation2 + $0xa0] sm:$0xff]
  %v1843 = vld [vmem:[#allocation2 + $0xa8] sm:$0xff]
  %v1844 = vld [vmem:[#allocation2 + $0xb0] sm:$0xff]
  %v1845 = vld [vmem:[#allocation2 + $0xb8] sm:$0xff]
  %v1846 = vpack.c.bf16 %v1840, %v1840
  %v1847 = vld [vmem:[%s2] sm:$0xff]
  %v1848 = vld [vmem:[%s2 + $0x8] sm:$0xff]
  %v1849 = vld [vmem:[%s2 + $0x10] sm:$0xff]
  %v1850 = vld [vmem:[%s2 + $0x18] sm:$0xff]
  %v1851 = vld [vmem:[%s2 + $0x20] sm:$0xff]
  %v1852 = vld [vmem:[%s2 + $0x28] sm:$0xff]
  %v1853 = vld [vmem:[%s2 + $0x30] sm:$0xff]
  %v1854 = vld [vmem:[%s2 + $0x38] sm:$0xff]
  %v1855 = vld [vmem:[%s2 + $0x40] sm:$0xff]
  %v1856 = vld [vmem:[%s2 + $0x48] sm:$0xff]
  %v1857 = vld [vmem:[%s2 + $0x50] sm:$0xff]
  %v1858 = vld [vmem:[%s2 + $0x58] sm:$0xff]
  %v1859 = vld [vmem:[%s2 + $0x60] sm:$0xff]
  %v1860 = vld [vmem:[%s2 + $0x68] sm:$0xff]
  %v1861 = vld [vmem:[%s2 + $0x70] sm:$0xff]
  %v1862 = vld [vmem:[%s2 + $0x78] sm:$0xff]
  %v1863 = vld [vmem:[%s2 + $0x80] sm:$0xff]
  %v1864 = vld [vmem:[%s2 + $0x88] sm:$0xff]
  %v1865 = vld [vmem:[%s2 + $0x90] sm:$0xff]
  %v1866 = vld [vmem:[%s2 + $0x98] sm:$0xff]
  %v1867 = vld [vmem:[%s2 + $0xa0] sm:$0xff]
  %v1868 = vld [vmem:[%s2 + $0xa8] sm:$0xff]
  %v1869 = vld [vmem:[%s2 + $0xb0] sm:$0xff]
  %v1870 = vld [vmem:[%s2 + $0xb8] sm:$0xff]
  %v1871 = vld [vmem:[%s2 + $0xc0] sm:$0xff]
  %v1872 = vld [vmem:[%s2 + $0xc8] sm:$0xff]
  %v1873 = vld [vmem:[%s2 + $0xd0] sm:$0xff]
  %v1874 = vld [vmem:[%s2 + $0xd8] sm:$0xff]
  %v1875 = vld [vmem:[%s2 + $0xe0] sm:$0xff]
  %v1876 = vld [vmem:[%s2 + $0xe8] sm:$0xff]
  %v1877 = vld [vmem:[%s2 + $0xf0] sm:$0xff]
  %v1878 = vld [vmem:[%s2 + $0xf8] sm:$0xff]
  %v1911 = vunpack.c.l.b16 %v1847
  %v1912 = vunpack.c.h.b16 %v1847
  %v1913 = vunpack.c.l.b16 %v1848
  %v1914 = vunpack.c.h.b16 %v1848
  %v1915 = vunpack.c.l.b16 %v1849
  %v1916 = vunpack.c.h.b16 %v1849
  %v1917 = vunpack.c.l.b16 %v1850
  %v1918 = vunpack.c.h.b16 %v1850
  %v1919 = vunpack.c.l.b16 %v1851
  %v1920 = vunpack.c.h.b16 %v1851
  %v1921 = vunpack.c.l.b16 %v1852
  %v1922 = vunpack.c.h.b16 %v1852
  %v1923 = vunpack.c.l.b16 %v1853
  %v1924 = vunpack.c.h.b16 %v1853
  %v1925 = vunpack.c.l.b16 %v1854
  %v1926 = vunpack.c.h.b16 %v1854
  %v1927 = vunpack.c.l.b16 %v1855
  %v1928 = vunpack.c.h.b16 %v1855
  %v1929 = vunpack.c.l.b16 %v1856
  %v1930 = vunpack.c.h.b16 %v1856
  %v1931 = vunpack.c.l.b16 %v1857
  %v1932 = vunpack.c.h.b16 %v1857
  %v1933 = vunpack.c.l.b16 %v1858
  %v1934 = vunpack.c.h.b16 %v1858
  %v1935 = vunpack.c.l.b16 %v1859
  %v1936 = vunpack.c.h.b16 %v1859
  %v1937 = vunpack.c.l.b16 %v1860
  %v1938 = vunpack.c.h.b16 %v1860
  %v1939 = vunpack.c.l.b16 %v1861
  %v1940 = vunpack.c.h.b16 %v1861
  %v1941 = vunpack.c.l.b16 %v1862
  %v1942 = vunpack.c.h.b16 %v1862
  %v1943 = vunpack.c.l.b16 %v1863
  %v1944 = vunpack.c.h.b16 %v1863
  %v1945 = vunpack.c.l.b16 %v1864
  %v1946 = vunpack.c.h.b16 %v1864
  %v1947 = vunpack.c.l.b16 %v1865
  %v1948 = vunpack.c.h.b16 %v1865
  %v1949 = vunpack.c.l.b16 %v1866
  %v1950 = vunpack.c.h.b16 %v1866
  %v1951 = vunpack.c.l.b16 %v1867
  %v1952 = vunpack.c.h.b16 %v1867
  %v1953 = vunpack.c.l.b16 %v1868
  %v1954 = vunpack.c.h.b16 %v1868
  %v1955 = vunpack.c.l.b16 %v1869
  %v1956 = vunpack.c.h.b16 %v1869
  %v1957 = vunpack.c.l.b16 %v1870
  %v1958 = vunpack.c.h.b16 %v1870
  %v1959 = vunpack.c.l.b16 %v1871
  %v1960 = vunpack.c.h.b16 %v1871
  %v1961 = vunpack.c.l.b16 %v1872
  %v1962 = vunpack.c.h.b16 %v1872
  %v1963 = vunpack.c.l.b16 %v1873
  %v1964 = vunpack.c.h.b16 %v1873
  %v1965 = vunpack.c.l.b16 %v1874
  %v1966 = vunpack.c.h.b16 %v1874
  %v1967 = vunpack.c.l.b16 %v1875
  %v1968 = vunpack.c.h.b16 %v1875
  %v1969 = vunpack.c.l.b16 %v1876
  %v1970 = vunpack.c.h.b16 %v1876
  %v1971 = vunpack.c.l.b16 %v1877
  %v1972 = vunpack.c.h.b16 %v1877
  %v1973 = vunpack.c.l.b16 %v1878
  %v1974 = vunpack.c.h.b16 %v1878
  %v1975 = vpack.c.b16 %v1915, %v1911
  %v1976 = vpack.c.b16 %v1916, %v1912
  %v1977 = vpack.c.b16 %v1917, %v1913
  %v1978 = vpack.c.b16 %v1918, %v1914
  %v1979 = vpack.c.b16 %v1923, %v1919
  %v1980 = vpack.c.b16 %v1924, %v1920
  %v1981 = vpack.c.b16 %v1925, %v1921
  %v1982 = vpack.c.b16 %v1926, %v1922
  %v1983 = vpack.c.b16 %v1931, %v1927
  %v1984 = vpack.c.b16 %v1932, %v1928
  %v1985 = vpack.c.b16 %v1933, %v1929
  %v1986 = vpack.c.b16 %v1934, %v1930
  %v1987 = vpack.c.b16 %v1939, %v1935
  %v1988 = vpack.c.b16 %v1940, %v1936
  %v1989 = vpack.c.b16 %v1941, %v1937
  %v1990 = vpack.c.b16 %v1942, %v1938
  %v1991 = vpack.c.b16 %v1947, %v1943
  %v1992 = vpack.c.b16 %v1948, %v1944
  %v1993 = vpack.c.b16 %v1949, %v1945
  %v1994 = vpack.c.b16 %v1950, %v1946
  %v1995 = vpack.c.b16 %v1955, %v1951
  %v1996 = vpack.c.b16 %v1956, %v1952
  %v1997 = vpack.c.b16 %v1957, %v1953
  %v1998 = vpack.c.b16 %v1958, %v1954
  %v1999 = vpack.c.b16 %v1963, %v1959
  %v2000 = vpack.c.b16 %v1964, %v1960
  %v2001 = vpack.c.b16 %v1965, %v1961
  %v2002 = vpack.c.b16 %v1966, %v1962
  %v2003 = vpack.c.b16 %v1971, %v1967
  %v2004 = vpack.c.b16 %v1972, %v1968
  %v2005 = vpack.c.b16 %v1973, %v1969
  %v2006 = vpack.c.b16 %v1974, %v1970
  %2039 = vmatprep.subr.bf16.mxu0 %v1976
  %2040 = vmatpush1.bf16.msra.mxu0 %v1975
  %2041 = vmatprep.subr.bf16.mxu0 %v1980
  %2042 = vmatpush1.bf16.msra.mxu0 %v1979
  %2043 = vmatprep.subr.bf16.mxu0 %v1984
  %2044 = vmatpush1.bf16.msra.mxu0 %v1983
  %2045 = vmatprep.subr.bf16.mxu0 %v1988
  %2046 = vmatpush1.bf16.msra.mxu0 %v1987
  %2047 = vmatprep.subr.bf16.mxu0 %v1992
  %2048 = vmatpush1.bf16.msra.mxu0 %v1991
  %2049 = vmatprep.subr.bf16.mxu0 %v1996
  %2050 = vmatpush1.bf16.msra.mxu0 %v1995
  %2051 = vmatprep.subr.bf16.mxu0 %v2000
  %2052 = vmatpush1.bf16.msra.mxu0 %v1999
  %2053 = vmatprep.subr.bf16.mxu0 %v2004
  %2054 = vmatpush1.bf16.msra.mxu0 %v2003
  %2055 = vmatprep.subr.bf16.mxu0 0
  %2056 = vmatpush1.bf16.msra.mxu0 0
  %2057 = vmatprep.subr.bf16.mxu0 0
  %2058 = vmatpush1.bf16.msra.mxu0 0
  %2059 = vmatprep.subr.bf16.mxu0 0
  %2060 = vmatpush1.bf16.msra.mxu0 0
  %2061 = vmatprep.subr.bf16.mxu0 0
  %2062 = vmatpush1.bf16.msra.mxu0 0
  %2063 = vmatprep.subr.bf16.mxu0 0
  %2064 = vmatpush1.bf16.msra.mxu0 0
  %2065 = vmatprep.subr.bf16.mxu0 0
  %2066 = vmatpush1.bf16.msra.mxu0 0
  %2067 = vmatprep.subr.bf16.mxu0 0
  %2068 = vmatpush1.bf16.msra.mxu0 0
  %2069 = vmatprep.subr.bf16.mxu0 0
  %2070 = vmatpush1.bf16.msra.mxu0 0
  %2071 = vmatprep.mubr.bf16.mxu0 0
  %2072 = vmatmul.mubr.bf16.gmra.mrb[0].mxu0 %v1846
  %v2073 = vpop.f32.mrb[0].mxu0
  %v2074 = vadd.f32 0.0, %v2073
  %v2075 = vpop.f32.mrb[0].mxu0
  %v2076 = vadd.f32 0.0, %v2075
  %v2077 = vpop.f32.mrb[0].mxu0
  %v2078 = vpop.f32.mrb[0].mxu0
  %2079 = vdwg.mxu0
  %2080 = vmatprep.subr.bf16.mxu0 %v1978
  %2081 = vmatpush1.bf16.msra.mxu0 %v1977
  %2082 = vmatprep.subr.bf16.mxu0 %v1982
  %2083 = vmatpush1.bf16.msra.mxu0 %v1981
  %2084 = vmatprep.subr.bf16.mxu0 %v1986
  %2085 = vmatpush1.bf16.msra.mxu0 %v1985
  %2086 = vmatprep.subr.bf16.mxu0 %v1990
  %2087 = vmatpush1.bf16.msra.mxu0 %v1989
  %2088 = vmatprep.subr.bf16.mxu0 %v1994
  %2089 = vmatpush1.bf16.msra.mxu0 %v1993
  %2090 = vmatprep.subr.bf16.mxu0 %v1998
  %2091 = vmatpush1.bf16.msra.mxu0 %v1997
  %2092 = vmatprep.subr.bf16.mxu0 %v2002
  %2093 = vmatpush1.bf16.msra.mxu0 %v2001
  %2094 = vmatprep.subr.bf16.mxu0 %v2006
  %2095 = vmatpush1.bf16.msra.mxu0 %v2005
  %2096 = vmatprep.subr.bf16.mxu0 0
  %2097 = vmatpush1.bf16.msra.mxu0 0
  %2098 = vmatprep.subr.bf16.mxu0 0
  %2099 = vmatpush1.bf16.msra.mxu0 0
  %2100 = vmatprep.subr.bf16.mxu0 0
  %2101 = vmatpush1.bf16.msra.mxu0 0
  %2102 = vmatprep.subr.bf16.mxu0 0
  %2103 = vmatpush1.bf16.msra.mxu0 0
  %2104 = vmatprep.subr.bf16.mxu0 0
  %2105 = vmatpush1.bf16.msra.mxu0 0
  %2106 = vmatprep.subr.bf16.mxu0 0
  %2107 = vmatpush1.bf16.msra.mxu0 0
  %2108 = vmatprep.subr.bf16.mxu0 0
  %2109 = vmatpush1.bf16.msra.mxu0 0
  %2110 = vmatprep.subr.bf16.mxu0 0
  %2111 = vmatpush1.bf16.msra.mxu0 0
  %2112 = vmatprep.mubr.bf16.mxu0 0
  %2113 = vmatmul.mubr.bf16.gmra.mrb[0].mxu0 %v1846
  %v2114 = vpop.f32.mrb[0].mxu0
  %v2115 = vadd.f32 0.0, %v2114
  %v2116 = vpop.f32.mrb[0].mxu0
  %v2117 = vadd.f32 0.0, %v2116
  %v2118 = vpop.f32.mrb[0].mxu0
  %v2119 = vpop.f32.mrb[0].mxu0
  %2120 = vdwg.mxu0
  %v2121 = vadd.f32 %v1842, %v2074
  %v2122 = vadd.f32 %v1843, %v2076
  %v2123 = vadd.f32 %v1844, %v2115
  %v2124 = vadd.f32 %v1845, %v2117
  %v2125 = vxor.u32 %v2121, 2147483648
  %v2126 = vmul.f32 %v2125, 1.442695
  %v2127 = vpow.pop %v2126
  %v2128 = vadd.f32 %v2127, 1.0
  %v2129 = vrcp.pop %v2128
  %v2130 = vmul.f32 1.0, %v2129
  %v2131 = vxor.u32 %v2122, 2147483648
  %v2132 = vmul.f32 %v2131, 1.442695
  %v2133 = vpow.pop %v2132
  %v2134 = vadd.f32 %v2133, 1.0
  %v2135 = vrcp.pop %v2134
  %v2136 = vmul.f32 1.0, %v2135
  %v2137 = vtanh.pop %v2123
  %v2138 = vxor.u32 %v2124, 2147483648
  %v2139 = vmul.f32 %v2138, 1.442695
  %v2140 = vpow.pop %v2139
  %v2141 = vadd.f32 %v2140, 1.0
  %v2142 = vrcp.pop %v2141
  %v2143 = vmul.f32 1.0, %v2142
  %v2144 = vmul.f32 %v2136, %v1838
  %v2145 = vmul.f32 %v2130, %v2137
  %v2146 = vadd.f32 %v2144, %v2145
  %v2147 = vtanh.pop %v2146
  %v2148 = vmul.f32 %v2143, %v2147
  %2149 = vst [vmem:[#allocation3 + $0x28] sm:$0xff] %v2148
  %v2150 = vld [vmem:[#allocation2 + $0xc0] sm:$0xff]
  %v2151 = vld [vmem:[#allocation2 + $0xc8] sm:$0xff]
  %v2152 = vld [vmem:[#allocation2 + $0xd0] sm:$0xff]
  %v2153 = vld [vmem:[#allocation2 + $0xd8] sm:$0xff]
  %v2154 = vpack.c.bf16 %v2148, %v2148
  %v2155 = vld [vmem:[%s2] sm:$0xff]
  %v2156 = vld [vmem:[%s2 + $0x8] sm:$0xff]
  %v2157 = vld [vmem:[%s2 + $0x10] sm:$0xff]
  %v2158 = vld [vmem:[%s2 + $0x18] sm:$0xff]
  %v2159 = vld [vmem:[%s2 + $0x20] sm:$0xff]
  %v2160 = vld [vmem:[%s2 + $0x28] sm:$0xff]
  %v2161 = vld [vmem:[%s2 + $0x30] sm:$0xff]
  %v2162 = vld [vmem:[%s2 + $0x38] sm:$0xff]
  %v2163 = vld [vmem:[%s2 + $0x40] sm:$0xff]
  %v2164 = vld [vmem:[%s2 + $0x48] sm:$0xff]
  %v2165 = vld [vmem:[%s2 + $0x50] sm:$0xff]
  %v2166 = vld [vmem:[%s2 + $0x58] sm:$0xff]
  %v2167 = vld [vmem:[%s2 + $0x60] sm:$0xff]
  %v2168 = vld [vmem:[%s2 + $0x68] sm:$0xff]
  %v2169 = vld [vmem:[%s2 + $0x70] sm:$0xff]
  %v2170 = vld [vmem:[%s2 + $0x78] sm:$0xff]
  %v2171 = vld [vmem:[%s2 + $0x80] sm:$0xff]
  %v2172 = vld [vmem:[%s2 + $0x88] sm:$0xff]
  %v2173 = vld [vmem:[%s2 + $0x90] sm:$0xff]
  %v2174 = vld [vmem:[%s2 + $0x98] sm:$0xff]
  %v2175 = vld [vmem:[%s2 + $0xa0] sm:$0xff]
  %v2176 = vld [vmem:[%s2 + $0xa8] sm:$0xff]
  %v2177 = vld [vmem:[%s2 + $0xb0] sm:$0xff]
  %v2178 = vld [vmem:[%s2 + $0xb8] sm:$0xff]
  %v2179 = vld [vmem:[%s2 + $0xc0] sm:$0xff]
  %v2180 = vld [vmem:[%s2 + $0xc8] sm:$0xff]
  %v2181 = vld [vmem:[%s2 + $0xd0] sm:$0xff]
  %v2182 = vld [vmem:[%s2 + $0xd8] sm:$0xff]
  %v2183 = vld [vmem:[%s2 + $0xe0] sm:$0xff]
  %v2184 = vld [vmem:[%s2 + $0xe8] sm:$0xff]
  %v2185 = vld [vmem:[%s2 + $0xf0] sm:$0xff]
  %v2186 = vld [vmem:[%s2 + $0xf8] sm:$0xff]
  %v2219 = vunpack.c.l.b16 %v2155
  %v2220 = vunpack.c.h.b16 %v2155
  %v2221 = vunpack.c.l.b16 %v2156
  %v2222 = vunpack.c.h.b16 %v2156
  %v2223 = vunpack.c.l.b16 %v2157
  %v2224 = vunpack.c.h.b16 %v2157
  %v2225 = vunpack.c.l.b16 %v2158
  %v2226 = vunpack.c.h.b16 %v2158
  %v2227 = vunpack.c.l.b16 %v2159
  %v2228 = vunpack.c.h.b16 %v2159
  %v2229 = vunpack.c.l.b16 %v2160
  %v2230 = vunpack.c.h.b16 %v2160
  %v2231 = vunpack.c.l.b16 %v2161
  %v2232 = vunpack.c.h.b16 %v2161
  %v2233 = vunpack.c.l.b16 %v2162
  %v2234 = vunpack.c.h.b16 %v2162
  %v2235 = vunpack.c.l.b16 %v2163
  %v2236 = vunpack.c.h.b16 %v2163
  %v2237 = vunpack.c.l.b16 %v2164
  %v2238 = vunpack.c.h.b16 %v2164
  %v2239 = vunpack.c.l.b16 %v2165
  %v2240 = vunpack.c.h.b16 %v2165
  %v2241 = vunpack.c.l.b16 %v2166
  %v2242 = vunpack.c.h.b16 %v2166
  %v2243 = vunpack.c.l.b16 %v2167
  %v2244 = vunpack.c.h.b16 %v2167
  %v2245 = vunpack.c.l.b16 %v2168
  %v2246 = vunpack.c.h.b16 %v2168
  %v2247 = vunpack.c.l.b16 %v2169
  %v2248 = vunpack.c.h.b16 %v2169
  %v2249 = vunpack.c.l.b16 %v2170
  %v2250 = vunpack.c.h.b16 %v2170
  %v2251 = vunpack.c.l.b16 %v2171
  %v2252 = vunpack.c.h.b16 %v2171
  %v2253 = vunpack.c.l.b16 %v2172
  %v2254 = vunpack.c.h.b16 %v2172
  %v2255 = vunpack.c.l.b16 %v2173
  %v2256 = vunpack.c.h.b16 %v2173
  %v2257 = vunpack.c.l.b16 %v2174
  %v2258 = vunpack.c.h.b16 %v2174
  %v2259 = vunpack.c.l.b16 %v2175
  %v2260 = vunpack.c.h.b16 %v2175
  %v2261 = vunpack.c.l.b16 %v2176
  %v2262 = vunpack.c.h.b16 %v2176
  %v2263 = vunpack.c.l.b16 %v2177
  %v2264 = vunpack.c.h.b16 %v2177
  %v2265 = vunpack.c.l.b16 %v2178
  %v2266 = vunpack.c.h.b16 %v2178
  %v2267 = vunpack.c.l.b16 %v2179
  %v2268 = vunpack.c.h.b16 %v2179
  %v2269 = vunpack.c.l.b16 %v2180
  %v2270 = vunpack.c.h.b16 %v2180
  %v2271 = vunpack.c.l.b16 %v2181
  %v2272 = vunpack.c.h.b16 %v2181
  %v2273 = vunpack.c.l.b16 %v2182
  %v2274 = vunpack.c.h.b16 %v2182
  %v2275 = vunpack.c.l.b16 %v2183
  %v2276 = vunpack.c.h.b16 %v2183
  %v2277 = vunpack.c.l.b16 %v2184
  %v2278 = vunpack.c.h.b16 %v2184
  %v2279 = vunpack.c.l.b16 %v2185
  %v2280 = vunpack.c.h.b16 %v2185
  %v2281 = vunpack.c.l.b16 %v2186
  %v2282 = vunpack.c.h.b16 %v2186
  %v2283 = vpack.c.b16 %v2223, %v2219
  %v2284 = vpack.c.b16 %v2224, %v2220
  %v2285 = vpack.c.b16 %v2225, %v2221
  %v2286 = vpack.c.b16 %v2226, %v2222
  %v2287 = vpack.c.b16 %v2231, %v2227
  %v2288 = vpack.c.b16 %v2232, %v2228
  %v2289 = vpack.c.b16 %v2233, %v2229
  %v2290 = vpack.c.b16 %v2234, %v2230
  %v2291 = vpack.c.b16 %v2239, %v2235
  %v2292 = vpack.c.b16 %v2240, %v2236
  %v2293 = vpack.c.b16 %v2241, %v2237
  %v2294 = vpack.c.b16 %v2242, %v2238
  %v2295 = vpack.c.b16 %v2247, %v2243
  %v2296 = vpack.c.b16 %v2248, %v2244
  %v2297 = vpack.c.b16 %v2249, %v2245
  %v2298 = vpack.c.b16 %v2250, %v2246
  %v2299 = vpack.c.b16 %v2255, %v2251
  %v2300 = vpack.c.b16 %v2256, %v2252
  %v2301 = vpack.c.b16 %v2257, %v2253
  %v2302 = vpack.c.b16 %v2258, %v2254
  %v2303 = vpack.c.b16 %v2263, %v2259
  %v2304 = vpack.c.b16 %v2264, %v2260
  %v2305 = vpack.c.b16 %v2265, %v2261
  %v2306 = vpack.c.b16 %v2266, %v2262
  %v2307 = vpack.c.b16 %v2271, %v2267
  %v2308 = vpack.c.b16 %v2272, %v2268
  %v2309 = vpack.c.b16 %v2273, %v2269
  %v2310 = vpack.c.b16 %v2274, %v2270
  %v2311 = vpack.c.b16 %v2279, %v2275
  %v2312 = vpack.c.b16 %v2280, %v2276
  %v2313 = vpack.c.b16 %v2281, %v2277
  %v2314 = vpack.c.b16 %v2282, %v2278
  %2347 = vmatprep.subr.bf16.mxu0 %v2284
  %2348 = vmatpush1.bf16.msra.mxu0 %v2283
  %2349 = vmatprep.subr.bf16.mxu0 %v2288
  %2350 = vmatpush1.bf16.msra.mxu0 %v2287
  %2351 = vmatprep.subr.bf16.mxu0 %v2292
  %2352 = vmatpush1.bf16.msra.mxu0 %v2291
  %2353 = vmatprep.subr.bf16.mxu0 %v2296
  %2354 = vmatpush1.bf16.msra.mxu0 %v2295
  %2355 = vmatprep.subr.bf16.mxu0 %v2300
  %2356 = vmatpush1.bf16.msra.mxu0 %v2299
  %2357 = vmatprep.subr.bf16.mxu0 %v2304
  %2358 = vmatpush1.bf16.msra.mxu0 %v2303
  %2359 = vmatprep.subr.bf16.mxu0 %v2308
  %2360 = vmatpush1.bf16.msra.mxu0 %v2307
  %2361 = vmatprep.subr.bf16.mxu0 %v2312
  %2362 = vmatpush1.bf16.msra.mxu0 %v2311
  %2363 = vmatprep.subr.bf16.mxu0 0
  %2364 = vmatpush1.bf16.msra.mxu0 0
  %2365 = vmatprep.subr.bf16.mxu0 0
  %2366 = vmatpush1.bf16.msra.mxu0 0
  %2367 = vmatprep.subr.bf16.mxu0 0
  %2368 = vmatpush1.bf16.msra.mxu0 0
  %2369 = vmatprep.subr.bf16.mxu0 0
  %2370 = vmatpush1.bf16.msra.mxu0 0
  %2371 = vmatprep.subr.bf16.mxu0 0
  %2372 = vmatpush1.bf16.msra.mxu0 0
  %2373 = vmatprep.subr.bf16.mxu0 0
  %2374 = vmatpush1.bf16.msra.mxu0 0
  %2375 = vmatprep.subr.bf16.mxu0 0
  %2376 = vmatpush1.bf16.msra.mxu0 0
  %2377 = vmatprep.subr.bf16.mxu0 0
  %2378 = vmatpush1.bf16.msra.mxu0 0
  %2379 = vmatprep.mubr.bf16.mxu0 0
  %2380 = vmatmul.mubr.bf16.gmra.mrb[0].mxu0 %v2154
  %v2381 = vpop.f32.mrb[0].mxu0
  %v2382 = vadd.f32 0.0, %v2381
  %v2383 = vpop.f32.mrb[0].mxu0
  %v2384 = vadd.f32 0.0, %v2383
  %v2385 = vpop.f32.mrb[0].mxu0
  %v2386 = vpop.f32.mrb[0].mxu0
  %2387 = vdwg.mxu0
  %2388 = vmatprep.subr.bf16.mxu0 %v2286
  %2389 = vmatpush1.bf16.msra.mxu0 %v2285
  %2390 = vmatprep.subr.bf16.mxu0 %v2290
  %2391 = vmatpush1.bf16.msra.mxu0 %v2289
  %2392 = vmatprep.subr.bf16.mxu0 %v2294
  %2393 = vmatpush1.bf16.msra.mxu0 %v2293
  %2394 = vmatprep.subr.bf16.mxu0 %v2298
  %2395 = vmatpush1.bf16.msra.mxu0 %v2297
  %2396 = vmatprep.subr.bf16.mxu0 %v2302
  %2397 = vmatpush1.bf16.msra.mxu0 %v2301
  %2398 = vmatprep.subr.bf16.mxu0 %v2306
  %2399 = vmatpush1.bf16.msra.mxu0 %v2305
  %2400 = vmatprep.subr.bf16.mxu0 %v2310
  %2401 = vmatpush1.bf16.msra.mxu0 %v2309
  %2402 = vmatprep.subr.bf16.mxu0 %v2314
  %2403 = vmatpush1.bf16.msra.mxu0 %v2313
  %2404 = vmatprep.subr.bf16.mxu0 0
  %2405 = vmatpush1.bf16.msra.mxu0 0
  %2406 = vmatprep.subr.bf16.mxu0 0
  %2407 = vmatpush1.bf16.msra.mxu0 0
  %2408 = vmatprep.subr.bf16.mxu0 0
  %2409 = vmatpush1.bf16.msra.mxu0 0
  %2410 = vmatprep.subr.bf16.mxu0 0
  %2411 = vmatpush1.bf16.msra.mxu0 0
  %2412 = vmatprep.subr.bf16.mxu0 0
  %2413 = vmatpush1.bf16.msra.mxu0 0
  %2414 = vmatprep.subr.bf16.mxu0 0
  %2415 = vmatpush1.bf16.msra.mxu0 0
  %2416 = vmatprep.subr.bf16.mxu0 0
  %2417 = vmatpush1.bf16.msra.mxu0 0
  %2418 = vmatprep.subr.bf16.mxu0 0
  %2419 = vmatpush1.bf16.msra.mxu0 0
  %2420 = vmatprep.mubr.bf16.mxu0 0
  %2421 = vmatmul.mubr.bf16.gmra.mrb[0].mxu0 %v2154
  %v2422 = vpop.f32.mrb[0].mxu0
  %v2423 = vadd.f32 0.0, %v2422
  %v2424 = vpop.f32.mrb[0].mxu0
  %v2425 = vadd.f32 0.0, %v2424
  %v2426 = vpop.f32.mrb[0].mxu0
  %v2427 = vpop.f32.mrb[0].mxu0
  %2428 = vdwg.mxu0
  %v2429 = vadd.f32 %v2150, %v2382
  %v2430 = vadd.f32 %v2151, %v2384
  %v2431 = vadd.f32 %v2152, %v2423
  %v2432 = vadd.f32 %v2153, %v2425
  %v2433 = vxor.u32 %v2429, 2147483648
  %v2434 = vmul.f32 %v2433, 1.442695
  %v2435 = vpow.pop %v2434
  %v2436 = vadd.f32 %v2435, 1.0
  %v2437 = vrcp.pop %v2436
  %v2438 = vmul.f32 1.0, %v2437
  %v2439 = vxor.u32 %v2430, 2147483648
  %v2440 = vmul.f32 %v2439, 1.442695
  %v2441 = vpow.pop %v2440
  %v2442 = vadd.f32 %v2441, 1.0
  %v2443 = vrcp.pop %v2442
  %v2444 = vmul.f32 1.0, %v2443
  %v2445 = vtanh.pop %v2431
  %v2446 = vxor.u32 %v2432, 2147483648
  %v2447 = vmul.f32 %v2446, 1.442695
  %v2448 = vpow.pop %v2447
  %v2449 = vadd.f32 %v2448, 1.0
  %v2450 = vrcp.pop %v2449
  %v2451 = vmul.f32 1.0, %v2450
  %v2452 = vmul.f32 %v2444, %v2146
  %v2453 = vmul.f32 %v2438, %v2445
  %v2454 = vadd.f32 %v2452, %v2453
  %v2455 = vtanh.pop %v2454
  %v2456 = vmul.f32 %v2451, %v2455
  %2457 = vst [vmem:[#allocation3 + $0x30] sm:$0xff] %v2456
  %v2458 = vld [vmem:[#allocation2 + $0xe0] sm:$0xff]
  %v2459 = vld [vmem:[#allocation2 + $0xe8] sm:$0xff]
  %v2460 = vld [vmem:[#allocation2 + $0xf0] sm:$0xff]
  %v2461 = vld [vmem:[#allocation2 + $0xf8] sm:$0xff]
  %v2462 = vpack.c.bf16 %v2456, %v2456
  %v2463 = vld [vmem:[%s2] sm:$0xff]
  %v2464 = vld [vmem:[%s2 + $0x8] sm:$0xff]
  %v2465 = vld [vmem:[%s2 + $0x10] sm:$0xff]
  %v2466 = vld [vmem:[%s2 + $0x18] sm:$0xff]
  %v2467 = vld [vmem:[%s2 + $0x20] sm:$0xff]
  %v2468 = vld [vmem:[%s2 + $0x28] sm:$0xff]
  %v2469 = vld [vmem:[%s2 + $0x30] sm:$0xff]
  %v2470 = vld [vmem:[%s2 + $0x38] sm:$0xff]
  %v2471 = vld [vmem:[%s2 + $0x40] sm:$0xff]
  %v2472 = vld [vmem:[%s2 + $0x48] sm:$0xff]
  %v2473 = vld [vmem:[%s2 + $0x50] sm:$0xff]
  %v2474 = vld [vmem:[%s2 + $0x58] sm:$0xff]
  %v2475 = vld [vmem:[%s2 + $0x60] sm:$0xff]
  %v2476 = vld [vmem:[%s2 + $0x68] sm:$0xff]
  %v2477 = vld [vmem:[%s2 + $0x70] sm:$0xff]
  %v2478 = vld [vmem:[%s2 + $0x78] sm:$0xff]
  %v2479 = vld [vmem:[%s2 + $0x80] sm:$0xff]
  %v2480 = vld [vmem:[%s2 + $0x88] sm:$0xff]
  %v2481 = vld [vmem:[%s2 + $0x90] sm:$0xff]
  %v2482 = vld [vmem:[%s2 + $0x98] sm:$0xff]
  %v2483 = vld [vmem:[%s2 + $0xa0] sm:$0xff]
  %v2484 = vld [vmem:[%s2 + $0xa8] sm:$0xff]
  %v2485 = vld [vmem:[%s2 + $0xb0] sm:$0xff]
  %v2486 = vld [vmem:[%s2 + $0xb8] sm:$0xff]
  %v2487 = vld [vmem:[%s2 + $0xc0] sm:$0xff]
  %v2488 = vld [vmem:[%s2 + $0xc8] sm:$0xff]
  %v2489 = vld [vmem:[%s2 + $0xd0] sm:$0xff]
  %v2490 = vld [vmem:[%s2 + $0xd8] sm:$0xff]
  %v2491 = vld [vmem:[%s2 + $0xe0] sm:$0xff]
  %v2492 = vld [vmem:[%s2 + $0xe8] sm:$0xff]
  %v2493 = vld [vmem:[%s2 + $0xf0] sm:$0xff]
  %v2494 = vld [vmem:[%s2 + $0xf8] sm:$0xff]
  %v2527 = vunpack.c.l.b16 %v2463
  %v2528 = vunpack.c.h.b16 %v2463
  %v2529 = vunpack.c.l.b16 %v2464
  %v2530 = vunpack.c.h.b16 %v2464
  %v2531 = vunpack.c.l.b16 %v2465
  %v2532 = vunpack.c.h.b16 %v2465
  %v2533 = vunpack.c.l.b16 %v2466
  %v2534 = vunpack.c.h.b16 %v2466
  %v2535 = vunpack.c.l.b16 %v2467
  %v2536 = vunpack.c.h.b16 %v2467
  %v2537 = vunpack.c.l.b16 %v2468
  %v2538 = vunpack.c.h.b16 %v2468
  %v2539 = vunpack.c.l.b16 %v2469
  %v2540 = vunpack.c.h.b16 %v2469
  %v2541 = vunpack.c.l.b16 %v2470
  %v2542 = vunpack.c.h.b16 %v2470
  %v2543 = vunpack.c.l.b16 %v2471
  %v2544 = vunpack.c.h.b16 %v2471
  %v2545 = vunpack.c.l.b16 %v2472
  %v2546 = vunpack.c.h.b16 %v2472
  %v2547 = vunpack.c.l.b16 %v2473
  %v2548 = vunpack.c.h.b16 %v2473
  %v2549 = vunpack.c.l.b16 %v2474
  %v2550 = vunpack.c.h.b16 %v2474
  %v2551 = vunpack.c.l.b16 %v2475
  %v2552 = vunpack.c.h.b16 %v2475
  %v2553 = vunpack.c.l.b16 %v2476
  %v2554 = vunpack.c.h.b16 %v2476
  %v2555 = vunpack.c.l.b16 %v2477
  %v2556 = vunpack.c.h.b16 %v2477
  %v2557 = vunpack.c.l.b16 %v2478
  %v2558 = vunpack.c.h.b16 %v2478
  %v2559 = vunpack.c.l.b16 %v2479
  %v2560 = vunpack.c.h.b16 %v2479
  %v2561 = vunpack.c.l.b16 %v2480
  %v2562 = vunpack.c.h.b16 %v2480
  %v2563 = vunpack.c.l.b16 %v2481
  %v2564 = vunpack.c.h.b16 %v2481
  %v2565 = vunpack.c.l.b16 %v2482
  %v2566 = vunpack.c.h.b16 %v2482
  %v2567 = vunpack.c.l.b16 %v2483
  %v2568 = vunpack.c.h.b16 %v2483
  %v2569 = vunpack.c.l.b16 %v2484
  %v2570 = vunpack.c.h.b16 %v2484
  %v2571 = vunpack.c.l.b16 %v2485
  %v2572 = vunpack.c.h.b16 %v2485
  %v2573 = vunpack.c.l.b16 %v2486
  %v2574 = vunpack.c.h.b16 %v2486
  %v2575 = vunpack.c.l.b16 %v2487
  %v2576 = vunpack.c.h.b16 %v2487
  %v2577 = vunpack.c.l.b16 %v2488
  %v2578 = vunpack.c.h.b16 %v2488
  %v2579 = vunpack.c.l.b16 %v2489
  %v2580 = vunpack.c.h.b16 %v2489
  %v2581 = vunpack.c.l.b16 %v2490
  %v2582 = vunpack.c.h.b16 %v2490
  %v2583 = vunpack.c.l.b16 %v2491
  %v2584 = vunpack.c.h.b16 %v2491
  %v2585 = vunpack.c.l.b16 %v2492
  %v2586 = vunpack.c.h.b16 %v2492
  %v2587 = vunpack.c.l.b16 %v2493
  %v2588 = vunpack.c.h.b16 %v2493
  %v2589 = vunpack.c.l.b16 %v2494
  %v2590 = vunpack.c.h.b16 %v2494
  %v2591 = vpack.c.b16 %v2531, %v2527
  %v2592 = vpack.c.b16 %v2532, %v2528
  %v2593 = vpack.c.b16 %v2533, %v2529
  %v2594 = vpack.c.b16 %v2534, %v2530
  %v2595 = vpack.c.b16 %v2539, %v2535
  %v2596 = vpack.c.b16 %v2540, %v2536
  %v2597 = vpack.c.b16 %v2541, %v2537
  %v2598 = vpack.c.b16 %v2542, %v2538
  %v2599 = vpack.c.b16 %v2547, %v2543
  %v2600 = vpack.c.b16 %v2548, %v2544
  %v2601 = vpack.c.b16 %v2549, %v2545
  %v2602 = vpack.c.b16 %v2550, %v2546
  %v2603 = vpack.c.b16 %v2555, %v2551
  %v2604 = vpack.c.b16 %v2556, %v2552
  %v2605 = vpack.c.b16 %v2557, %v2553
  %v2606 = vpack.c.b16 %v2558, %v2554
  %v2607 = vpack.c.b16 %v2563, %v2559
  %v2608 = vpack.c.b16 %v2564, %v2560
  %v2609 = vpack.c.b16 %v2565, %v2561
  %v2610 = vpack.c.b16 %v2566, %v2562
  %v2611 = vpack.c.b16 %v2571, %v2567
  %v2612 = vpack.c.b16 %v2572, %v2568
  %v2613 = vpack.c.b16 %v2573, %v2569
  %v2614 = vpack.c.b16 %v2574, %v2570
  %v2615 = vpack.c.b16 %v2579, %v2575
  %v2616 = vpack.c.b16 %v2580, %v2576
  %v2617 = vpack.c.b16 %v2581, %v2577
  %v2618 = vpack.c.b16 %v2582, %v2578
  %v2619 = vpack.c.b16 %v2587, %v2583
  %v2620 = vpack.c.b16 %v2588, %v2584
  %v2621 = vpack.c.b16 %v2589, %v2585
  %v2622 = vpack.c.b16 %v2590, %v2586
  %2655 = vmatprep.subr.bf16.mxu0 %v2592
  %2656 = vmatpush1.bf16.msra.mxu0 %v2591
  %2657 = vmatprep.subr.bf16.mxu0 %v2596
  %2658 = vmatpush1.bf16.msra.mxu0 %v2595
  %2659 = vmatprep.subr.bf16.mxu0 %v2600
  %2660 = vmatpush1.bf16.msra.mxu0 %v2599
  %2661 = vmatprep.subr.bf16.mxu0 %v2604
  %2662 = vmatpush1.bf16.msra.mxu0 %v2603
  %2663 = vmatprep.subr.bf16.mxu0 %v2608
  %2664 = vmatpush1.bf16.msra.mxu0 %v2607
  %2665 = vmatprep.subr.bf16.mxu0 %v2612
  %2666 = vmatpush1.bf16.msra.mxu0 %v2611
  %2667 = vmatprep.subr.bf16.mxu0 %v2616
  %2668 = vmatpush1.bf16.msra.mxu0 %v2615
  %2669 = vmatprep.subr.bf16.mxu0 %v2620
  %2670 = vmatpush1.bf16.msra.mxu0 %v2619
  %2671 = vmatprep.subr.bf16.mxu0 0
  %2672 = vmatpush1.bf16.msra.mxu0 0
  %2673 = vmatprep.subr.bf16.mxu0 0
  %2674 = vmatpush1.bf16.msra.mxu0 0
  %2675 = vmatprep.subr.bf16.mxu0 0
  %2676 = vmatpush1.bf16.msra.mxu0 0
  %2677 = vmatprep.subr.bf16.mxu0 0
  %2678 = vmatpush1.bf16.msra.mxu0 0
  %2679 = vmatprep.subr.bf16.mxu0 0
  %2680 = vmatpush1.bf16.msra.mxu0 0
  %2681 = vmatprep.subr.bf16.mxu0 0
  %2682 = vmatpush1.bf16.msra.mxu0 0
  %2683 = vmatprep.subr.bf16.mxu0 0
  %2684 = vmatpush1.bf16.msra.mxu0 0
  %2685 = vmatprep.subr.bf16.mxu0 0
  %2686 = vmatpush1.bf16.msra.mxu0 0
  %2687 = vmatprep.mubr.bf16.mxu0 0
  %2688 = vmatmul.mubr.bf16.gmra.mrb[0].mxu0 %v2462
  %v2689 = vpop.f32.mrb[0].mxu0
  %v2690 = vadd.f32 0.0, %v2689
  %v2691 = vpop.f32.mrb[0].mxu0
  %v2692 = vadd.f32 0.0, %v2691
  %v2693 = vpop.f32.mrb[0].mxu0
  %v2694 = vpop.f32.mrb[0].mxu0
  %2695 = vdwg.mxu0
  %2696 = vmatprep.subr.bf16.mxu0 %v2594
  %2697 = vmatpush1.bf16.msra.mxu0 %v2593
  %2698 = vmatprep.subr.bf16.mxu0 %v2598
  %2699 = vmatpush1.bf16.msra.mxu0 %v2597
  %2700 = vmatprep.subr.bf16.mxu0 %v2602
  %2701 = vmatpush1.bf16.msra.mxu0 %v2601
  %2702 = vmatprep.subr.bf16.mxu0 %v2606
  %2703 = vmatpush1.bf16.msra.mxu0 %v2605
  %2704 = vmatprep.subr.bf16.mxu0 %v2610
  %2705 = vmatpush1.bf16.msra.mxu0 %v2609
  %2706 = vmatprep.subr.bf16.mxu0 %v2614
  %2707 = vmatpush1.bf16.msra.mxu0 %v2613
  %2708 = vmatprep.subr.bf16.mxu0 %v2618
  %2709 = vmatpush1.bf16.msra.mxu0 %v2617
  %2710 = vmatprep.subr.bf16.mxu0 %v2622
  %2711 = vmatpush1.bf16.msra.mxu0 %v2621
  %2712 = vmatprep.subr.bf16.mxu0 0
  %2713 = vmatpush1.bf16.msra.mxu0 0
  %2714 = vmatprep.subr.bf16.mxu0 0
  %2715 = vmatpush1.bf16.msra.mxu0 0
  %2716 = vmatprep.subr.bf16.mxu0 0
  %2717 = vmatpush1.bf16.msra.mxu0 0
  %2718 = vmatprep.subr.bf16.mxu0 0
  %2719 = vmatpush1.bf16.msra.mxu0 0
  %2720 = vmatprep.subr.bf16.mxu0 0
  %2721 = vmatpush1.bf16.msra.mxu0 0
  %2722 = vmatprep.subr.bf16.mxu0 0
  %2723 = vmatpush1.bf16.msra.mxu0 0
  %2724 = vmatprep.subr.bf16.mxu0 0
  %2725 = vmatpush1.bf16.msra.mxu0 0
  %2726 = vmatprep.subr.bf16.mxu0 0
  %2727 = vmatpush1.bf16.msra.mxu0 0
  %2728 = vmatprep.mubr.bf16.mxu0 0
  %2729 = vmatmul.mubr.bf16.gmra.mrb[0].mxu0 %v2462
  %v2730 = vpop.f32.mrb[0].mxu0
  %v2731 = vadd.f32 0.0, %v2730
  %v2732 = vpop.f32.mrb[0].mxu0
  %v2733 = vadd.f32 0.0, %v2732
  %v2734 = vpop.f32.mrb[0].mxu0
  %v2735 = vpop.f32.mrb[0].mxu0
  %2736 = vdwg.mxu0
  %v2737 = vadd.f32 %v2458, %v2690
  %v2738 = vadd.f32 %v2459, %v2692
  %v2739 = vadd.f32 %v2460, %v2731
  %v2740 = vadd.f32 %v2461, %v2733
  %v2741 = vxor.u32 %v2737, 2147483648
  %v2742 = vmul.f32 %v2741, 1.442695
  %v2743 = vpow.pop %v2742
  %v2744 = vadd.f32 %v2743, 1.0
  %v2745 = vrcp.pop %v2744
  %v2746 = vmul.f32 1.0, %v2745
  %v2747 = vxor.u32 %v2738, 2147483648
  %v2748 = vmul.f32 %v2747, 1.442695
  %v2749 = vpow.pop %v2748
  %v2750 = vadd.f32 %v2749, 1.0
  %v2751 = vrcp.pop %v2750
  %v2752 = vmul.f32 1.0, %v2751
  %v2753 = vtanh.pop %v2739
  %v2754 = vxor.u32 %v2740, 2147483648
  %v2755 = vmul.f32 %v2754, 1.442695
  %v2756 = vpow.pop %v2755
  %v2757 = vadd.f32 %v2756, 1.0
  %v2758 = vrcp.pop %v2757
  %v2759 = vmul.f32 1.0, %v2758
  %v2760 = vmul.f32 %v2752, %v2454
  %v2761 = vmul.f32 %v2746, %v2753
  %v2762 = vadd.f32 %v2760, %v2761
  %v2763 = vtanh.pop %v2762
  %v2764 = vmul.f32 %v2759, %v2763
  %2765 = vst [vmem:[#allocation3 + $0x38] sm:$0xff] %v2764
  %2766 = vst [vmem:[#allocation5] sm:$0xff] %v2764
  %2767 = vst [vmem:[#allocation6] sm:$0xff] %v2762
  %v2768 = vld [vmem:[#allocation3] sm:$0xff]
  %v2769 = vld [vmem:[#allocation3 + $0x8] sm:$0xff]
  %v2770 = vld [vmem:[#allocation3 + $0x10] sm:$0xff]
  %v2771 = vld [vmem:[#allocation3 + $0x18] sm:$0xff]
  %v2772 = vld [vmem:[#allocation3 + $0x20] sm:$0xff]
  %v2773 = vld [vmem:[#allocation3 + $0x28] sm:$0xff]
  %v2774 = vld [vmem:[#allocation3 + $0x30] sm:$0xff]
  %v2775 = vld [vmem:[#allocation3 + $0x38] sm:$0xff]
  %v2776 = vpack.c.bf16 %v2769, %v2768
  %v2777 = vpack.c.bf16 %v2771, %v2770
  %v2778 = vpack.c.bf16 %v2773, %v2772
  %v2779 = vpack.c.bf16 %v2775, %v2774
  %v2780 = vld [vmem:[%s4] sm:$0xff]
  %v2781 = vld [vmem:[%s4 + $0x8] sm:$0xff]
  %v2782 = vld [vmem:[%s4 + $0x10] sm:$0xff]
  %v2783 = vld [vmem:[%s4 + $0x18] sm:$0xff]
  %v2784 = vld [vmem:[%s4 + $0x20] sm:$0xff]
  %v2785 = vld [vmem:[%s4 + $0x28] sm:$0xff]
  %v2786 = vld [vmem:[%s4 + $0x30] sm:$0xff]
  %v2787 = vld [vmem:[%s4 + $0x38] sm:$0xff]
  %v2788 = vld [vmem:[%s4 + $0x40] sm:$0xff]
  %v2789 = vld [vmem:[%s4 + $0x48] sm:$0xff]
  %v2790 = vld [vmem:[%s4 + $0x50] sm:$0xff]
  %v2791 = vld [vmem:[%s4 + $0x58] sm:$0xff]
  %v2792 = vld [vmem:[%s4 + $0x60] sm:$0xff]
  %v2793 = vld [vmem:[%s4 + $0x68] sm:$0xff]
  %v2794 = vld [vmem:[%s4 + $0x70] sm:$0xff]
  %v2795 = vld [vmem:[%s4 + $0x78] sm:$0xff]
  %v2796 = vld [vmem:[%s4 + $0x80] sm:$0xff]
  %v2797 = vld [vmem:[%s4 + $0x88] sm:$0xff]
  %v2798 = vld [vmem:[%s4 + $0x90] sm:$0xff]
  %v2799 = vld [vmem:[%s4 + $0x98] sm:$0xff]
  %v2800 = vld [vmem:[%s4 + $0xa0] sm:$0xff]
  %v2801 = vld [vmem:[%s4 + $0xa8] sm:$0xff]
  %v2802 = vld [vmem:[%s4 + $0xb0] sm:$0xff]
  %v2803 = vld [vmem:[%s4 + $0xb8] sm:$0xff]
  %v2804 = vld [vmem:[%s4 + $0xc0] sm:$0xff]
  %v2805 = vld [vmem:[%s4 + $0xc8] sm:$0xff]
  %v2806 = vld [vmem:[%s4 + $0xd0] sm:$0xff]
  %v2807 = vld [vmem:[%s4 + $0xd8] sm:$0xff]
  %v2808 = vld [vmem:[%s4 + $0xe0] sm:$0xff]
  %v2809 = vld [vmem:[%s4 + $0xe8] sm:$0xff]
  %v2810 = vld [vmem:[%s4 + $0xf0] sm:$0xff]
  %v2811 = vld [vmem:[%s4 + $0xf8] sm:$0xff]
  %v2812 = vld [vmem:[%s6] sm:$0xf]
  %v2814 = vlaneseq
  %v2815 = vshrl.u32 %v2814, 7
  %v2816 = vsub.s32 0, %v2815
  %v2817 = vrot.slane %v2812, %v2816
  %v2818 = vlaneseq
  %v2819 = vshrl.u32 %v2818, 7
  %v2820 = vsub.s32 1, %v2819
  %v2821 = vrot.slane %v2812, %v2820
  %v2822 = vlaneseq
  %v2823 = vshrl.u32 %v2822, 7
  %v2824 = vsub.s32 2, %v2823
  %v2825 = vrot.slane %v2812, %v2824
  %v2826 = vlaneseq
  %v2827 = vshrl.u32 %v2826, 7
  %v2828 = vsub.s32 3, %v2827
  %v2829 = vrot.slane %v2812, %v2828
  %v2866 = vunpack.c.l.b16 %v2780
  %v2867 = vunpack.c.h.b16 %v2780
  %v2868 = vunpack.c.l.b16 %v2781
  %v2869 = vunpack.c.h.b16 %v2781
  %v2870 = vunpack.c.l.b16 %v2782
  %v2871 = vunpack.c.h.b16 %v2782
  %v2872 = vunpack.c.l.b16 %v2783
  %v2873 = vunpack.c.h.b16 %v2783
  %v2874 = vunpack.c.l.b16 %v2784
  %v2875 = vunpack.c.h.b16 %v2784
  %v2876 = vunpack.c.l.b16 %v2785
  %v2877 = vunpack.c.h.b16 %v2785
  %v2878 = vunpack.c.l.b16 %v2786
  %v2879 = vunpack.c.h.b16 %v2786
  %v2880 = vunpack.c.l.b16 %v2787
  %v2881 = vunpack.c.h.b16 %v2787
  %v2882 = vunpack.c.l.b16 %v2788
  %v2883 = vunpack.c.h.b16 %v2788
  %v2884 = vunpack.c.l.b16 %v2789
  %v2885 = vunpack.c.h.b16 %v2789
  %v2886 = vunpack.c.l.b16 %v2790
  %v2887 = vunpack.c.h.b16 %v2790
  %v2888 = vunpack.c.l.b16 %v2791
  %v2889 = vunpack.c.h.b16 %v2791
  %v2890 = vunpack.c.l.b16 %v2792
  %v2891 = vunpack.c.h.b16 %v2792
  %v2892 = vunpack.c.l.b16 %v2793
  %v2893 = vunpack.c.h.b16 %v2793
  %v2894 = vunpack.c.l.b16 %v2794
  %v2895 = vunpack.c.h.b16 %v2794
  %v2896 = vunpack.c.l.b16 %v2795
  %v2897 = vunpack.c.h.b16 %v2795
  %v2898 = vunpack.c.l.b16 %v2796
  %v2899 = vunpack.c.h.b16 %v2796
  %v2900 = vunpack.c.l.b16 %v2797
  %v2901 = vunpack.c.h.b16 %v2797
  %v2902 = vunpack.c.l.b16 %v2798
  %v2903 = vunpack.c.h.b16 %v2798
  %v2904 = vunpack.c.l.b16 %v2799
  %v2905 = vunpack.c.h.b16 %v2799
  %v2906 = vunpack.c.l.b16 %v2800
  %v2907 = vunpack.c.h.b16 %v2800
  %v2908 = vunpack.c.l.b16 %v2801
  %v2909 = vunpack.c.h.b16 %v2801
  %v2910 = vunpack.c.l.b16 %v2802
  %v2911 = vunpack.c.h.b16 %v2802
  %v2912 = vunpack.c.l.b16 %v2803
  %v2913 = vunpack.c.h.b16 %v2803
  %v2914 = vunpack.c.l.b16 %v2804
  %v2915 = vunpack.c.h.b16 %v2804
  %v2916 = vunpack.c.l.b16 %v2805
  %v2917 = vunpack.c.h.b16 %v2805
  %v2918 = vunpack.c.l.b16 %v2806
  %v2919 = vunpack.c.h.b16 %v2806
  %v2920 = vunpack.c.l.b16 %v2807
  %v2921 = vunpack.c.h.b16 %v2807
  %v2922 = vunpack.c.l.b16 %v2808
  %v2923 = vunpack.c.h.b16 %v2808
  %v2924 = vunpack.c.l.b16 %v2809
  %v2925 = vunpack.c.h.b16 %v2809
  %v2926 = vunpack.c.l.b16 %v2810
  %v2927 = vunpack.c.h.b16 %v2810
  %v2928 = vunpack.c.l.b16 %v2811
  %v2929 = vunpack.c.h.b16 %v2811
  %v2930 = vpack.c.b16 %v2870, %v2866
  %v2931 = vpack.c.b16 %v2871, %v2867
  %v2932 = vpack.c.b16 %v2872, %v2868
  %v2933 = vpack.c.b16 %v2873, %v2869
  %v2934 = vpack.c.b16 %v2878, %v2874
  %v2935 = vpack.c.b16 %v2879, %v2875
  %v2936 = vpack.c.b16 %v2880, %v2876
  %v2937 = vpack.c.b16 %v2881, %v2877
  %v2938 = vpack.c.b16 %v2886, %v2882
  %v2939 = vpack.c.b16 %v2887, %v2883
  %v2940 = vpack.c.b16 %v2888, %v2884
  %v2941 = vpack.c.b16 %v2889, %v2885
  %v2942 = vpack.c.b16 %v2894, %v2890
  %v2943 = vpack.c.b16 %v2895, %v2891
  %v2944 = vpack.c.b16 %v2896, %v2892
  %v2945 = vpack.c.b16 %v2897, %v2893
  %v2946 = vpack.c.b16 %v2902, %v2898
  %v2947 = vpack.c.b16 %v2903, %v2899
  %v2948 = vpack.c.b16 %v2904, %v2900
  %v2949 = vpack.c.b16 %v2905, %v2901
  %v2950 = vpack.c.b16 %v2910, %v2906
  %v2951 = vpack.c.b16 %v2911, %v2907
  %v2952 = vpack.c.b16 %v2912, %v2908
  %v2953 = vpack.c.b16 %v2913, %v2909
  %v2954 = vpack.c.b16 %v2918, %v2914
  %v2955 = vpack.c.b16 %v2919, %v2915
  %v2956 = vpack.c.b16 %v2920, %v2916
  %v2957 = vpack.c.b16 %v2921, %v2917
  %v2958 = vpack.c.b16 %v2926, %v2922
  %v2959 = vpack.c.b16 %v2927, %v2923
  %v2960 = vpack.c.b16 %v2928, %v2924
  %v2961 = vpack.c.b16 %v2929, %v2925
  %2994 = vmatprep.subr.bf16.mxu0 %v2931
  %2995 = vmatpush1.bf16.msra.mxu0 %v2930
  %2996 = vmatprep.subr.bf16.mxu0 %v2935
  %2997 = vmatpush1.bf16.msra.mxu0 %v2934
  %2998 = vmatprep.subr.bf16.mxu0 %v2939
  %2999 = vmatpush1.bf16.msra.mxu0 %v2938
  %3000 = vmatprep.subr.bf16.mxu0 %v2943
  %3001 = vmatpush1.bf16.msra.mxu0 %v2942
  %3002 = vmatprep.subr.bf16.mxu0 %v2947
  %3003 = vmatpush1.bf16.msra.mxu0 %v2946
  %3004 = vmatprep.subr.bf16.mxu0 %v2951
  %3005 = vmatpush1.bf16.msra.mxu0 %v2950
  %3006 = vmatprep.subr.bf16.mxu0 %v2955
  %3007 = vmatpush1.bf16.msra.mxu0 %v2954
  %3008 = vmatprep.subr.bf16.mxu0 %v2959
  %3009 = vmatpush1.bf16.msra.mxu0 %v2958
  %3010 = vmatprep.subr.bf16.mxu0 0
  %3011 = vmatpush1.bf16.msra.mxu0 0
  %3012 = vmatprep.subr.bf16.mxu0 0
  %3013 = vmatpush1.bf16.msra.mxu0 0
  %3014 = vmatprep.subr.bf16.mxu0 0
  %3015 = vmatpush1.bf16.msra.mxu0 0
  %3016 = vmatprep.subr.bf16.mxu0 0
  %3017 = vmatpush1.bf16.msra.mxu0 0
  %3018 = vmatprep.subr.bf16.mxu0 0
  %3019 = vmatpush1.bf16.msra.mxu0 0
  %3020 = vmatprep.subr.bf16.mxu0 0
  %3021 = vmatpush1.bf16.msra.mxu0 0
  %3022 = vmatprep.subr.bf16.mxu0 0
  %3023 = vmatpush1.bf16.msra.mxu0 0
  %3024 = vmatprep.subr.bf16.mxu0 0
  %3025 = vmatpush1.bf16.msra.mxu0 0
  %3026 = vmatprep.mubr.bf16.mxu0 0
  %3027 = vmatmul.mubr.bf16.gmra.mrb[0].mxu0 %v2776
  %v3028 = vpop.f32.mrb[0].mxu0
  %v3029 = vadd.f32 %v2817, %v3028
  %v3030 = vpop.f32.mrb[0].mxu0
  %v3031 = vadd.f32 %v2821, %v3030
  %v3032 = vpop.f32.mrb[0].mxu0
  %v3033 = vadd.f32 %v2817, %v3032
  %v3034 = vpop.f32.mrb[0].mxu0
  %v3035 = vadd.f32 %v2821, %v3034
  %3036 = vmatprep.mubr.bf16.mxu0 0
  %3037 = vmatmul.mubr.bf16.gmra.mrb[0].mxu0 %v2777
  %v3038 = vpop.f32.mrb[0].mxu0
  %v3039 = vadd.f32 %v2817, %v3038
  %v3040 = vpop.f32.mrb[0].mxu0
  %v3041 = vadd.f32 %v2821, %v3040
  %v3042 = vpop.f32.mrb[0].mxu0
  %v3043 = vadd.f32 %v2817, %v3042
  %v3044 = vpop.f32.mrb[0].mxu0
  %v3045 = vadd.f32 %v2821, %v3044
  %3046 = vmatprep.mubr.bf16.mxu0 0
  %3047 = vmatmul.mubr.bf16.gmra.mrb[0].mxu0 %v2778
  %v3048 = vpop.f32.mrb[0].mxu0
  %v3049 = vadd.f32 %v2817, %v3048
  %v3050 = vpop.f32.mrb[0].mxu0
  %v3051 = vadd.f32 %v2821, %v3050
  %v3052 = vpop.f32.mrb[0].mxu0
  %v3053 = vadd.f32 %v2817, %v3052
  %v3054 = vpop.f32.mrb[0].mxu0
  %v3055 = vadd.f32 %v2821, %v3054
  %3056 = vmatprep.mubr.bf16.mxu0 0
  %3057 = vmatmul.mubr.bf16.gmra.mrb[0].mxu0 %v2779
  %v3058 = vpop.f32.mrb[0].mxu0
  %v3059 = vadd.f32 %v2817, %v3058
  %v3060 = vpop.f32.mrb[0].mxu0
  %v3061 = vadd.f32 %v2821, %v3060
  %v3062 = vpop.f32.mrb[0].mxu0
  %v3063 = vadd.f32 %v2817, %v3062
  %v3064 = vpop.f32.mrb[0].mxu0
  %v3065 = vadd.f32 %v2821, %v3064
  %3066 = vdwg.mxu0
  %3067 = vmatprep.subr.bf16.mxu0 %v2933
  %3068 = vmatpush1.bf16.msra.mxu0 %v2932
  %3069 = vmatprep.subr.bf16.mxu0 %v2937
  %3070 = vmatpush1.bf16.msra.mxu0 %v2936
  %3071 = vmatprep.subr.bf16.mxu0 %v2941
  %3072 = vmatpush1.bf16.msra.mxu0 %v2940
  %3073 = vmatprep.subr.bf16.mxu0 %v2945
  %3074 = vmatpush1.bf16.msra.mxu0 %v2944
  %3075 = vmatprep.subr.bf16.mxu0 %v2949
  %3076 = vmatpush1.bf16.msra.mxu0 %v2948
  %3077 = vmatprep.subr.bf16.mxu0 %v2953
  %3078 = vmatpush1.bf16.msra.mxu0 %v2952
  %3079 = vmatprep.subr.bf16.mxu0 %v2957
  %3080 = vmatpush1.bf16.msra.mxu0 %v2956
  %3081 = vmatprep.subr.bf16.mxu0 %v2961
  %3082 = vmatpush1.bf16.msra.mxu0 %v2960
  %3083 = vmatprep.subr.bf16.mxu0 0
  %3084 = vmatpush1.bf16.msra.mxu0 0
  %3085 = vmatprep.subr.bf16.mxu0 0
  %3086 = vmatpush1.bf16.msra.mxu0 0
  %3087 = vmatprep.subr.bf16.mxu0 0
  %3088 = vmatpush1.bf16.msra.mxu0 0
  %3089 = vmatprep.subr.bf16.mxu0 0
  %3090 = vmatpush1.bf16.msra.mxu0 0
  %3091 = vmatprep.subr.bf16.mxu0 0
  %3092 = vmatpush1.bf16.msra.mxu0 0
  %3093 = vmatprep.subr.bf16.mxu0 0
  %3094 = vmatpush1.bf16.msra.mxu0 0
  %3095 = vmatprep.subr.bf16.mxu0 0
  %3096 = vmatpush1.bf16.msra.mxu0 0
  %3097 = vmatprep.subr.bf16.mxu0 0
  %3098 = vmatpush1.bf16.msra.mxu0 0
  %3099 = vmatprep.mubr.bf16.mxu0 0
  %3100 = vmatmul.mubr.bf16.gmra.mrb[0].mxu0 %v2776
  %v3101 = vpop.f32.mrb[0].mxu0
  %v3102 = vadd.f32 %v2825, %v3101
  %v3103 = vpop.f32.mrb[0].mxu0
  %v3104 = vadd.f32 %v2829, %v3103
  %v3105 = vpop.f32.mrb[0].mxu0
  %v3106 = vadd.f32 %v2825, %v3105
  %v3107 = vpop.f32.mrb[0].mxu0
  %v3108 = vadd.f32 %v2829, %v3107
  %3109 = vmatprep.mubr.bf16.mxu0 0
  %3110 = vmatmul.mubr.bf16.gmra.mrb[0].mxu0 %v2777
  %v3111 = vpop.f32.mrb[0].mxu0
  %v3112 = vadd.f32 %v2825, %v3111
  %v3113 = vpop.f32.mrb[0].mxu0
  %v3114 = vadd.f32 %v2829, %v3113
  %v3115 = vpop.f32.mrb[0].mxu0
  %v3116 = vadd.f32 %v2825, %v3115
  %v3117 = vpop.f32.mrb[0].mxu0
  %v3118 = vadd.f32 %v2829, %v3117
  %3119 = vmatprep.mubr.bf16.mxu0 0
  %3120 = vmatmul.mubr.bf16.gmra.mrb[0].mxu0 %v2778
  %v3121 = vpop.f32.mrb[0].mxu0
  %v3122 = vadd.f32 %v2825, %v3121
  %v3123 = vpop.f32.mrb[0].mxu0
  %v3124 = vadd.f32 %v2829, %v3123
  %v3125 = vpop.f32.mrb[0].mxu0
  %v3126 = vadd.f32 %v2825, %v3125
  %v3127 = vpop.f32.mrb[0].mxu0
  %v3128 = vadd.f32 %v2829, %v3127
  %3129 = vmatprep.mubr.bf16.mxu0 0
  %3130 = vmatmul.mubr.bf16.gmra.mrb[0].mxu0 %v2779
  %v3131 = vpop.f32.mrb[0].mxu0
  %v3132 = vadd.f32 %v2825, %v3131
  %v3133 = vpop.f32.mrb[0].mxu0
  %v3134 = vadd.f32 %v2829, %v3133
  %v3135 = vpop.f32.mrb[0].mxu0
  %v3136 = vadd.f32 %v2825, %v3135
  %v3137 = vpop.f32.mrb[0].mxu0
  %v3138 = vadd.f32 %v2829, %v3137
  %3139 = vdwg.mxu0
  %3140 = vst [vmem:[#allocation2] sm:$0xff] %v3029
  %3141 = vst [vmem:[#allocation2 + $0x8] sm:$0xff] %v3031
  %3142 = vst [vmem:[#allocation2 + $0x10] sm:$0xff] %v3102
  %3143 = vst [vmem:[#allocation2 + $0x18] sm:$0xff] %v3104
  %3144 = vst [vmem:[#allocation2 + $0x20] sm:$0xff] %v3033
  %3145 = vst [vmem:[#allocation2 + $0x28] sm:$0xff] %v3035
  %3146 = vst [vmem:[#allocation2 + $0x30] sm:$0xff] %v3106
  %3147 = vst [vmem:[#allocation2 + $0x38] sm:$0xff] %v3108
  %3148 = vst [vmem:[#allocation2 + $0x40] sm:$0xff] %v3039
  %3149 = vst [vmem:[#allocation2 + $0x48] sm:$0xff] %v3041
  %3150 = vst [vmem:[#allocation2 + $0x50] sm:$0xff] %v3112
  %3151 = vst [vmem:[#allocation2 + $0x58] sm:$0xff] %v3114
  %3152 = vst [vmem:[#allocation2 + $0x60] sm:$0xff] %v3043
  %3153 = vst [vmem:[#allocation2 + $0x68] sm:$0xff] %v3045
  %3154 = vst [vmem:[#allocation2 + $0x70] sm:$0xff] %v3116
  %3155 = vst [vmem:[#allocation2 + $0x78] sm:$0xff] %v3118
  %3156 = vst [vmem:[#allocation2 + $0x80] sm:$0xff] %v3049
  %3157 = vst [vmem:[#allocation2 + $0x88] sm:$0xff] %v3051
  %3158 = vst [vmem:[#allocation2 + $0x90] sm:$0xff] %v3122
  %3159 = vst [vmem:[#allocation2 + $0x98] sm:$0xff] %v3124
  %3160 = vst [vmem:[#allocation2 + $0xa0] sm:$0xff] %v3053
  %3161 = vst [vmem:[#allocation2 + $0xa8] sm:$0xff] %v3055
  %3162 = vst [vmem:[#allocation2 + $0xb0] sm:$0xff] %v3126
  %3163 = vst [vmem:[#allocation2 + $0xb8] sm:$0xff] %v3128
  %3164 = vst [vmem:[#allocation2 + $0xc0] sm:$0xff] %v3059
  %3165 = vst [vmem:[#allocation2 + $0xc8] sm:$0xff] %v3061
  %3166 = vst [vmem:[#allocation2 + $0xd0] sm:$0xff] %v3132
  %3167 = vst [vmem:[#allocation2 + $0xd8] sm:$0xff] %v3134
  %3168 = vst [vmem:[#allocation2 + $0xe0] sm:$0xff] %v3063
  %3169 = vst [vmem:[#allocation2 + $0xe8] sm:$0xff] %v3065
  %3170 = vst [vmem:[#allocation2 + $0xf0] sm:$0xff] %v3136
  %3171 = vst [vmem:[#allocation2 + $0xf8] sm:$0xff] %v3138
  %s3172 = scalar_lea.vmem [#allocation5], 8
  %v3173 = vld [vmem:[%s3172] sm:$0xff]
  %s3174 = scalar_lea.vmem [#allocation6], 8
  %v3175 = vld [vmem:[%s3174] sm:$0xff]
  %v3176 = vld [vmem:[#allocation2] sm:$0xff]
  %v3177 = vld [vmem:[#allocation2 + $0x8] sm:$0xff]
  %v3178 = vld [vmem:[#allocation2 + $0x10] sm:$0xff]
  %v3179 = vld [vmem:[#allocation2 + $0x18] sm:$0xff]
  %v3180 = vpack.c.bf16 %v3173, %v3173
  %v3181 = vld [vmem:[%s5] sm:$0xff]
  %v3182 = vld [vmem:[%s5 + $0x8] sm:$0xff]
  %v3183 = vld [vmem:[%s5 + $0x10] sm:$0xff]
  %v3184 = vld [vmem:[%s5 + $0x18] sm:$0xff]
  %v3185 = vld [vmem:[%s5 + $0x20] sm:$0xff]
  %v3186 = vld [vmem:[%s5 + $0x28] sm:$0xff]
  %v3187 = vld [vmem:[%s5 + $0x30] sm:$0xff]
  %v3188 = vld [vmem:[%s5 + $0x38] sm:$0xff]
  %v3189 = vld [vmem:[%s5 + $0x40] sm:$0xff]
  %v3190 = vld [vmem:[%s5 + $0x48] sm:$0xff]
  %v3191 = vld [vmem:[%s5 + $0x50] sm:$0xff]
  %v3192 = vld [vmem:[%s5 + $0x58] sm:$0xff]
  %v3193 = vld [vmem:[%s5 + $0x60] sm:$0xff]
  %v3194 = vld [vmem:[%s5 + $0x68] sm:$0xff]
  %v3195 = vld [vmem:[%s5 + $0x70] sm:$0xff]
  %v3196 = vld [vmem:[%s5 + $0x78] sm:$0xff]
  %v3197 = vld [vmem:[%s5 + $0x80] sm:$0xff]
  %v3198 = vld [vmem:[%s5 + $0x88] sm:$0xff]
  %v3199 = vld [vmem:[%s5 + $0x90] sm:$0xff]
  %v3200 = vld [vmem:[%s5 + $0x98] sm:$0xff]
  %v3201 = vld [vmem:[%s5 + $0xa0] sm:$0xff]
  %v3202 = vld [vmem:[%s5 + $0xa8] sm:$0xff]
  %v3203 = vld [vmem:[%s5 + $0xb0] sm:$0xff]
  %v3204 = vld [vmem:[%s5 + $0xb8] sm:$0xff]
  %v3205 = vld [vmem:[%s5 + $0xc0] sm:$0xff]
  %v3206 = vld [vmem:[%s5 + $0xc8] sm:$0xff]
  %v3207 = vld [vmem:[%s5 + $0xd0] sm:$0xff]
  %v3208 = vld [vmem:[%s5 + $0xd8] sm:$0xff]
  %v3209 = vld [vmem:[%s5 + $0xe0] sm:$0xff]
  %v3210 = vld [vmem:[%s5 + $0xe8] sm:$0xff]
  %v3211 = vld [vmem:[%s5 + $0xf0] sm:$0xff]
  %v3212 = vld [vmem:[%s5 + $0xf8] sm:$0xff]
  %v3245 = vunpack.c.l.b16 %v3181
  %v3246 = vunpack.c.h.b16 %v3181
  %v3247 = vunpack.c.l.b16 %v3182
  %v3248 = vunpack.c.h.b16 %v3182
  %v3249 = vunpack.c.l.b16 %v3183
  %v3250 = vunpack.c.h.b16 %v3183
  %v3251 = vunpack.c.l.b16 %v3184
  %v3252 = vunpack.c.h.b16 %v3184
  %v3253 = vunpack.c.l.b16 %v3185
  %v3254 = vunpack.c.h.b16 %v3185
  %v3255 = vunpack.c.l.b16 %v3186
  %v3256 = vunpack.c.h.b16 %v3186
  %v3257 = vunpack.c.l.b16 %v3187
  %v3258 = vunpack.c.h.b16 %v3187
  %v3259 = vunpack.c.l.b16 %v3188
  %v3260 = vunpack.c.h.b16 %v3188
  %v3261 = vunpack.c.l.b16 %v3189
  %v3262 = vunpack.c.h.b16 %v3189
  %v3263 = vunpack.c.l.b16 %v3190
  %v3264 = vunpack.c.h.b16 %v3190
  %v3265 = vunpack.c.l.b16 %v3191
  %v3266 = vunpack.c.h.b16 %v3191
  %v3267 = vunpack.c.l.b16 %v3192
  %v3268 = vunpack.c.h.b16 %v3192
  %v3269 = vunpack.c.l.b16 %v3193
  %v3270 = vunpack.c.h.b16 %v3193
  %v3271 = vunpack.c.l.b16 %v3194
  %v3272 = vunpack.c.h.b16 %v3194
  %v3273 = vunpack.c.l.b16 %v3195
  %v3274 = vunpack.c.h.b16 %v3195
  %v3275 = vunpack.c.l.b16 %v3196
  %v3276 = vunpack.c.h.b16 %v3196
  %v3277 = vunpack.c.l.b16 %v3197
  %v3278 = vunpack.c.h.b16 %v3197
  %v3279 = vunpack.c.l.b16 %v3198
  %v3280 = vunpack.c.h.b16 %v3198
  %v3281 = vunpack.c.l.b16 %v3199
  %v3282 = vunpack.c.h.b16 %v3199
  %v3283 = vunpack.c.l.b16 %v3200
  %v3284 = vunpack.c.h.b16 %v3200
  %v3285 = vunpack.c.l.b16 %v3201
  %v3286 = vunpack.c.h.b16 %v3201
  %v3287 = vunpack.c.l.b16 %v3202
  %v3288 = vunpack.c.h.b16 %v3202
  %v3289 = vunpack.c.l.b16 %v3203
  %v3290 = vunpack.c.h.b16 %v3203
  %v3291 = vunpack.c.l.b16 %v3204
  %v3292 = vunpack.c.h.b16 %v3204
  %v3293 = vunpack.c.l.b16 %v3205
  %v3294 = vunpack.c.h.b16 %v3205
  %v3295 = vunpack.c.l.b16 %v3206
  %v3296 = vunpack.c.h.b16 %v3206
  %v3297 = vunpack.c.l.b16 %v3207
  %v3298 = vunpack.c.h.b16 %v3207
  %v3299 = vunpack.c.l.b16 %v3208
  %v3300 = vunpack.c.h.b16 %v3208
  %v3301 = vunpack.c.l.b16 %v3209
  %v3302 = vunpack.c.h.b16 %v3209
  %v3303 = vunpack.c.l.b16 %v3210
  %v3304 = vunpack.c.h.b16 %v3210
  %v3305 = vunpack.c.l.b16 %v3211
  %v3306 = vunpack.c.h.b16 %v3211
  %v3307 = vunpack.c.l.b16 %v3212
  %v3308 = vunpack.c.h.b16 %v3212
  %v3309 = vpack.c.b16 %v3249, %v3245
  %v3310 = vpack.c.b16 %v3250, %v3246
  %v3311 = vpack.c.b16 %v3251, %v3247
  %v3312 = vpack.c.b16 %v3252, %v3248
  %v3313 = vpack.c.b16 %v3257, %v3253
  %v3314 = vpack.c.b16 %v3258, %v3254
  %v3315 = vpack.c.b16 %v3259, %v3255
  %v3316 = vpack.c.b16 %v3260, %v3256
  %v3317 = vpack.c.b16 %v3265, %v3261
  %v3318 = vpack.c.b16 %v3266, %v3262
  %v3319 = vpack.c.b16 %v3267, %v3263
  %v3320 = vpack.c.b16 %v3268, %v3264
  %v3321 = vpack.c.b16 %v3273, %v3269
  %v3322 = vpack.c.b16 %v3274, %v3270
  %v3323 = vpack.c.b16 %v3275, %v3271
  %v3324 = vpack.c.b16 %v3276, %v3272
  %v3325 = vpack.c.b16 %v3281, %v3277
  %v3326 = vpack.c.b16 %v3282, %v3278
  %v3327 = vpack.c.b16 %v3283, %v3279
  %v3328 = vpack.c.b16 %v3284, %v3280
  %v3329 = vpack.c.b16 %v3289, %v3285
  %v3330 = vpack.c.b16 %v3290, %v3286
  %v3331 = vpack.c.b16 %v3291, %v3287
  %v3332 = vpack.c.b16 %v3292, %v3288
  %v3333 = vpack.c.b16 %v3297, %v3293
  %v3334 = vpack.c.b16 %v3298, %v3294
  %v3335 = vpack.c.b16 %v3299, %v3295
  %v3336 = vpack.c.b16 %v3300, %v3296
  %v3337 = vpack.c.b16 %v3305, %v3301
  %v3338 = vpack.c.b16 %v3306, %v3302
  %v3339 = vpack.c.b16 %v3307, %v3303
  %v3340 = vpack.c.b16 %v3308, %v3304
  %3373 = vmatprep.subr.bf16.mxu0 %v3310
  %3374 = vmatpush1.bf16.msra.mxu0 %v3309
  %3375 = vmatprep.subr.bf16.mxu0 %v3314
  %3376 = vmatpush1.bf16.msra.mxu0 %v3313
  %3377 = vmatprep.subr.bf16.mxu0 %v3318
  %3378 = vmatpush1.bf16.msra.mxu0 %v3317
  %3379 = vmatprep.subr.bf16.mxu0 %v3322
  %3380 = vmatpush1.bf16.msra.mxu0 %v3321
  %3381 = vmatprep.subr.bf16.mxu0 %v3326
  %3382 = vmatpush1.bf16.msra.mxu0 %v3325
  %3383 = vmatprep.subr.bf16.mxu0 %v3330
  %3384 = vmatpush1.bf16.msra.mxu0 %v3329
  %3385 = vmatprep.subr.bf16.mxu0 %v3334
  %3386 = vmatpush1.bf16.msra.mxu0 %v3333
  %3387 = vmatprep.subr.bf16.mxu0 %v3338
  %3388 = vmatpush1.bf16.msra.mxu0 %v3337
  %3389 = vmatprep.subr.bf16.mxu0 0
  %3390 = vmatpush1.bf16.msra.mxu0 0
  %3391 = vmatprep.subr.bf16.mxu0 0
  %3392 = vmatpush1.bf16.msra.mxu0 0
  %3393 = vmatprep.subr.bf16.mxu0 0
  %3394 = vmatpush1.bf16.msra.mxu0 0
  %3395 = vmatprep.subr.bf16.mxu0 0
  %3396 = vmatpush1.bf16.msra.mxu0 0
  %3397 = vmatprep.subr.bf16.mxu0 0
  %3398 = vmatpush1.bf16.msra.mxu0 0
  %3399 = vmatprep.subr.bf16.mxu0 0
  %3400 = vmatpush1.bf16.msra.mxu0 0
  %3401 = vmatprep.subr.bf16.mxu0 0
  %3402 = vmatpush1.bf16.msra.mxu0 0
  %3403 = vmatprep.subr.bf16.mxu0 0
  %3404 = vmatpush1.bf16.msra.mxu0 0
  %3405 = vmatprep.mubr.bf16.mxu0 0
  %3406 = vmatmul.mubr.bf16.gmra.mrb[0].mxu0 %v3180
  %v3407 = vpop.f32.mrb[0].mxu0
  %v3408 = vadd.f32 0.0, %v3407
  %v3409 = vpop.f32.mrb[0].mxu0
  %v3410 = vadd.f32 0.0, %v3409
  %v3411 = vpop.f32.mrb[0].mxu0
  %v3412 = vpop.f32.mrb[0].mxu0
  %3413 = vdwg.mxu0
  %3414 = vmatprep.subr.bf16.mxu0 %v3312
  %3415 = vmatpush1.bf16.msra.mxu0 %v3311
  %3416 = vmatprep.subr.bf16.mxu0 %v3316
  %3417 = vmatpush1.bf16.msra.mxu0 %v3315
  %3418 = vmatprep.subr.bf16.mxu0 %v3320
  %3419 = vmatpush1.bf16.msra.mxu0 %v3319
  %3420 = vmatprep.subr.bf16.mxu0 %v3324
  %3421 = vmatpush1.bf16.msra.mxu0 %v3323
  %3422 = vmatprep.subr.bf16.mxu0 %v3328
  %3423 = vmatpush1.bf16.msra.mxu0 %v3327
  %3424 = vmatprep.subr.bf16.mxu0 %v3332
  %3425 = vmatpush1.bf16.msra.mxu0 %v3331
  %3426 = vmatprep.subr.bf16.mxu0 %v3336
  %3427 = vmatpush1.bf16.msra.mxu0 %v3335
  %3428 = vmatprep.subr.bf16.mxu0 %v3340
  %3429 = vmatpush1.bf16.msra.mxu0 %v3339
  %3430 = vmatprep.subr.bf16.mxu0 0
  %3431 = vmatpush1.bf16.msra.mxu0 0
  %3432 = vmatprep.subr.bf16.mxu0 0
  %3433 = vmatpush1.bf16.msra.mxu0 0
  %3434 = vmatprep.subr.bf16.mxu0 0
  %3435 = vmatpush1.bf16.msra.mxu0 0
  %3436 = vmatprep.subr.bf16.mxu0 0
  %3437 = vmatpush1.bf16.msra.mxu0 0
  %3438 = vmatprep.subr.bf16.mxu0 0
  %3439 = vmatpush1.bf16.msra.mxu0 0
  %3440 = vmatprep.subr.bf16.mxu0 0
  %3441 = vmatpush1.bf16.msra.mxu0 0
  %3442 = vmatprep.subr.bf16.mxu0 0
  %3443 = vmatpush1.bf16.msra.mxu0 0
  %3444 = vmatprep.subr.bf16.mxu0 0
  %3445 = vmatpush1.bf16.msra.mxu0 0
  %3446 = vmatprep.mubr.bf16.mxu0 0
  %3447 = vmatmul.mubr.bf16.gmra.mrb[0].mxu0 %v3180
  %v3448 = vpop.f32.mrb[0].mxu0
  %v3449 = vadd.f32 0.0, %v3448
  %v3450 = vpop.f32.mrb[0].mxu0
  %v3451 = vadd.f32 0.0, %v3450
  %v3452 = vpop.f32.mrb[0].mxu0
  %v3453 = vpop.f32.mrb[0].mxu0
  %3454 = vdwg.mxu0
  %v3455 = vadd.f32 %v3176, %v3408
  %v3456 = vadd.f32 %v3177, %v3410
  %v3457 = vadd.f32 %v3178, %v3449
  %v3458 = vadd.f32 %v3179, %v3451
  %v3459 = vxor.u32 %v3455, 2147483648
  %v3460 = vmul.f32 %v3459, 1.442695
  %v3461 = vpow.pop %v3460
  %v3462 = vadd.f32 %v3461, 1.0
  %v3463 = vrcp.pop %v3462
  %v3464 = vmul.f32 1.0, %v3463
  %v3465 = vxor.u32 %v3456, 2147483648
  %v3466 = vmul.f32 %v3465, 1.442695
  %v3467 = vpow.pop %v3466
  %v3468 = vadd.f32 %v3467, 1.0
  %v3469 = vrcp.pop %v3468
  %v3470 = vmul.f32 1.0, %v3469
  %v3471 = vtanh.pop %v3457
  %v3472 = vxor.u32 %v3458, 2147483648
  %v3473 = vmul.f32 %v3472, 1.442695
  %v3474 = vpow.pop %v3473
  %v3475 = vadd.f32 %v3474, 1.0
  %v3476 = vrcp.pop %v3475
  %v3477 = vmul.f32 1.0, %v3476
  %v3478 = vmul.f32 %v3470, %v3175
  %v3479 = vmul.f32 %v3464, %v3471
  %v3480 = vadd.f32 %v3478, %v3479
  %v3481 = vtanh.pop %v3480
  %v3482 = vmul.f32 %v3477, %v3481
  %v3483 = vld [vmem:[#allocation2 + $0x20] sm:$0xff]
  %v3484 = vld [vmem:[#allocation2 + $0x28] sm:$0xff]
  %v3485 = vld [vmem:[#allocation2 + $0x30] sm:$0xff]
  %v3486 = vld [vmem:[#allocation2 + $0x38] sm:$0xff]
  %v3487 = vpack.c.bf16 %v3482, %v3482
  %3488 = vmatprep.subr.bf16.mxu0 %v3310
  %3489 = vmatpush1.bf16.msra.mxu0 %v3309
  %3490 = vmatprep.subr.bf16.mxu0 %v3314
  %3491 = vmatpush1.bf16.msra.mxu0 %v3313
  %3492 = vmatprep.subr.bf16.mxu0 %v3318
  %3493 = vmatpush1.bf16.msra.mxu0 %v3317
  %3494 = vmatprep.subr.bf16.mxu0 %v3322
  %3495 = vmatpush1.bf16.msra.mxu0 %v3321
  %3496 = vmatprep.subr.bf16.mxu0 %v3326
  %3497 = vmatpush1.bf16.msra.mxu0 %v3325
  %3498 = vmatprep.subr.bf16.mxu0 %v3330
  %3499 = vmatpush1.bf16.msra.mxu0 %v3329
  %3500 = vmatprep.subr.bf16.mxu0 %v3334
  %3501 = vmatpush1.bf16.msra.mxu0 %v3333
  %3502 = vmatprep.subr.bf16.mxu0 %v3338
  %3503 = vmatpush1.bf16.msra.mxu0 %v3337
  %3504 = vmatprep.subr.bf16.mxu0 0
  %3505 = vmatpush1.bf16.msra.mxu0 0
  %3506 = vmatprep.subr.bf16.mxu0 0
  %3507 = vmatpush1.bf16.msra.mxu0 0
  %3508 = vmatprep.subr.bf16.mxu0 0
  %3509 = vmatpush1.bf16.msra.mxu0 0
  %3510 = vmatprep.subr.bf16.mxu0 0
  %3511 = vmatpush1.bf16.msra.mxu0 0
  %3512 = vmatprep.subr.bf16.mxu0 0
  %3513 = vmatpush1.bf16.msra.mxu0 0
  %3514 = vmatprep.subr.bf16.mxu0 0
  %3515 = vmatpush1.bf16.msra.mxu0 0
  %3516 = vmatprep.subr.bf16.mxu0 0
  %3517 = vmatpush1.bf16.msra.mxu0 0
  %3518 = vmatprep.subr.bf16.mxu0 0
  %3519 = vmatpush1.bf16.msra.mxu0 0
  %3520 = vmatprep.mubr.bf16.mxu0 0
  %3521 = vmatmul.mubr.bf16.gmra.mrb[0].mxu0 %v3487
  %v3522 = vpop.f32.mrb[0].mxu0
  %v3523 = vadd.f32 0.0, %v3522
  %v3524 = vpop.f32.mrb[0].mxu0
  %v3525 = vadd.f32 0.0, %v3524
  %v3526 = vpop.f32.mrb[0].mxu0
  %v3527 = vpop.f32.mrb[0].mxu0
  %3528 = vdwg.mxu0
  %3529 = vmatprep.subr.bf16.mxu0 %v3312
  %3530 = vmatpush1.bf16.msra.mxu0 %v3311
  %3531 = vmatprep.subr.bf16.mxu0 %v3316
  %3532 = vmatpush1.bf16.msra.mxu0 %v3315
  %3533 = vmatprep.subr.bf16.mxu0 %v3320
  %3534 = vmatpush1.bf16.msra.mxu0 %v3319
  %3535 = vmatprep.subr.bf16.mxu0 %v3324
  %3536 = vmatpush1.bf16.msra.mxu0 %v3323
  %3537 = vmatprep.subr.bf16.mxu0 %v3328
  %3538 = vmatpush1.bf16.msra.mxu0 %v3327
  %3539 = vmatprep.subr.bf16.mxu0 %v3332
  %3540 = vmatpush1.bf16.msra.mxu0 %v3331
  %3541 = vmatprep.subr.bf16.mxu0 %v3336
  %3542 = vmatpush1.bf16.msra.mxu0 %v3335
  %3543 = vmatprep.subr.bf16.mxu0 %v3340
  %3544 = vmatpush1.bf16.msra.mxu0 %v3339
  %3545 = vmatprep.subr.bf16.mxu0 0
  %3546 = vmatpush1.bf16.msra.mxu0 0
  %3547 = vmatprep.subr.bf16.mxu0 0
  %3548 = vmatpush1.bf16.msra.mxu0 0
  %3549 = vmatprep.subr.bf16.mxu0 0
  %3550 = vmatpush1.bf16.msra.mxu0 0
  %3551 = vmatprep.subr.bf16.mxu0 0
  %3552 = vmatpush1.bf16.msra.mxu0 0
  %3553 = vmatprep.subr.bf16.mxu0 0
  %3554 = vmatpush1.bf16.msra.mxu0 0
  %3555 = vmatprep.subr.bf16.mxu0 0
  %3556 = vmatpush1.bf16.msra.mxu0 0
  %3557 = vmatprep.subr.bf16.mxu0 0
  %3558 = vmatpush1.bf16.msra.mxu0 0
  %3559 = vmatprep.subr.bf16.mxu0 0
  %3560 = vmatpush1.bf16.msra.mxu0 0
  %3561 = vmatprep.mubr.bf16.mxu0 0
  %3562 = vmatmul.mubr.bf16.gmra.mrb[0].mxu0 %v3487
  %v3563 = vpop.f32.mrb[0].mxu0
  %v3564 = vadd.f32 0.0, %v3563
  %v3565 = vpop.f32.mrb[0].mxu0
  %v3566 = vadd.f32 0.0, %v3565
  %v3567 = vpop.f32.mrb[0].mxu0
  %v3568 = vpop.f32.mrb[0].mxu0
  %3569 = vdwg.mxu0
  %v3570 = vadd.f32 %v3483, %v3523
  %v3571 = vadd.f32 %v3484, %v3525
  %v3572 = vadd.f32 %v3485, %v3564
  %v3573 = vadd.f32 %v3486, %v3566
  %v3574 = vxor.u32 %v3570, 2147483648
  %v3575 = vmul.f32 %v3574, 1.442695
  %v3576 = vpow.pop %v3575
  %v3577 = vadd.f32 %v3576, 1.0
  %v3578 = vrcp.pop %v3577
  %v3579 = vmul.f32 1.0, %v3578
  %v3580 = vxor.u32 %v3571, 2147483648
  %v3581 = vmul.f32 %v3580, 1.442695
  %v3582 = vpow.pop %v3581
  %v3583 = vadd.f32 %v3582, 1.0
  %v3584 = vrcp.pop %v3583
  %v3585 = vmul.f32 1.0, %v3584
  %v3586 = vtanh.pop %v3572
  %v3587 = vxor.u32 %v3573, 2147483648
  %v3588 = vmul.f32 %v3587, 1.442695
  %v3589 = vpow.pop %v3588
  %v3590 = vadd.f32 %v3589, 1.0
  %v3591 = vrcp.pop %v3590
  %v3592 = vmul.f32 1.0, %v3591
  %v3593 = vmul.f32 %v3585, %v3480
  %v3594 = vmul.f32 %v3579, %v3586
  %v3595 = vadd.f32 %v3593, %v3594
  %v3596 = vtanh.pop %v3595
  %v3597 = vmul.f32 %v3592, %v3596
  %v3598 = vld [vmem:[#allocation2 + $0x40] sm:$0xff]
  %v3599 = vld [vmem:[#allocation2 + $0x48] sm:$0xff]
  %v3600 = vld [vmem:[#allocation2 + $0x50] sm:$0xff]
  %v3601 = vld [vmem:[#allocation2 + $0x58] sm:$0xff]
  %v3602 = vpack.c.bf16 %v3597, %v3597
  %3603 = vmatprep.subr.bf16.mxu0 %v3310
  %3604 = vmatpush1.bf16.msra.mxu0 %v3309
  %3605 = vmatprep.subr.bf16.mxu0 %v3314
  %3606 = vmatpush1.bf16.msra.mxu0 %v3313
  %3607 = vmatprep.subr.bf16.mxu0 %v3318
  %3608 = vmatpush1.bf16.msra.mxu0 %v3317
  %3609 = vmatprep.subr.bf16.mxu0 %v3322
  %3610 = vmatpush1.bf16.msra.mxu0 %v3321
  %3611 = vmatprep.subr.bf16.mxu0 %v3326
  %3612 = vmatpush1.bf16.msra.mxu0 %v3325
  %3613 = vmatprep.subr.bf16.mxu0 %v3330
  %3614 = vmatpush1.bf16.msra.mxu0 %v3329
  %3615 = vmatprep.subr.bf16.mxu0 %v3334
  %3616 = vmatpush1.bf16.msra.mxu0 %v3333
  %3617 = vmatprep.subr.bf16.mxu0 %v3338
  %3618 = vmatpush1.bf16.msra.mxu0 %v3337
  %3619 = vmatprep.subr.bf16.mxu0 0
  %3620 = vmatpush1.bf16.msra.mxu0 0
  %3621 = vmatprep.subr.bf16.mxu0 0
  %3622 = vmatpush1.bf16.msra.mxu0 0
  %3623 = vmatprep.subr.bf16.mxu0 0
  %3624 = vmatpush1.bf16.msra.mxu0 0
  %3625 = vmatprep.subr.bf16.mxu0 0
  %3626 = vmatpush1.bf16.msra.mxu0 0
  %3627 = vmatprep.subr.bf16.mxu0 0
  %3628 = vmatpush1.bf16.msra.mxu0 0
  %3629 = vmatprep.subr.bf16.mxu0 0
  %3630 = vmatpush1.bf16.msra.mxu0 0
  %3631 = vmatprep.subr.bf16.mxu0 0
  %3632 = vmatpush1.bf16.msra.mxu0 0
  %3633 = vmatprep.subr.bf16.mxu0 0
  %3634 = vmatpush1.bf16.msra.mxu0 0
  %3635 = vmatprep.mubr.bf16.mxu0 0
  %3636 = vmatmul.mubr.bf16.gmra.mrb[0].mxu0 %v3602
  %v3637 = vpop.f32.mrb[0].mxu0
  %v3638 = vadd.f32 0.0, %v3637
  %v3639 = vpop.f32.mrb[0].mxu0
  %v3640 = vadd.f32 0.0, %v3639
  %v3641 = vpop.f32.mrb[0].mxu0
  %v3642 = vpop.f32.mrb[0].mxu0
  %3643 = vdwg.mxu0
  %3644 = vmatprep.subr.bf16.mxu0 %v3312
  %3645 = vmatpush1.bf16.msra.mxu0 %v3311
  %3646 = vmatprep.subr.bf16.mxu0 %v3316
  %3647 = vmatpush1.bf16.msra.mxu0 %v3315
  %3648 = vmatprep.subr.bf16.mxu0 %v3320
  %3649 = vmatpush1.bf16.msra.mxu0 %v3319
  %3650 = vmatprep.subr.bf16.mxu0 %v3324
  %3651 = vmatpush1.bf16.msra.mxu0 %v3323
  %3652 = vmatprep.subr.bf16.mxu0 %v3328
  %3653 = vmatpush1.bf16.msra.mxu0 %v3327
  %3654 = vmatprep.subr.bf16.mxu0 %v3332
  %3655 = vmatpush1.bf16.msra.mxu0 %v3331
  %3656 = vmatprep.subr.bf16.mxu0 %v3336
  %3657 = vmatpush1.bf16.msra.mxu0 %v3335
  %3658 = vmatprep.subr.bf16.mxu0 %v3340
  %3659 = vmatpush1.bf16.msra.mxu0 %v3339
  %3660 = vmatprep.subr.bf16.mxu0 0
  %3661 = vmatpush1.bf16.msra.mxu0 0
  %3662 = vmatprep.subr.bf16.mxu0 0
  %3663 = vmatpush1.bf16.msra.mxu0 0
  %3664 = vmatprep.subr.bf16.mxu0 0
  %3665 = vmatpush1.bf16.msra.mxu0 0
  %3666 = vmatprep.subr.bf16.mxu0 0
  %3667 = vmatpush1.bf16.msra.mxu0 0
  %3668 = vmatprep.subr.bf16.mxu0 0
  %3669 = vmatpush1.bf16.msra.mxu0 0
  %3670 = vmatprep.subr.bf16.mxu0 0
  %3671 = vmatpush1.bf16.msra.mxu0 0
  %3672 = vmatprep.subr.bf16.mxu0 0
  %3673 = vmatpush1.bf16.msra.mxu0 0
  %3674 = vmatprep.subr.bf16.mxu0 0
  %3675 = vmatpush1.bf16.msra.mxu0 0
  %3676 = vmatprep.mubr.bf16.mxu0 0
  %3677 = vmatmul.mubr.bf16.gmra.mrb[0].mxu0 %v3602
  %v3678 = vpop.f32.mrb[0].mxu0
  %v3679 = vadd.f32 0.0, %v3678
  %v3680 = vpop.f32.mrb[0].mxu0
  %v3681 = vadd.f32 0.0, %v3680
  %v3682 = vpop.f32.mrb[0].mxu0
  %v3683 = vpop.f32.mrb[0].mxu0
  %3684 = vdwg.mxu0
  %v3685 = vadd.f32 %v3598, %v3638
  %v3686 = vadd.f32 %v3599, %v3640
  %v3687 = vadd.f32 %v3600, %v3679
  %v3688 = vadd.f32 %v3601, %v3681
  %v3689 = vxor.u32 %v3685, 2147483648
  %v3690 = vmul.f32 %v3689, 1.442695
  %v3691 = vpow.pop %v3690
  %v3692 = vadd.f32 %v3691, 1.0
  %v3693 = vrcp.pop %v3692
  %v3694 = vmul.f32 1.0, %v3693
  %v3695 = vxor.u32 %v3686, 2147483648
  %v3696 = vmul.f32 %v3695, 1.442695
  %v3697 = vpow.pop %v3696
  %v3698 = vadd.f32 %v3697, 1.0
  %v3699 = vrcp.pop %v3698
  %v3700 = vmul.f32 1.0, %v3699
  %v3701 = vtanh.pop %v3687
  %v3702 = vxor.u32 %v3688, 2147483648
  %v3703 = vmul.f32 %v3702, 1.442695
  %v3704 = vpow.pop %v3703
  %v3705 = vadd.f32 %v3704, 1.0
  %v3706 = vrcp.pop %v3705
  %v3707 = vmul.f32 1.0, %v3706
  %v3708 = vmul.f32 %v3700, %v3595
  %v3709 = vmul.f32 %v3694, %v3701
  %v3710 = vadd.f32 %v3708, %v3709
  %v3711 = vtanh.pop %v3710
  %v3712 = vmul.f32 %v3707, %v3711
  %v3713 = vld [vmem:[#allocation2 + $0x60] sm:$0xff]
  %v3714 = vld [vmem:[#allocation2 + $0x68] sm:$0xff]
  %v3715 = vld [vmem:[#allocation2 + $0x70] sm:$0xff]
  %v3716 = vld [vmem:[#allocation2 + $0x78] sm:$0xff]
  %v3717 = vpack.c.bf16 %v3712, %v3712
  %3718 = vmatprep.subr.bf16.mxu0 %v3310
  %3719 = vmatpush1.bf16.msra.mxu0 %v3309
  %3720 = vmatprep.subr.bf16.mxu0 %v3314
  %3721 = vmatpush1.bf16.msra.mxu0 %v3313
  %3722 = vmatprep.subr.bf16.mxu0 %v3318
  %3723 = vmatpush1.bf16.msra.mxu0 %v3317
  %3724 = vmatprep.subr.bf16.mxu0 %v3322
  %3725 = vmatpush1.bf16.msra.mxu0 %v3321
  %3726 = vmatprep.subr.bf16.mxu0 %v3326
  %3727 = vmatpush1.bf16.msra.mxu0 %v3325
  %3728 = vmatprep.subr.bf16.mxu0 %v3330
  %3729 = vmatpush1.bf16.msra.mxu0 %v3329
  %3730 = vmatprep.subr.bf16.mxu0 %v3334
  %3731 = vmatpush1.bf16.msra.mxu0 %v3333
  %3732 = vmatprep.subr.bf16.mxu0 %v3338
  %3733 = vmatpush1.bf16.msra.mxu0 %v3337
  %3734 = vmatprep.subr.bf16.mxu0 0
  %3735 = vmatpush1.bf16.msra.mxu0 0
  %3736 = vmatprep.subr.bf16.mxu0 0
  %3737 = vmatpush1.bf16.msra.mxu0 0
  %3738 = vmatprep.subr.bf16.mxu0 0
  %3739 = vmatpush1.bf16.msra.mxu0 0
  %3740 = vmatprep.subr.bf16.mxu0 0
  %3741 = vmatpush1.bf16.msra.mxu0 0
  %3742 = vmatprep.subr.bf16.mxu0 0
  %3743 = vmatpush1.bf16.msra.mxu0 0
  %3744 = vmatprep.subr.bf16.mxu0 0
  %3745 = vmatpush1.bf16.msra.mxu0 0
  %3746 = vmatprep.subr.bf16.mxu0 0
  %3747 = vmatpush1.bf16.msra.mxu0 0
  %3748 = vmatprep.subr.bf16.mxu0 0
  %3749 = vmatpush1.bf16.msra.mxu0 0
  %3750 = vmatprep.mubr.bf16.mxu0 0
  %3751 = vmatmul.mubr.bf16.gmra.mrb[0].mxu0 %v3717
  %v3752 = vpop.f32.mrb[0].mxu0
  %v3753 = vadd.f32 0.0, %v3752
  %v3754 = vpop.f32.mrb[0].mxu0
  %v3755 = vadd.f32 0.0, %v3754
  %v3756 = vpop.f32.mrb[0].mxu0
  %v3757 = vpop.f32.mrb[0].mxu0
  %3758 = vdwg.mxu0
  %3759 = vmatprep.subr.bf16.mxu0 %v3312
  %3760 = vmatpush1.bf16.msra.mxu0 %v3311
  %3761 = vmatprep.subr.bf16.mxu0 %v3316
  %3762 = vmatpush1.bf16.msra.mxu0 %v3315
  %3763 = vmatprep.subr.bf16.mxu0 %v3320
  %3764 = vmatpush1.bf16.msra.mxu0 %v3319
  %3765 = vmatprep.subr.bf16.mxu0 %v3324
  %3766 = vmatpush1.bf16.msra.mxu0 %v3323
  %3767 = vmatprep.subr.bf16.mxu0 %v3328
  %3768 = vmatpush1.bf16.msra.mxu0 %v3327
  %3769 = vmatprep.subr.bf16.mxu0 %v3332
  %3770 = vmatpush1.bf16.msra.mxu0 %v3331
  %3771 = vmatprep.subr.bf16.mxu0 %v3336
  %3772 = vmatpush1.bf16.msra.mxu0 %v3335
  %3773 = vmatprep.subr.bf16.mxu0 %v3340
  %3774 = vmatpush1.bf16.msra.mxu0 %v3339
  %3775 = vmatprep.subr.bf16.mxu0 0
  %3776 = vmatpush1.bf16.msra.mxu0 0
  %3777 = vmatprep.subr.bf16.mxu0 0
  %3778 = vmatpush1.bf16.msra.mxu0 0
  %3779 = vmatprep.subr.bf16.mxu0 0
  %3780 = vmatpush1.bf16.msra.mxu0 0
  %3781 = vmatprep.subr.bf16.mxu0 0
  %3782 = vmatpush1.bf16.msra.mxu0 0
  %3783 = vmatprep.subr.bf16.mxu0 0
  %3784 = vmatpush1.bf16.msra.mxu0 0
  %3785 = vmatprep.subr.bf16.mxu0 0
  %3786 = vmatpush1.bf16.msra.mxu0 0
  %3787 = vmatprep.subr.bf16.mxu0 0
  %3788 = vmatpush1.bf16.msra.mxu0 0
  %3789 = vmatprep.subr.bf16.mxu0 0
  %3790 = vmatpush1.bf16.msra.mxu0 0
  %3791 = vmatprep.mubr.bf16.mxu0 0
  %3792 = vmatmul.mubr.bf16.gmra.mrb[0].mxu0 %v3717
  %v3793 = vpop.f32.mrb[0].mxu0
  %v3794 = vadd.f32 0.0, %v3793
  %v3795 = vpop.f32.mrb[0].mxu0
  %v3796 = vadd.f32 0.0, %v3795
  %v3797 = vpop.f32.mrb[0].mxu0
  %v3798 = vpop.f32.mrb[0].mxu0
  %3799 = vdwg.mxu0
  %v3800 = vadd.f32 %v3713, %v3753
  %v3801 = vadd.f32 %v3714, %v3755
  %v3802 = vadd.f32 %v3715, %v3794
  %v3803 = vadd.f32 %v3716, %v3796
  %v3804 = vxor.u32 %v3800, 2147483648
  %v3805 = vmul.f32 %v3804, 1.442695
  %v3806 = vpow.pop %v3805
  %v3807 = vadd.f32 %v3806, 1.0
  %v3808 = vrcp.pop %v3807
  %v3809 = vmul.f32 1.0, %v3808
  %v3810 = vxor.u32 %v3801, 2147483648
  %v3811 = vmul.f32 %v3810, 1.442695
  %v3812 = vpow.pop %v3811
  %v3813 = vadd.f32 %v3812, 1.0
  %v3814 = vrcp.pop %v3813
  %v3815 = vmul.f32 1.0, %v3814
  %v3816 = vtanh.pop %v3802
  %v3817 = vxor.u32 %v3803, 2147483648
  %v3818 = vmul.f32 %v3817, 1.442695
  %v3819 = vpow.pop %v3818
  %v3820 = vadd.f32 %v3819, 1.0
  %v3821 = vrcp.pop %v3820
  %v3822 = vmul.f32 1.0, %v3821
  %v3823 = vmul.f32 %v3815, %v3710
  %v3824 = vmul.f32 %v3809, %v3816
  %v3825 = vadd.f32 %v3823, %v3824
  %v3826 = vtanh.pop %v3825
  %v3827 = vmul.f32 %v3822, %v3826
  %v3828 = vld [vmem:[#allocation2 + $0x80] sm:$0xff]
  %v3829 = vld [vmem:[#allocation2 + $0x88] sm:$0xff]
  %v3830 = vld [vmem:[#allocation2 + $0x90] sm:$0xff]
  %v3831 = vld [vmem:[#allocation2 + $0x98] sm:$0xff]
  %v3832 = vpack.c.bf16 %v3827, %v3827
  %3833 = vmatprep.subr.bf16.mxu0 %v3310
  %3834 = vmatpush1.bf16.msra.mxu0 %v3309
  %3835 = vmatprep.subr.bf16.mxu0 %v3314
  %3836 = vmatpush1.bf16.msra.mxu0 %v3313
  %3837 = vmatprep.subr.bf16.mxu0 %v3318
  %3838 = vmatpush1.bf16.msra.mxu0 %v3317
  %3839 = vmatprep.subr.bf16.mxu0 %v3322
  %3840 = vmatpush1.bf16.msra.mxu0 %v3321
  %3841 = vmatprep.subr.bf16.mxu0 %v3326
  %3842 = vmatpush1.bf16.msra.mxu0 %v3325
  %3843 = vmatprep.subr.bf16.mxu0 %v3330
  %3844 = vmatpush1.bf16.msra.mxu0 %v3329
  %3845 = vmatprep.subr.bf16.mxu0 %v3334
  %3846 = vmatpush1.bf16.msra.mxu0 %v3333
  %3847 = vmatprep.subr.bf16.mxu0 %v3338
  %3848 = vmatpush1.bf16.msra.mxu0 %v3337
  %3849 = vmatprep.subr.bf16.mxu0 0
  %3850 = vmatpush1.bf16.msra.mxu0 0
  %3851 = vmatprep.subr.bf16.mxu0 0
  %3852 = vmatpush1.bf16.msra.mxu0 0
  %3853 = vmatprep.subr.bf16.mxu0 0
  %3854 = vmatpush1.bf16.msra.mxu0 0
  %3855 = vmatprep.subr.bf16.mxu0 0
  %3856 = vmatpush1.bf16.msra.mxu0 0
  %3857 = vmatprep.subr.bf16.mxu0 0
  %3858 = vmatpush1.bf16.msra.mxu0 0
  %3859 = vmatprep.subr.bf16.mxu0 0
  %3860 = vmatpush1.bf16.msra.mxu0 0
  %3861 = vmatprep.subr.bf16.mxu0 0
  %3862 = vmatpush1.bf16.msra.mxu0 0
  %3863 = vmatprep.subr.bf16.mxu0 0
  %3864 = vmatpush1.bf16.msra.mxu0 0
  %3865 = vmatprep.mubr.bf16.mxu0 0
  %3866 = vmatmul.mubr.bf16.gmra.mrb[0].mxu0 %v3832
  %v3867 = vpop.f32.mrb[0].mxu0
  %v3868 = vadd.f32 0.0, %v3867
  %v3869 = vpop.f32.mrb[0].mxu0
  %v3870 = vadd.f32 0.0, %v3869
  %v3871 = vpop.f32.mrb[0].mxu0
  %v3872 = vpop.f32.mrb[0].mxu0
  %3873 = vdwg.mxu0
  %3874 = vmatprep.subr.bf16.mxu0 %v3312
  %3875 = vmatpush1.bf16.msra.mxu0 %v3311
  %3876 = vmatprep.subr.bf16.mxu0 %v3316
  %3877 = vmatpush1.bf16.msra.mxu0 %v3315
  %3878 = vmatprep.subr.bf16.mxu0 %v3320
  %3879 = vmatpush1.bf16.msra.mxu0 %v3319
  %3880 = vmatprep.subr.bf16.mxu0 %v3324
  %3881 = vmatpush1.bf16.msra.mxu0 %v3323
  %3882 = vmatprep.subr.bf16.mxu0 %v3328
  %3883 = vmatpush1.bf16.msra.mxu0 %v3327
  %3884 = vmatprep.subr.bf16.mxu0 %v3332
  %3885 = vmatpush1.bf16.msra.mxu0 %v3331
  %3886 = vmatprep.subr.bf16.mxu0 %v3336
  %3887 = vmatpush1.bf16.msra.mxu0 %v3335
  %3888 = vmatprep.subr.bf16.mxu0 %v3340
  %3889 = vmatpush1.bf16.msra.mxu0 %v3339
  %3890 = vmatprep.subr.bf16.mxu0 0
  %3891 = vmatpush1.bf16.msra.mxu0 0
  %3892 = vmatprep.subr.bf16.mxu0 0
  %3893 = vmatpush1.bf16.msra.mxu0 0
  %3894 = vmatprep.subr.bf16.mxu0 0
  %3895 = vmatpush1.bf16.msra.mxu0 0
  %3896 = vmatprep.subr.bf16.mxu0 0
  %3897 = vmatpush1.bf16.msra.mxu0 0
  %3898 = vmatprep.subr.bf16.mxu0 0
  %3899 = vmatpush1.bf16.msra.mxu0 0
  %3900 = vmatprep.subr.bf16.mxu0 0
  %3901 = vmatpush1.bf16.msra.mxu0 0
  %3902 = vmatprep.subr.bf16.mxu0 0
  %3903 = vmatpush1.bf16.msra.mxu0 0
  %3904 = vmatprep.subr.bf16.mxu0 0
  %3905 = vmatpush1.bf16.msra.mxu0 0
  %3906 = vmatprep.mubr.bf16.mxu0 0
  %3907 = vmatmul.mubr.bf16.gmra.mrb[0].mxu0 %v3832
  %v3908 = vpop.f32.mrb[0].mxu0
  %v3909 = vadd.f32 0.0, %v3908
  %v3910 = vpop.f32.mrb[0].mxu0
  %v3911 = vadd.f32 0.0, %v3910
  %v3912 = vpop.f32.mrb[0].mxu0
  %v3913 = vpop.f32.mrb[0].mxu0
  %3914 = vdwg.mxu0
  %v3915 = vadd.f32 %v3828, %v3868
  %v3916 = vadd.f32 %v3829, %v3870
  %v3917 = vadd.f32 %v3830, %v3909
  %v3918 = vadd.f32 %v3831, %v3911
  %v3919 = vxor.u32 %v3915, 2147483648
  %v3920 = vmul.f32 %v3919, 1.442695
  %v3921 = vpow.pop %v3920
  %v3922 = vadd.f32 %v3921, 1.0
  %v3923 = vrcp.pop %v3922
  %v3924 = vmul.f32 1.0, %v3923
  %v3925 = vxor.u32 %v3916, 2147483648
  %v3926 = vmul.f32 %v3925, 1.442695
  %v3927 = vpow.pop %v3926
  %v3928 = vadd.f32 %v3927, 1.0
  %v3929 = vrcp.pop %v3928
  %v3930 = vmul.f32 1.0, %v3929
  %v3931 = vtanh.pop %v3917
  %v3932 = vxor.u32 %v3918, 2147483648
  %v3933 = vmul.f32 %v3932, 1.442695
  %v3934 = vpow.pop %v3933
  %v3935 = vadd.f32 %v3934, 1.0
  %v3936 = vrcp.pop %v3935
  %v3937 = vmul.f32 1.0, %v3936
  %v3938 = vmul.f32 %v3930, %v3825
  %v3939 = vmul.f32 %v3924, %v3931
  %v3940 = vadd.f32 %v3938, %v3939
  %v3941 = vtanh.pop %v3940
  %v3942 = vmul.f32 %v3937, %v3941
  %v3943 = vld [vmem:[#allocation2 + $0xa0] sm:$0xff]
  %v3944 = vld [vmem:[#allocation2 + $0xa8] sm:$0xff]
  %v3945 = vld [vmem:[#allocation2 + $0xb0] sm:$0xff]
  %v3946 = vld [vmem:[#allocation2 + $0xb8] sm:$0xff]
  %v3947 = vpack.c.bf16 %v3942, %v3942
  %3948 = vmatprep.subr.bf16.mxu0 %v3310
  %3949 = vmatpush1.bf16.msra.mxu0 %v3309
  %3950 = vmatprep.subr.bf16.mxu0 %v3314
  %3951 = vmatpush1.bf16.msra.mxu0 %v3313
  %3952 = vmatprep.subr.bf16.mxu0 %v3318
  %3953 = vmatpush1.bf16.msra.mxu0 %v3317
  %3954 = vmatprep.subr.bf16.mxu0 %v3322
  %3955 = vmatpush1.bf16.msra.mxu0 %v3321
  %3956 = vmatprep.subr.bf16.mxu0 %v3326
  %3957 = vmatpush1.bf16.msra.mxu0 %v3325
  %3958 = vmatprep.subr.bf16.mxu0 %v3330
  %3959 = vmatpush1.bf16.msra.mxu0 %v3329
  %3960 = vmatprep.subr.bf16.mxu0 %v3334
  %3961 = vmatpush1.bf16.msra.mxu0 %v3333
  %3962 = vmatprep.subr.bf16.mxu0 %v3338
  %3963 = vmatpush1.bf16.msra.mxu0 %v3337
  %3964 = vmatprep.subr.bf16.mxu0 0
  %3965 = vmatpush1.bf16.msra.mxu0 0
  %3966 = vmatprep.subr.bf16.mxu0 0
  %3967 = vmatpush1.bf16.msra.mxu0 0
  %3968 = vmatprep.subr.bf16.mxu0 0
  %3969 = vmatpush1.bf16.msra.mxu0 0
  %3970 = vmatprep.subr.bf16.mxu0 0
  %3971 = vmatpush1.bf16.msra.mxu0 0
  %3972 = vmatprep.subr.bf16.mxu0 0
  %3973 = vmatpush1.bf16.msra.mxu0 0
  %3974 = vmatprep.subr.bf16.mxu0 0
  %3975 = vmatpush1.bf16.msra.mxu0 0
  %3976 = vmatprep.subr.bf16.mxu0 0
  %3977 = vmatpush1.bf16.msra.mxu0 0
  %3978 = vmatprep.subr.bf16.mxu0 0
  %3979 = vmatpush1.bf16.msra.mxu0 0
  %3980 = vmatprep.mubr.bf16.mxu0 0
  %3981 = vmatmul.mubr.bf16.gmra.mrb[0].mxu0 %v3947
  %v3982 = vpop.f32.mrb[0].mxu0
  %v3983 = vadd.f32 0.0, %v3982
  %v3984 = vpop.f32.mrb[0].mxu0
  %v3985 = vadd.f32 0.0, %v3984
  %v3986 = vpop.f32.mrb[0].mxu0
  %v3987 = vpop.f32.mrb[0].mxu0
  %3988 = vdwg.mxu0
  %3989 = vmatprep.subr.bf16.mxu0 %v3312
  %3990 = vmatpush1.bf16.msra.mxu0 %v3311
  %3991 = vmatprep.subr.bf16.mxu0 %v3316
  %3992 = vmatpush1.bf16.msra.mxu0 %v3315
  %3993 = vmatprep.subr.bf16.mxu0 %v3320
  %3994 = vmatpush1.bf16.msra.mxu0 %v3319
  %3995 = vmatprep.subr.bf16.mxu0 %v3324
  %3996 = vmatpush1.bf16.msra.mxu0 %v3323
  %3997 = vmatprep.subr.bf16.mxu0 %v3328
  %3998 = vmatpush1.bf16.msra.mxu0 %v3327
  %3999 = vmatprep.subr.bf16.mxu0 %v3332
  %4000 = vmatpush1.bf16.msra.mxu0 %v3331
  %4001 = vmatprep.subr.bf16.mxu0 %v3336
  %4002 = vmatpush1.bf16.msra.mxu0 %v3335
  %4003 = vmatprep.subr.bf16.mxu0 %v3340
  %4004 = vmatpush1.bf16.msra.mxu0 %v3339
  %4005 = vmatprep.subr.bf16.mxu0 0
  %4006 = vmatpush1.bf16.msra.mxu0 0
  %4007 = vmatprep.subr.bf16.mxu0 0
  %4008 = vmatpush1.bf16.msra.mxu0 0
  %4009 = vmatprep.subr.bf16.mxu0 0
  %4010 = vmatpush1.bf16.msra.mxu0 0
  %4011 = vmatprep.subr.bf16.mxu0 0
  %4012 = vmatpush1.bf16.msra.mxu0 0
  %4013 = vmatprep.subr.bf16.mxu0 0
  %4014 = vmatpush1.bf16.msra.mxu0 0
  %4015 = vmatprep.subr.bf16.mxu0 0
  %4016 = vmatpush1.bf16.msra.mxu0 0
  %4017 = vmatprep.subr.bf16.mxu0 0
  %4018 = vmatpush1.bf16.msra.mxu0 0
  %4019 = vmatprep.subr.bf16.mxu0 0
  %4020 = vmatpush1.bf16.msra.mxu0 0
  %4021 = vmatprep.mubr.bf16.mxu0 0
  %4022 = vmatmul.mubr.bf16.gmra.mrb[0].mxu0 %v3947
  %v4023 = vpop.f32.mrb[0].mxu0
  %v4024 = vadd.f32 0.0, %v4023
  %v4025 = vpop.f32.mrb[0].mxu0
  %v4026 = vadd.f32 0.0, %v4025
  %v4027 = vpop.f32.mrb[0].mxu0
  %v4028 = vpop.f32.mrb[0].mxu0
  %4029 = vdwg.mxu0
  %v4030 = vadd.f32 %v3943, %v3983
  %v4031 = vadd.f32 %v3944, %v3985
  %v4032 = vadd.f32 %v3945, %v4024
  %v4033 = vadd.f32 %v3946, %v4026
  %v4034 = vxor.u32 %v4030, 2147483648
  %v4035 = vmul.f32 %v4034, 1.442695
  %v4036 = vpow.pop %v4035
  %v4037 = vadd.f32 %v4036, 1.0
  %v4038 = vrcp.pop %v4037
  %v4039 = vmul.f32 1.0, %v4038
  %v4040 = vxor.u32 %v4031, 2147483648
  %v4041 = vmul.f32 %v4040, 1.442695
  %v4042 = vpow.pop %v4041
  %v4043 = vadd.f32 %v4042, 1.0
  %v4044 = vrcp.pop %v4043
  %v4045 = vmul.f32 1.0, %v4044
  %v4046 = vtanh.pop %v4032
  %v4047 = vxor.u32 %v4033, 2147483648
  %v4048 = vmul.f32 %v4047, 1.442695
  %v4049 = vpow.pop %v4048
  %v4050 = vadd.f32 %v4049, 1.0
  %v4051 = vrcp.pop %v4050
  %v4052 = vmul.f32 1.0, %v4051
  %v4053 = vmul.f32 %v4045, %v3940
  %v4054 = vmul.f32 %v4039, %v4046
  %v4055 = vadd.f32 %v4053, %v4054
  %v4056 = vtanh.pop %v4055
  %v4057 = vmul.f32 %v4052, %v4056
  %v4058 = vld [vmem:[#allocation2 + $0xc0] sm:$0xff]
  %v4059 = vld [vmem:[#allocation2 + $0xc8] sm:$0xff]
  %v4060 = vld [vmem:[#allocation2 + $0xd0] sm:$0xff]
  %v4061 = vld [vmem:[#allocation2 + $0xd8] sm:$0xff]
  %v4062 = vpack.c.bf16 %v4057, %v4057
  %4063 = vmatprep.subr.bf16.mxu0 %v3310
  %4064 = vmatpush1.bf16.msra.mxu0 %v3309
  %4065 = vmatprep.subr.bf16.mxu0 %v3314
  %4066 = vmatpush1.bf16.msra.mxu0 %v3313
  %4067 = vmatprep.subr.bf16.mxu0 %v3318
  %4068 = vmatpush1.bf16.msra.mxu0 %v3317
  %4069 = vmatprep.subr.bf16.mxu0 %v3322
  %4070 = vmatpush1.bf16.msra.mxu0 %v3321
  %4071 = vmatprep.subr.bf16.mxu0 %v3326
  %4072 = vmatpush1.bf16.msra.mxu0 %v3325
  %4073 = vmatprep.subr.bf16.mxu0 %v3330
  %4074 = vmatpush1.bf16.msra.mxu0 %v3329
  %4075 = vmatprep.subr.bf16.mxu0 %v3334
  %4076 = vmatpush1.bf16.msra.mxu0 %v3333
  %4077 = vmatprep.subr.bf16.mxu0 %v3338
  %4078 = vmatpush1.bf16.msra.mxu0 %v3337
  %4079 = vmatprep.subr.bf16.mxu0 0
  %4080 = vmatpush1.bf16.msra.mxu0 0
  %4081 = vmatprep.subr.bf16.mxu0 0
  %4082 = vmatpush1.bf16.msra.mxu0 0
  %4083 = vmatprep.subr.bf16.mxu0 0
  %4084 = vmatpush1.bf16.msra.mxu0 0
  %4085 = vmatprep.subr.bf16.mxu0 0
  %4086 = vmatpush1.bf16.msra.mxu0 0
  %4087 = vmatprep.subr.bf16.mxu0 0
  %4088 = vmatpush1.bf16.msra.mxu0 0
  %4089 = vmatprep.subr.bf16.mxu0 0
  %4090 = vmatpush1.bf16.msra.mxu0 0
  %4091 = vmatprep.subr.bf16.mxu0 0
  %4092 = vmatpush1.bf16.msra.mxu0 0
  %4093 = vmatprep.subr.bf16.mxu0 0
  %4094 = vmatpush1.bf16.msra.mxu0 0
  %4095 = vmatprep.mubr.bf16.mxu0 0
  %4096 = vmatmul.mubr.bf16.gmra.mrb[0].mxu0 %v4062
  %v4097 = vpop.f32.mrb[0].mxu0
  %v4098 = vadd.f32 0.0, %v4097
  %v4099 = vpop.f32.mrb[0].mxu0
  %v4100 = vadd.f32 0.0, %v4099
  %v4101 = vpop.f32.mrb[0].mxu0
  %v4102 = vpop.f32.mrb[0].mxu0
  %4103 = vdwg.mxu0
  %4104 = vmatprep.subr.bf16.mxu0 %v3312
  %4105 = vmatpush1.bf16.msra.mxu0 %v3311
  %4106 = vmatprep.subr.bf16.mxu0 %v3316
  %4107 = vmatpush1.bf16.msra.mxu0 %v3315
  %4108 = vmatprep.subr.bf16.mxu0 %v3320
  %4109 = vmatpush1.bf16.msra.mxu0 %v3319
  %4110 = vmatprep.subr.bf16.mxu0 %v3324
  %4111 = vmatpush1.bf16.msra.mxu0 %v3323
  %4112 = vmatprep.subr.bf16.mxu0 %v3328
  %4113 = vmatpush1.bf16.msra.mxu0 %v3327
  %4114 = vmatprep.subr.bf16.mxu0 %v3332
  %4115 = vmatpush1.bf16.msra.mxu0 %v3331
  %4116 = vmatprep.subr.bf16.mxu0 %v3336
  %4117 = vmatpush1.bf16.msra.mxu0 %v3335
  %4118 = vmatprep.subr.bf16.mxu0 %v3340
  %4119 = vmatpush1.bf16.msra.mxu0 %v3339
  %4120 = vmatprep.subr.bf16.mxu0 0
  %4121 = vmatpush1.bf16.msra.mxu0 0
  %4122 = vmatprep.subr.bf16.mxu0 0
  %4123 = vmatpush1.bf16.msra.mxu0 0
  %4124 = vmatprep.subr.bf16.mxu0 0
  %4125 = vmatpush1.bf16.msra.mxu0 0
  %4126 = vmatprep.subr.bf16.mxu0 0
  %4127 = vmatpush1.bf16.msra.mxu0 0
  %4128 = vmatprep.subr.bf16.mxu0 0
  %4129 = vmatpush1.bf16.msra.mxu0 0
  %4130 = vmatprep.subr.bf16.mxu0 0
  %4131 = vmatpush1.bf16.msra.mxu0 0
  %4132 = vmatprep.subr.bf16.mxu0 0
  %4133 = vmatpush1.bf16.msra.mxu0 0
  %4134 = vmatprep.subr.bf16.mxu0 0
  %4135 = vmatpush1.bf16.msra.mxu0 0
  %4136 = vmatprep.mubr.bf16.mxu0 0
  %4137 = vmatmul.mubr.bf16.gmra.mrb[0].mxu0 %v4062
  %v4138 = vpop.f32.mrb[0].mxu0
  %v4139 = vadd.f32 0.0, %v4138
  %v4140 = vpop.f32.mrb[0].mxu0
  %v4141 = vadd.f32 0.0, %v4140
  %v4142 = vpop.f32.mrb[0].mxu0
  %v4143 = vpop.f32.mrb[0].mxu0
  %4144 = vdwg.mxu0
  %v4145 = vadd.f32 %v4058, %v4098
  %v4146 = vadd.f32 %v4059, %v4100
  %v4147 = vadd.f32 %v4060, %v4139
  %v4148 = vadd.f32 %v4061, %v4141
  %v4149 = vxor.u32 %v4145, 2147483648
  %v4150 = vmul.f32 %v4149, 1.442695
  %v4151 = vpow.pop %v4150
  %v4152 = vadd.f32 %v4151, 1.0
  %v4153 = vrcp.pop %v4152
  %v4154 = vmul.f32 1.0, %v4153
  %v4155 = vxor.u32 %v4146, 2147483648
  %v4156 = vmul.f32 %v4155, 1.442695
  %v4157 = vpow.pop %v4156
  %v4158 = vadd.f32 %v4157, 1.0
  %v4159 = vrcp.pop %v4158
  %v4160 = vmul.f32 1.0, %v4159
  %v4161 = vtanh.pop %v4147
  %v4162 = vxor.u32 %v4148, 2147483648
  %v4163 = vmul.f32 %v4162, 1.442695
  %v4164 = vpow.pop %v4163
  %v4165 = vadd.f32 %v4164, 1.0
  %v4166 = vrcp.pop %v4165
  %v4167 = vmul.f32 1.0, %v4166
  %v4168 = vmul.f32 %v4160, %v4055
  %v4169 = vmul.f32 %v4154, %v4161
  %v4170 = vadd.f32 %v4168, %v4169
  %v4171 = vtanh.pop %v4170
  %v4172 = vmul.f32 %v4167, %v4171
  %v4173 = vld [vmem:[#allocation2 + $0xe0] sm:$0xff]
  %v4174 = vld [vmem:[#allocation2 + $0xe8] sm:$0xff]
  %v4175 = vld [vmem:[#allocation2 + $0xf0] sm:$0xff]
  %v4176 = vld [vmem:[#allocation2 + $0xf8] sm:$0xff]
  %v4177 = vpack.c.bf16 %v4172, %v4172
  %4178 = vmatprep.subr.bf16.mxu0 %v3310
  %4179 = vmatpush1.bf16.msra.mxu0 %v3309
  %4180 = vmatprep.subr.bf16.mxu0 %v3314
  %4181 = vmatpush1.bf16.msra.mxu0 %v3313
  %4182 = vmatprep.subr.bf16.mxu0 %v3318
  %4183 = vmatpush1.bf16.msra.mxu0 %v3317
  %4184 = vmatprep.subr.bf16.mxu0 %v3322
  %4185 = vmatpush1.bf16.msra.mxu0 %v3321
  %4186 = vmatprep.subr.bf16.mxu0 %v3326
  %4187 = vmatpush1.bf16.msra.mxu0 %v3325
  %4188 = vmatprep.subr.bf16.mxu0 %v3330
  %4189 = vmatpush1.bf16.msra.mxu0 %v3329
  %4190 = vmatprep.subr.bf16.mxu0 %v3334
  %4191 = vmatpush1.bf16.msra.mxu0 %v3333
  %4192 = vmatprep.subr.bf16.mxu0 %v3338
  %4193 = vmatpush1.bf16.msra.mxu0 %v3337
  %4194 = vmatprep.subr.bf16.mxu0 0
  %4195 = vmatpush1.bf16.msra.mxu0 0
  %4196 = vmatprep.subr.bf16.mxu0 0
  %4197 = vmatpush1.bf16.msra.mxu0 0
  %4198 = vmatprep.subr.bf16.mxu0 0
  %4199 = vmatpush1.bf16.msra.mxu0 0
  %4200 = vmatprep.subr.bf16.mxu0 0
  %4201 = vmatpush1.bf16.msra.mxu0 0
  %4202 = vmatprep.subr.bf16.mxu0 0
  %4203 = vmatpush1.bf16.msra.mxu0 0
  %4204 = vmatprep.subr.bf16.mxu0 0
  %4205 = vmatpush1.bf16.msra.mxu0 0
  %4206 = vmatprep.subr.bf16.mxu0 0
  %4207 = vmatpush1.bf16.msra.mxu0 0
  %4208 = vmatprep.subr.bf16.mxu0 0
  %4209 = vmatpush1.bf16.msra.mxu0 0
  %4210 = vmatprep.mubr.bf16.mxu0 0
  %4211 = vmatmul.mubr.bf16.gmra.mrb[0].mxu0 %v4177
  %v4212 = vpop.f32.mrb[0].mxu0
  %v4213 = vadd.f32 0.0, %v4212
  %v4214 = vpop.f32.mrb[0].mxu0
  %v4215 = vadd.f32 0.0, %v4214
  %v4216 = vpop.f32.mrb[0].mxu0
  %v4217 = vpop.f32.mrb[0].mxu0
  %4218 = vdwg.mxu0
  %4219 = vmatprep.subr.bf16.mxu0 %v3312
  %4220 = vmatpush1.bf16.msra.mxu0 %v3311
  %4221 = vmatprep.subr.bf16.mxu0 %v3316
  %4222 = vmatpush1.bf16.msra.mxu0 %v3315
  %4223 = vmatprep.subr.bf16.mxu0 %v3320
  %4224 = vmatpush1.bf16.msra.mxu0 %v3319
  %4225 = vmatprep.subr.bf16.mxu0 %v3324
  %4226 = vmatpush1.bf16.msra.mxu0 %v3323
  %4227 = vmatprep.subr.bf16.mxu0 %v3328
  %4228 = vmatpush1.bf16.msra.mxu0 %v3327
  %4229 = vmatprep.subr.bf16.mxu0 %v3332
  %4230 = vmatpush1.bf16.msra.mxu0 %v3331
  %4231 = vmatprep.subr.bf16.mxu0 %v3336
  %4232 = vmatpush1.bf16.msra.mxu0 %v3335
  %4233 = vmatprep.subr.bf16.mxu0 %v3340
  %4234 = vmatpush1.bf16.msra.mxu0 %v3339
  %4235 = vmatprep.subr.bf16.mxu0 0
  %4236 = vmatpush1.bf16.msra.mxu0 0
  %4237 = vmatprep.subr.bf16.mxu0 0
  %4238 = vmatpush1.bf16.msra.mxu0 0
  %4239 = vmatprep.subr.bf16.mxu0 0
  %4240 = vmatpush1.bf16.msra.mxu0 0
  %4241 = vmatprep.subr.bf16.mxu0 0
  %4242 = vmatpush1.bf16.msra.mxu0 0
  %4243 = vmatprep.subr.bf16.mxu0 0
  %4244 = vmatpush1.bf16.msra.mxu0 0
  %4245 = vmatprep.subr.bf16.mxu0 0
  %4246 = vmatpush1.bf16.msra.mxu0 0
  %4247 = vmatprep.subr.bf16.mxu0 0
  %4248 = vmatpush1.bf16.msra.mxu0 0
  %4249 = vmatprep.subr.bf16.mxu0 0
  %4250 = vmatpush1.bf16.msra.mxu0 0
  %4251 = vmatprep.mubr.bf16.mxu0 0
  %4252 = vmatmul.mubr.bf16.gmra.mrb[0].mxu0 %v4177
  %v4253 = vpop.f32.mrb[0].mxu0
  %v4254 = vadd.f32 0.0, %v4253
  %v4255 = vpop.f32.mrb[0].mxu0
  %v4256 = vadd.f32 0.0, %v4255
  %v4257 = vpop.f32.mrb[0].mxu0
  %v4258 = vpop.f32.mrb[0].mxu0
  %4259 = vdwg.mxu0
  %v4260 = vadd.f32 %v4173, %v4213
  %v4261 = vadd.f32 %v4174, %v4215
  %v4262 = vadd.f32 %v4175, %v4254
  %v4263 = vadd.f32 %v4176, %v4256
  %v4264 = vxor.u32 %v4260, 2147483648
  %v4265 = vmul.f32 %v4264, 1.442695
  %v4266 = vpow.pop %v4265
  %v4267 = vadd.f32 %v4266, 1.0
  %v4268 = vrcp.pop %v4267
  %v4269 = vmul.f32 1.0, %v4268
  %v4270 = vxor.u32 %v4261, 2147483648
  %v4271 = vmul.f32 %v4270, 1.442695
  %v4272 = vpow.pop %v4271
  %v4273 = vadd.f32 %v4272, 1.0
  %v4274 = vrcp.pop %v4273
  %v4275 = vmul.f32 1.0, %v4274
  %v4276 = vtanh.pop %v4262
  %v4277 = vxor.u32 %v4263, 2147483648
  %v4278 = vmul.f32 %v4277, 1.442695
  %v4279 = vpow.pop %v4278
  %v4280 = vadd.f32 %v4279, 1.0
  %v4281 = vrcp.pop %v4280
  %v4282 = vmul.f32 1.0, %v4281
  %v4283 = vmul.f32 %v4275, %v4170
  %v4284 = vmul.f32 %v4269, %v4276
  %v4285 = vadd.f32 %v4283, %v4284
  %v4286 = vtanh.pop %v4285
  %v4287 = vmul.f32 %v4282, %v4286
  %4288 = vst [vmem:[%s3172] sm:$0xff] %v4287
  %4289 = vst [vmem:[%s3174] sm:$0xff] %v4285
  // Predicated region
  $region42: #{a_call__.1} parent=0 // pred_check
    %p4290 = pneg %p35
  $region43: #{a_call__.1} parent=0 // pred_check_branch
    %4292 = sbr.rel (%p4290) target = $region45
  $region44: #{a_call__.1} parent=0 // pred_region
    %v4293 = vld [vmem:[%s3172] sm:$0xff]
    %v4294 = vpack.c.bf16 %v4293, %v4293
    %v4295 = vld [vmem:[%s7] sm:$0xf]
    %v4296 = vld [vmem:[%s7 + $0x4] sm:$0xf]
    %v4297 = vld [vmem:[%s7 + $0x8] sm:$0xf]
    %v4298 = vld [vmem:[%s7 + $0xc] sm:$0xf]
    %v4299 = vld [vmem:[%s7 + $0x10] sm:$0xf]
    %v4300 = vld [vmem:[%s7 + $0x14] sm:$0xf]
    %v4301 = vld [vmem:[%s7 + $0x18] sm:$0xf]
    %v4302 = vld [vmem:[%s7 + $0x1c] sm:$0xf]
    %v4303 = vld [vmem:[%s7 + $0x20] sm:$0xf]
    %v4304 = vld [vmem:[%s7 + $0x24] sm:$0xf]
    %v4305 = vld [vmem:[%s7 + $0x28] sm:$0xf]
    %v4306 = vld [vmem:[%s7 + $0x2c] sm:$0xf]
    %v4307 = vld [vmem:[%s7 + $0x30] sm:$0xf]
    %v4308 = vld [vmem:[%s7 + $0x34] sm:$0xf]
    %v4309 = vld [vmem:[%s7 + $0x38] sm:$0xf]
    %v4310 = vld [vmem:[%s7 + $0x3c] sm:$0xf]
    %v4311 = vld [vmem:[#allocation7] sm:$0x1]
    %v4313 = vlaneseq
    %v4314 = vshrl.u32 %v4313, 7
    %v4315 = vsub.s32 0, %v4314
    %v4316 = vrot.slane %v4311, %v4315
    %v4334 = vunpack.c.l.b16 %v4295
    %v4335 = vunpack.c.l.b16 %v4296
    %v4336 = vunpack.c.l.b16 %v4297
    %v4337 = vunpack.c.l.b16 %v4298
    %v4338 = vunpack.c.l.b16 %v4299
    %v4339 = vunpack.c.l.b16 %v4300
    %v4340 = vunpack.c.l.b16 %v4301
    %v4341 = vunpack.c.l.b16 %v4302
    %v4342 = vunpack.c.l.b16 %v4303
    %v4343 = vunpack.c.l.b16 %v4304
    %v4344 = vunpack.c.l.b16 %v4305
    %v4345 = vunpack.c.l.b16 %v4306
    %v4346 = vunpack.c.l.b16 %v4307
    %v4347 = vunpack.c.l.b16 %v4308
    %v4348 = vunpack.c.l.b16 %v4309
    %v4349 = vunpack.c.l.b16 %v4310
    %v4350 = vpack.c.b16 %v4335, %v4334
    %v4351 = vpack.c.b16 %v4337, %v4336
    %v4352 = vpack.c.b16 %v4339, %v4338
    %v4353 = vpack.c.b16 %v4341, %v4340
    %v4354 = vpack.c.b16 %v4343, %v4342
    %v4355 = vpack.c.b16 %v4345, %v4344
    %v4356 = vpack.c.b16 %v4347, %v4346
    %v4357 = vpack.c.b16 %v4349, %v4348
    %4366 = vmatprep.subr.bf16.mxu0 0
    %4367 = vmatpush1.bf16.msra.mxu0 %v4350
    %4368 = vmatprep.subr.bf16.mxu0 0
    %4369 = vmatpush1.bf16.msra.mxu0 %v4351
    %4370 = vmatprep.subr.bf16.mxu0 0
    %4371 = vmatpush1.bf16.msra.mxu0 %v4352
    %4372 = vmatprep.subr.bf16.mxu0 0
    %4373 = vmatpush1.bf16.msra.mxu0 %v4353
    %4374 = vmatprep.subr.bf16.mxu0 0
    %4375 = vmatpush1.bf16.msra.mxu0 %v4354
    %4376 = vmatprep.subr.bf16.mxu0 0
    %4377 = vmatpush1.bf16.msra.mxu0 %v4355
    %4378 = vmatprep.subr.bf16.mxu0 0
    %4379 = vmatpush1.bf16.msra.mxu0 %v4356
    %4380 = vmatprep.subr.bf16.mxu0 0
    %4381 = vmatpush1.bf16.msra.mxu0 %v4357
    %4382 = vmatprep.subr.bf16.mxu0 0
    %4383 = vmatpush1.bf16.msra.mxu0 0
    %4384 = vmatprep.subr.bf16.mxu0 0
    %4385 = vmatpush1.bf16.msra.mxu0 0
    %4386 = vmatprep.subr.bf16.mxu0 0
    %4387 = vmatpush1.bf16.msra.mxu0 0
    %4388 = vmatprep.subr.bf16.mxu0 0
    %4389 = vmatpush1.bf16.msra.mxu0 0
    %4390 = vmatprep.subr.bf16.mxu0 0
    %4391 = vmatpush1.bf16.msra.mxu0 0
    %4392 = vmatprep.subr.bf16.mxu0 0
    %4393 = vmatpush1.bf16.msra.mxu0 0
    %4394 = vmatprep.subr.bf16.mxu0 0
    %4395 = vmatpush1.bf16.msra.mxu0 0
    %4396 = vmatprep.subr.bf16.mxu0 0
    %4397 = vmatpush1.bf16.msra.mxu0 0
    %4398 = vmatprep.mubr.bf16.mxu0 0
    %4399 = vmatmul.mubr.bf16.gmra.mrb[0].mxu0 %v4294
    %v4400 = vpop.f32.mrb[0].mxu0
    %v4401 = vadd.f32 %v4316, %v4400
    %v4402 = vpop.f32.mrb[0].mxu0
    %v4403 = vpop.f32.mrb[0].mxu0
    %v4404 = vpop.f32.mrb[0].mxu0
    %4405 = vdwg.mxu0
    %vm4406 = vcmask 7168
    %4407 = vst.msk [vmem:[%s9] sm:$0xff] %vm4406, %v4401
  $region45: #{a_call__.1} parent=0 // pred_fallthru
    _
  // Predicated region
  $region46: #{a_call__.1} parent=0 // pred_check
    _
  $region47: #{a_call__.1} parent=0 // pred_check_branch
    %4409 = sbr.rel (0) target = $region49
  $region48: #{a_call__.1} parent=0 // pred_region
    _
  $region49: #{a_call__.1} parent=0 // pred_fallthru
    _
  // Predicated region
  $region50: #{a_call__.1} parent=0 // pred_check
    _
  $region51: #{a_call__.1} parent=0 // pred_check_branch
    %4411 = sbr.rel (0) target = $region53
  $region52: #{a_call__.1} parent=0 // pred_region
    _
  $region53: #{a_call__.1} parent=0 // pred_fallthru
    _

</llo_original>
